<compile_context>
chip_gen: v6e
topology: v6e:2x2x1
jax: 0.10.0
libtpu: 0.0.40
codegen_flags: <defaults>
</compile_context>

<pallas_src>
import functools
import math

import jax
import jax.numpy as jnp
from jax.experimental import pallas as pl
from jax.experimental.pallas import tpu as pltpu


def _pick_tile(L, max_tile, min_tiles=1):
    """Largest lane-dense tile (multiple of 128, <= max_tile) that divides L
    into at least `min_tiles` pieces; falls back to the full length."""
    for t in (2048, 1024, 512, 256, 128):
        if t <= max_tile and L % t == 0 and L // t >= min_tiles:
            return t
    return L


def _vmem_limit_bytes():
    """~60% of per-core VMEM: ~77 MiB on v5e/v6e (128 MiB), ~38 MiB on v7x (64 MiB)."""
    try:
        cap = int(pltpu.get_tpu_info().vmem_capacity_bytes)
    except Exception:
        cap = 64 * 1024 * 1024
    return max(32 * 1024 * 1024, min(int(cap * 0.6), 100 * 1024 * 1024))


# --------------------- GroupNorm stats -> per-(b,c) scale/shift ---------------
def _gn_stats_kernel(x_ref, g_ref, b_ref, scale_ref, shift_ref, *, eps):
    x = x_ref[0, 0]                                        # (Cg, L) f32
    n = float(x.shape[0] * x.shape[1])
    s1 = jnp.sum(x)                                        # one pass: sum
    s2 = jnp.sum(x * x)                                    #           sum of squares
    mu = s1 / n
    var = jnp.maximum(s2 / n - mu * mu, 0.0)
    inv = jax.lax.rsqrt(var + eps)
    g = g_ref[0]                                           # (Cg, 1)
    b = b_ref[0]
    scale_ref[0, 0] = (g * inv).astype(scale_ref.dtype)
    shift_ref[0, 0] = (b - g * (mu * inv)).astype(shift_ref.dtype)


def _gn_scale_shift(x3, gamma, beta, n_groups, eps, vmem_limit):
    B, C, L = x3.shape
    Cg = C // n_groups
    x4 = x3.reshape(B, n_groups, Cg, L)
    g = gamma.reshape(n_groups, Cg, 1).astype(jnp.float32)
    b = beta.reshape(n_groups, Cg, 1).astype(jnp.float32)
    scale, shift = pl.pallas_call(
        functools.partial(_gn_stats_kernel, eps=eps),
        out_shape=(jax.ShapeDtypeStruct((B, n_groups, Cg, 1), jnp.float32),
                   jax.ShapeDtypeStruct((B, n_groups, Cg, 1), jnp.float32)),
        grid=(B, n_groups),
        in_specs=[
            pl.BlockSpec((1, 1, Cg, L), lambda i, j: (i, j, 0, 0)),
            pl.BlockSpec((1, Cg, 1), lambda i, j: (j, 0, 0)),
            pl.BlockSpec((1, Cg, 1), lambda i, j: (j, 0, 0)),
        ],
        out_specs=(pl.BlockSpec((1, 1, Cg, 1), lambda i, j: (i, j, 0, 0)),
                   pl.BlockSpec((1, 1, Cg, 1), lambda i, j: (i, j, 0, 0))),
        compiler_params=pltpu.CompilerParams(
            dimension_semantics=("parallel", "parallel"),
            vmem_limit_bytes=vmem_limit),
        cost_estimate=pl.CostEstimate(
            flops=int(3 * B * C * L), transcendentals=0,
            bytes_accessed=int(4 * (B * C * L + 2 * C + 2 * B * C))),
    )(x4, g, b)
    return scale.reshape(B, C, 1), shift.reshape(B, C, 1)


# -------------- fused GroupNorm-apply + QKV projection + 2D RoPE --------------
def _qkv_rope_kernel(x_ref, scale_ref, shift_ref, w_ref, cos2_ref, sins_ref,
                     o_ref, *, C, mxu_dtype):
    xn = x_ref[0] * scale_ref[0] + shift_ref[0]                       # (C, TL) f32
    qkv = jnp.dot(w_ref[...], xn.astype(mxu_dtype),
                  preferred_element_type=jnp.float32)                 # (3C, TL) f32
    half = C // 2
    cos2 = cos2_ref[...]                                              # (C, TL)
    sins = sins_ref[...]                                              # signed sin

    def rope(t):  # rotate-half via an aligned sublane concat + signed-sin table
        t_rot = jnp.concatenate([t[half:, :], t[:half, :]], axis=0)
        return t * cos2 + t_rot * sins

    # three full-width, sublane-aligned stores (C % 8 == 0)
    o_ref[0, 0:C, :] = rope(qkv[0:C]).astype(o_ref.dtype)
    o_ref[0, C:2 * C, :] = rope(qkv[C:2 * C]).astype(o_ref.dtype)
    o_ref[0, 2 * C:3 * C, :] = qkv[2 * C:3 * C].astype(o_ref.dtype)


def _qkv_rope(x3, scale, shift, w_qkv, cos2, sins, mxu_dtype, vmem_limit):
    B, C, L = x3.shape
    TL = _pick_tile(L, max_tile=1024, min_tiles=2 if B == 1 else 1)
    nl = L // TL
    return pl.pallas_call(
        functools.partial(_qkv_rope_kernel, C=C, mxu_dtype=mxu_dtype),
        out_shape=jax.ShapeDtypeStruct((B, 3 * C, L), jnp.float32),
        grid=(B, nl),
        in_specs=[
            pl.BlockSpec((1, C, TL), lambda b, l: (b, 0, l)),
            pl.BlockSpec((1, C, 1), lambda b, l: (b, 0, 0)),
            pl.BlockSpec((1, C, 1), lambda b, l: (b, 0, 0)),
            pl.BlockSpec((3 * C, C), lambda b, l: (0, 0)),        # resident weight
            pl.BlockSpec((C, TL), lambda b, l: (0, l)),
            pl.BlockSpec((C, TL), lambda b, l: (0, l)),
        ],
        out_specs=pl.BlockSpec((1, 3 * C, TL), lambda b, l: (b, 0, l)),
        compiler_params=pltpu.CompilerParams(
            dimension_semantics=("parallel", "parallel"),
            vmem_limit_bytes=vmem_limit),
        cost_estimate=pl.CostEstimate(
            flops=int(2 * B * 3 * C * C * L),
            transcendentals=0,
            bytes_accessed=int(4 * (B * C * L + B * 3 * C * L + 2 * C * L)
                               + 3 * C * C * jnp.dtype(mxu_dtype).itemsize)),
    )(x3, scale, shift, w_qkv, cos2, sins)


# -------- fused multi-head flash attention + proj_out + bias + residual -------
def _attn_proj_kernel(x_ref, scale_ref, shift_ref, q_ref, k_ref, v_ref,
                      wp_ref, bp_ref, o_ref, m_scr, l_scr, acc_scr,
                      *, nh, d, mxu_dtype):
    ki = pl.program_id(2)

    @pl.when(ki == 0)
    def _():
        m_scr[...] = jnp.full(m_scr.shape, -jnp.inf, dtype=jnp.float32)
        l_scr[...] = jnp.zeros(l_scr.shape, dtype=jnp.float32)
        acc_scr[...] = jnp.zeros(acc_scr.shape, dtype=jnp.float32)

    TQ = q_ref.shape[2]
    TK = k_ref.shape[2]
    # channel-major (head_dim on sublanes, positions on lanes); the 1/sqrt(d)
    # scale is already folded into the q rows of the QKV weight.
    q = q_ref[0].reshape(nh, d, TQ).astype(mxu_dtype)
    k = k_ref[0].reshape(nh, d, TK).astype(mxu_dtype)
    v = v_ref[0].reshape(nh, d, TK).astype(mxu_dtype)

    # scores laid out (nh, TK, TQ): softmax stats reduce over sublanes and come
    # out lane-major; PV below is then a plain NN matmul.
    s = jnp.einsum("hdk,hdq->hkq", k, q,
                   preferred_element_type=jnp.float32)                # (nh,TK,TQ)

    m_prev = m_scr[...]                                               # (nh,1,TQ)
    m_new = jnp.maximum(m_prev, jnp.max(s, axis=1, keepdims=True))
    alpha = jnp.exp(m_prev - m_new)
    p = jnp.exp(s - m_new)                                            # (nh,TK,TQ)
    l_scr[...] = alpha * l_scr[...] + jnp.sum(p, axis=1, keepdims=True)
    acc_scr[...] = alpha * acc_scr[...] + jnp.einsum(
        "hdk,hkq->hdq", v, p.astype(mxu_dtype),
        preferred_element_type=jnp.float32)                           # (nh,d,TQ)
    m_scr[...] = m_new

    @pl.when(ki == pl.num_programs(2) - 1)
    def _():
        out = acc_scr[...] * pl.reciprocal(l_scr[...], approx=True)
        out = out.reshape(nh * d, TQ)                                 # (C, TQ)
        proj = jnp.dot(wp_ref[...], out.astype(mxu_dtype),
                       preferred_element_type=jnp.float32)            # (C, TQ)
        # residual is the *normalized* input (xi in the PyTorch spec),
        # recomputed from x and the GroupNorm scale/shift (no xn round-trip).
        xn = x_ref[0] * scale_ref[0] + shift_ref[0]
        o_ref[0] = (xn + proj + bp_ref[...]).astype(o_ref.dtype)


def _attention_proj(x3, scale, shift, qkv, w_proj, b_proj, nh, d,
                    mxu_dtype, vmem_limit):
    B, C, L = x3.shape
    # All heads per step keeps per-step work high; TQ/TK kept modest so the
    # (nh,TK,TQ) score tile stays small even on v7x's 64 MiB/TC VMEM.
    TQ = _pick_tile(L, max_tile=256, min_tiles=2 if B == 1 else 1)
    TK = _pick_tile(L, max_tile=512)
    nq, nk = L // TQ, L // TK
    flops = int(4 * B * nh * d * L * L + 2 * B * C * C * L)
    trans = int(B * nh * L * L + 2 * B * nh * L)
    bytes_acc = int(4 * (2 * B * C * L            # x + q (fetched once per q tile)
                         + 2 * nq * B * C * L     # k, v re-streamed per q tile
                         + B * C * L))            # output
    return pl.pallas_call(
        functools.partial(_attn_proj_kernel, nh=nh, d=d, mxu_dtype=mxu_dtype),
        out_shape=jax.ShapeDtypeStruct((B, C, L), x3.dtype),
        grid=(B, nq, nk),
        in_specs=[
            pl.BlockSpec((1, C, TQ), lambda b, qi, ki: (b, 0, qi)),   # x
            pl.BlockSpec((1, C, 1), lambda b, qi, ki: (b, 0, 0)),     # gn scale
            pl.BlockSpec((1, C, 1), lambda b, qi, ki: (b, 0, 0)),     # gn shift
            pl.BlockSpec((1, C, TQ), lambda b, qi, ki: (b, 0, qi)),   # q slab
            pl.BlockSpec((1, C, TK), lambda b, qi, ki: (b, 1, ki)),   # k slab
            pl.BlockSpec((1, C, TK), lambda b, qi, ki: (b, 2, ki)),   # v slab
            pl.BlockSpec((C, C), lambda b, qi, ki: (0, 0)),           # w_proj
            pl.BlockSpec((C, 1), lambda b, qi, ki: (0, 0)),           # b_proj
        ],
        out_specs=pl.BlockSpec((1, C, TQ), lambda b, qi, ki: (b, 0, qi)),
        scratch_shapes=[
            pltpu.VMEM((nh, 1, TQ), jnp.float32),   # running max
            pltpu.VMEM((nh, 1, TQ), jnp.float32),   # running denominator
            pltpu.VMEM((nh, d, TQ), jnp.float32),   # running numerator
        ],
        compiler_params=pltpu.CompilerParams(
            dimension_semantics=("parallel", "parallel", "arbitrary"),
            vmem_limit_bytes=vmem_limit),
        cost_estimate=pl.CostEstimate(flops=flops, transcendentals=trans,
                                      bytes_accessed=bytes_acc),
    )(x3, scale, shift, qkv, qkv, qkv, w_proj, b_proj)


# ------------------------------ RoPE tables -----------------------------------
def _rotary2d_tables(C, H, W, resolution_multiplier=1, base=10000.0):
    # TODO(synk): Rotary2D / apply_rotary_position_embeddings are not defined in
    # the provided spec; this implements a standard 2D axial rotate-half RoPE
    # (first half of channels keyed to the row index, second half to the column
    # index).  Tables are returned transposed, (C//2, L), channel-major.
    quarter = C // 4
    inv_freq = 1.0 / (base ** (jnp.arange(quarter, dtype=jnp.float32) / quarter))
    ys = jnp.repeat(jnp.arange(H, dtype=jnp.float32), W) * resolution_multiplier
    xs = jnp.tile(jnp.arange(W, dtype=jnp.float32), H) * resolution_multiplier
    freqs = jnp.concatenate(
        [ys[:, None] * inv_freq[None, :], xs[:, None] * inv_freq[None, :]],
        axis=1)                                                     # (L, C//2)
    return jnp.cos(freqs).T, jnp.sin(freqs).T                       # (C//2, L)


# ------------------------------ full forward ----------------------------------
def attention_block(x, gamma, beta, w_qkv, w_proj, b_proj, *, num_heads,
                    resolution_multiplier=1, eps=1e-5,
                    mxu_dtype=jnp.bfloat16):
    B, C, H, W = x.shape
    L = H * W
    n_groups = min(4, C // 4)            # matches the spec's GroupNormCustom
    d = C // num_heads
    assert C % num_heads == 0
    assert d % 8 == 0, "head_dim must be sublane aligned (multiple of 8)"
    assert (C // 2) % 8 == 0, "RoPE half-width must be sublane aligned"
    vmem_limit = _vmem_limit_bytes()

    x3 = x.reshape(B, C, L).astype(jnp.float32)

    # (1) GroupNorm reduced to per-(b,c) scale/shift; no xn materialization.
    scale, shift = _gn_scale_shift(x3, gamma, beta, n_groups, eps, vmem_limit)

    # (2) RoPE tables in full-C "signed" form so rotate-half is one aligned
    #     concat + FMA per q/k slab.
    cos_h, sin_h = _rotary2d_tables(C, H, W, resolution_multiplier)
    cos2 = jnp.concatenate([cos_h, cos_h], axis=0)                  # (C, L)
    sins = jnp.concatenate([-sin_h, sin_h], axis=0)                 # (C, L)

    # (3) fold 1/sqrt(d) into the q rows of the QKV weight (RoPE is a rotation,
    #     so the scale commutes); cast weights once for the MXU.
    w_qkv_s = jnp.concatenate(
        [w_qkv[:C] * jnp.float32(1.0 / math.sqrt(d)), w_qkv[C:]], axis=0)
    w_qkv_s = w_qkv_s.astype(mxu_dtype)
    w_proj_c = w_proj.astype(mxu_dtype)

    # NOTE: qkv Conv1d has bias=False in the spec; proj_out has a bias.
    qkv = _qkv_rope(x3, scale, shift, w_qkv_s, cos2, sins, mxu_dtype,
                    vmem_limit)                                     # (B, 3C, L) f32

    out = _attention_proj(x3, scale, shift, qkv, w_proj_c,
                          b_proj.reshape(C, 1).astype(jnp.float32),
                          num_heads, d, mxu_dtype, vmem_limit)      # (B, C, L)
    return out.reshape(B, C, H, W).astype(x.dtype)


# --------------------------- pure-JAX reference --------------------------------
def _reference(x, gamma, beta, w_qkv, w_proj, b_proj, *, num_heads,
               resolution_multiplier=1, eps=1e-5):
    P = jax.lax.Precision.HIGHEST
    B, C, H, W = x.shape
    L = H * W
    n_groups = min(4, C // 4)
    d = C // num_heads
    xg = x.reshape(B, n_groups, -1)
    mu = xg.mean(axis=-1, keepdims=True)
    var = xg.var(axis=-1, keepdims=True)
    xn = ((xg - mu) / jnp.sqrt(var + eps)).reshape(B, C, L)
    xn = xn * gamma[None, :, None] + beta[None, :, None]
    qkv = jnp.einsum("oc,bcl->bol", w_qkv, xn, precision=P)
    q, k, v = qkv[:, :C], qkv[:, C:2 * C], qkv[:, 2 * C:]
    ch, sh = _rotary2d_tables(C, H, W, resolution_multiplier)

    def rope(t):
        a, b = t[:, :C // 2], t[:, C // 2:]
        return jnp.concatenate([a * ch - b * sh, b * ch + a * sh], axis=1)

    q, k = rope(q), rope(k)
    qh = q.reshape(B, num_heads, d, L)
    kh = k.reshape(B, num_heads, d, L)
    vh = v.reshape(B, num_heads, d, L)
    s = jnp.einsum("bhdi,bhdj->bhij", qh, kh, precision=P) / math.sqrt(d)
    p = jax.nn.softmax(s, axis=-1)
    oh = jnp.einsum("bhij,bhdj->bhdi", p, vh, precision=P)
    hcat = oh.reshape(B, C, L)
    proj = jnp.einsum("oc,bcl->bol", w_proj, hcat, precision=P) + b_proj[None, :, None]
    return (xn + proj).reshape(B, C, H, W)   # residual on normalized x (== spec's xi)


if __name__ == "__main__":
    # Module config: channels=16, num_heads=2 (num_head_channels=-1), H=W=16.
    B, C, H, W = 2, 16, 16, 16
    num_heads = 2

    key = jax.random.PRNGKey(0)
    kx, kg, kb, kq, kp, kpb = jax.random.split(key, 6)

    x = jax.random.normal(kx, (B, C, H, W), dtype=jnp.float32)
    gamma = 1.0 + 0.1 * jax.random.normal(kg, (C,), dtype=jnp.float32)
    beta = 0.1 * jax.random.normal(kb, (C,), dtype=jnp.float32)

    bound = 1.0 / math.sqrt(C)
    w_qkv = jax.random.uniform(kq, (3 * C, C), jnp.float32, -bound, bound)
    # NOTE: the PyTorch module zero-initializes proj_out (so h contributes 0 at
    # init); random weights are used here so the full pipeline is exercised.
    w_proj = jax.random.uniform(kp, (C, C), jnp.float32, -bound, bound)
    b_proj = jax.random.uniform(kpb, (C,), jnp.float32, -bound, bound)

    ref = _reference(x, gamma, beta, w_qkv, w_proj, b_proj, num_heads=num_heads)

    # Default fast path: bf16 MXU operands, f32 accumulation / elementwise.
    fwd_bf16 = jax.jit(functools.partial(attention_block, num_heads=num_heads))
    out_bf16 = jax.block_until_ready(
        fwd_bf16(x, gamma, beta, w_qkv, w_proj, b_proj))
    assert out_bf16.shape == (B, C, H, W)
    err_bf16 = float(jnp.max(jnp.abs(out_bf16 - ref)))
    assert jnp.allclose(out_bf16, ref, atol=2e-2, rtol=2e-2), (
        f"bf16 path mismatch, max_err={err_bf16}")

    # Bit-conservative path: all-f32 MXU operands, tight tolerance.
    fwd_f32 = jax.jit(functools.partial(attention_block, num_heads=num_heads,
                                        mxu_dtype=jnp.float32))
    out_f32 = jax.block_until_ready(
        fwd_f32(x, gamma, beta, w_qkv, w_proj, b_proj))
    err_f32 = float(jnp.max(jnp.abs(out_f32 - ref)))
    assert jnp.allclose(out_f32, ref, atol=2e-3, rtol=2e-3), (
        f"f32 path mismatch, max_err={err_f32}")

    print("KERNEL_OK")
</pallas_src>

<mosaic_0001>
module attributes {stable_mosaic.version = 11 : i64} {
  func.func @_attn_proj_kernel(%arg0: i32, %arg1: i32, %arg2: i32, %arg3: memref<1x16x256xf32, #tpu.memory_space<vmem>>, %arg4: memref<1x16x1xf32, #tpu.memory_space<vmem>>, %arg5: memref<1x16x1xf32, #tpu.memory_space<vmem>>, %arg6: memref<1x16x256xf32, #tpu.memory_space<vmem>>, %arg7: memref<1x16x256xf32, #tpu.memory_space<vmem>>, %arg8: memref<1x16x256xf32, #tpu.memory_space<vmem>>, %arg9: memref<16x16xbf16, #tpu.memory_space<vmem>>, %arg10: memref<16x1xf32, #tpu.memory_space<vmem>>, %arg11: memref<1x16x256xf32, #tpu.memory_space<vmem>>, %arg12: memref<2x1x256xf32, #tpu.memory_space<vmem>>, %arg13: memref<2x1x256xf32, #tpu.memory_space<vmem>>, %arg14: memref<2x8x256xf32, #tpu.memory_space<vmem>>) attributes {dimension_semantics = [#tpu.dimension_semantics<parallel>, #tpu.dimension_semantics<parallel>, #tpu.dimension_semantics<arbitrary>], iteration_bounds = array<i64: 2, 1, 1>, scalar_prefetch = 0 : i64, scratch_operands = 3 : i64, tpu.core_type = #tpu.core_type<tc>, window_params = [{transform_indices = @transform_0, window_bounds = array<i64: 1, 16, 256>}, {transform_indices = @transform_1, window_bounds = array<i64: 1, 16, 1>}, {transform_indices = @transform_2, window_bounds = array<i64: 1, 16, 1>}, {transform_indices = @transform_3, window_bounds = array<i64: 1, 16, 256>}, {transform_indices = @transform_4, window_bounds = array<i64: 1, 16, 256>}, {transform_indices = @transform_5, window_bounds = array<i64: 1, 16, 256>}, {pipeline_mode = #tpu.pipeline_mode<synchronous>, transform_indices = @transform_6, window_bounds = array<i64: 16, 16>}, {pipeline_mode = #tpu.pipeline_mode<synchronous>, transform_indices = @transform_7, window_bounds = array<i64: 16, 1>}, {transform_indices = @transform_8, window_bounds = array<i64: 1, 16, 256>}]} {
    %c0_i32 = arith.constant 0 : i32
    %0 = arith.cmpi eq, %arg2, %c0_i32 : i32
    %1 = arith.extui %0 : i1 to i32
    %c0_i32_0 = arith.constant 0 : i32
    %2 = arith.cmpi ne, %1, %c0_i32_0 : i32
    scf.if %2 {
      %cst_32 = arith.constant 0xFF800000 : f32
      %42 = vector.broadcast %cst_32 : f32 to vector<2x1x256xf32>
      %c0_33 = arith.constant 0 : index
      %c0_34 = arith.constant 0 : index
      %c0_35 = arith.constant 0 : index
      %43 = vector.load %arg12[%c0_33, %c0_34, %c0_35] : memref<2x1x256xf32, #tpu.memory_space<vmem>>, vector<2x1x256xf32>
      tpu.vector_store %arg12[%c0_33, %c0_34, %c0_35], %42 {strides = array<i32>} : memref<2x1x256xf32, #tpu.memory_space<vmem>>, vector<2x1x256xf32>,
      %cst_36 = arith.constant 0.000000e+00 : f32
      %44 = vector.broadcast %cst_36 : f32 to vector<2x1x256xf32>
      %c0_37 = arith.constant 0 : index
      %c0_38 = arith.constant 0 : index
      %c0_39 = arith.constant 0 : index
      %45 = vector.load %arg13[%c0_37, %c0_38, %c0_39] : memref<2x1x256xf32, #tpu.memory_space<vmem>>, vector<2x1x256xf32>
      tpu.vector_store %arg13[%c0_37, %c0_38, %c0_39], %44 {strides = array<i32>} : memref<2x1x256xf32, #tpu.memory_space<vmem>>, vector<2x1x256xf32>,
      %cst_40 = arith.constant 0.000000e+00 : f32
      %46 = vector.broadcast %cst_40 : f32 to vector<2x8x256xf32>
      %c0_41 = arith.constant 0 : index
      %c0_42 = arith.constant 0 : index
      %c0_43 = arith.constant 0 : index
      %47 = vector.load %arg14[%c0_41, %c0_42, %c0_43] : memref<2x8x256xf32, #tpu.memory_space<vmem>>, vector<2x8x256xf32>
      tpu.vector_store %arg14[%c0_41, %c0_42, %c0_43], %46 {strides = array<i32>} : memref<2x8x256xf32, #tpu.memory_space<vmem>>, vector<2x8x256xf32>,
    } else {
    }
    %c0 = arith.constant 0 : index
    %c0_1 = arith.constant 0 : index
    %c0_2 = arith.constant 0 : index
    %3 = vector.load %arg6[%c0, %c0_1, %c0_2] : memref<1x16x256xf32, #tpu.memory_space<vmem>>, vector<1x16x256xf32>
    %4 = vector.shape_cast %3 : vector<1x16x256xf32> to vector<16x256xf32>
    %5 = vector.shape_cast %4 : vector<16x256xf32> to vector<2x8x256xf32>
    %6 = arith.truncf %5 : vector<2x8x256xf32> to vector<2x8x256xbf16>
    %c0_3 = arith.constant 0 : index
    %c0_4 = arith.constant 0 : index
    %c0_5 = arith.constant 0 : index
    %7 = vector.load %arg7[%c0_3, %c0_4, %c0_5] : memref<1x16x256xf32, #tpu.memory_space<vmem>>, vector<1x16x256xf32>
    %8 = vector.shape_cast %7 : vector<1x16x256xf32> to vector<16x256xf32>
    %9 = vector.shape_cast %8 : vector<16x256xf32> to vector<2x8x256xf32>
    %10 = arith.truncf %9 : vector<2x8x256xf32> to vector<2x8x256xbf16>
    %c0_6 = arith.constant 0 : index
    %c0_7 = arith.constant 0 : index
    %c0_8 = arith.constant 0 : index
    %11 = vector.load %arg8[%c0_6, %c0_7, %c0_8] : memref<1x16x256xf32, #tpu.memory_space<vmem>>, vector<1x16x256xf32>
    %12 = vector.shape_cast %11 : vector<1x16x256xf32> to vector<16x256xf32>
    %13 = vector.shape_cast %12 : vector<16x256xf32> to vector<2x8x256xf32>
    %14 = arith.truncf %13 : vector<2x8x256xf32> to vector<2x8x256xbf16>
    "tpu.trace_start"() <{level = 10 : i32, message = "hdk,hdq->hkq"}> : () -> ()
    %cst = arith.constant dense<0.000000e+00> : vector<2x256x256xf32>
    %15 = tpu.matmul %10, %6, %cst {dimension_numbers = #tpu.dot_dimension_numbers<[1], [1], [2], [2], [0, 0, 0, 2, 1, 2], [0], [0]>} : vector<2x8x256xbf16>, vector<2x8x256xbf16>, vector<2x256x256xf32> -> vector<2x256x256xf32>
    "tpu.trace_stop"() : () -> ()
    %c0_9 = arith.constant 0 : index
    %c0_10 = arith.constant 0 : index
    %c0_11 = arith.constant 0 : index
    %16 = vector.load %arg12[%c0_9, %c0_10, %c0_11] : memref<2x1x256xf32, #tpu.memory_space<vmem>>, vector<2x1x256xf32>
    %cst_12 = arith.constant dense<0xFF800000> : vector<2x256xf32>
    %17 = vector.multi_reduction <maximumf>, %15, %cst_12 [1] : vector<2x256x256xf32> to vector<2x256xf32>
    %18 = vector.shape_cast %17 : vector<2x256xf32> to vector<2x1x256xf32>
    %19 = arith.maximumf %16, %18 : vector<2x1x256xf32>
    %20 = arith.subf %16, %19 : vector<2x1x256xf32>
    %21 = math.exp %20 : vector<2x1x256xf32>
    %22 = vector.broadcast %19 : vector<2x1x256xf32> to vector<2x256x256xf32>
    %23 = arith.subf %15, %22 : vector<2x256x256xf32>
    %24 = math.exp %23 : vector<2x256x256xf32>
    %c0_13 = arith.constant 0 : index
    %c0_14 = arith.constant 0 : index
    %c0_15 = arith.constant 0 : index
    %25 = vector.load %arg13[%c0_13, %c0_14, %c0_15] : memref<2x1x256xf32, #tpu.memory_space<vmem>>, vector<2x1x256xf32>
    %26 = arith.mulf %21, %25 : vector<2x1x256xf32>
    %cst_16 = arith.constant dense<0.000000e+00> : vector<2x256xf32>
    %27 = vector.multi_reduction <add>, %24, %cst_16 [1] : vector<2x256x256xf32> to vector<2x256xf32>
    %28 = vector.shape_cast %27 : vector<2x256xf32> to vector<2x1x256xf32>
    %29 = arith.addf %26, %28 : vector<2x1x256xf32>
    %c0_17 = arith.constant 0 : index
    %c0_18 = arith.constant 0 : index
    %c0_19 = arith.constant 0 : index
    %30 = vector.load %arg13[%c0_17, %c0_18, %c0_19] : memref<2x1x256xf32, #tpu.memory_space<vmem>>, vector<2x1x256xf32>
    tpu.vector_store %arg13[%c0_17, %c0_18, %c0_19], %29 {strides = array<i32>} : memref<2x1x256xf32, #tpu.memory_space<vmem>>, vector<2x1x256xf32>,
    %c0_20 = arith.constant 0 : index
    %c0_21 = arith.constant 0 : index
    %c0_22 = arith.constant 0 : index
    %31 = vector.load %arg14[%c0_20, %c0_21, %c0_22] : memref<2x8x256xf32, #tpu.memory_space<vmem>>, vector<2x8x256xf32>
    %32 = vector.broadcast %21 : vector<2x1x256xf32> to vector<2x8x256xf32>
    %33 = arith.mulf %32, %31 : vector<2x8x256xf32>
    %34 = arith.truncf %24 : vector<2x256x256xf32> to vector<2x256x256xbf16>
    "tpu.trace_start"() <{level = 10 : i32, message = "hdk,hkq->hdq"}> : () -> ()
    %cst_23 = arith.constant dense<0.000000e+00> : vector<2x8x256xf32>
    %35 = tpu.matmul %14, %34, %cst_23 {dimension_numbers = #tpu.dot_dimension_numbers<[2], [1], [1], [2], [0, 0, 0, 1, 1, 2], [0], [0]>} : vector<2x8x256xbf16>, vector<2x256x256xbf16>, vector<2x8x256xf32> -> vector<2x8x256xf32>
    "tpu.trace_stop"() : () -> ()
    %36 = arith.addf %33, %35 : vector<2x8x256xf32>
    %c0_24 = arith.constant 0 : index
    %c0_25 = arith.constant 0 : index
    %c0_26 = arith.constant 0 : index
    %37 = vector.load %arg14[%c0_24, %c0_25, %c0_26] : memref<2x8x256xf32, #tpu.memory_space<vmem>>, vector<2x8x256xf32>
    tpu.vector_store %arg14[%c0_24, %c0_25, %c0_26], %36 {strides = array<i32>} : memref<2x8x256xf32, #tpu.memory_space<vmem>>, vector<2x8x256xf32>,
    %c0_27 = arith.constant 0 : index
    %c0_28 = arith.constant 0 : index
    %c0_29 = arith.constant 0 : index
    %38 = vector.load %arg12[%c0_27, %c0_28, %c0_29] : memref<2x1x256xf32, #tpu.memory_space<vmem>>, vector<2x1x256xf32>
    tpu.vector_store %arg12[%c0_27, %c0_28, %c0_29], %19 {strides = array<i32>} : memref<2x1x256xf32, #tpu.memory_space<vmem>>, vector<2x1x256xf32>,
    %c0_i32_30 = arith.constant 0 : i32
    %39 = arith.cmpi eq, %arg2, %c0_i32_30 : i32
    %40 = arith.extui %39 : i1 to i32
    %c0_i32_31 = arith.constant 0 : i32
    %41 = arith.cmpi ne, %40, %c0_i32_31 : i32
    scf.if %41 {
      %c0_32 = arith.constant 0 : index
      %c0_33 = arith.constant 0 : index
      %c0_34 = arith.constant 0 : index
      %42 = vector.load %arg14[%c0_32, %c0_33, %c0_34] : memref<2x8x256xf32, #tpu.memory_space<vmem>>, vector<2x8x256xf32>
      %c0_35 = arith.constant 0 : index
      %c0_36 = arith.constant 0 : index
      %c0_37 = arith.constant 0 : index
      %43 = vector.load %arg13[%c0_35, %c0_36, %c0_37] : memref<2x1x256xf32, #tpu.memory_space<vmem>>, vector<2x1x256xf32>
      %44 = tpu.reciprocal %43 {approx = true} : vector<2x1x256xf32> -> vector<2x1x256xf32>
      %45 = vector.broadcast %44 : vector<2x1x256xf32> to vector<2x8x256xf32>
      %46 = arith.mulf %42, %45 : vector<2x8x256xf32>
      %47 = vector.shape_cast %46 : vector<2x8x256xf32> to vector<16x256xf32>
      %c0_38 = arith.constant 0 : index
      %c0_39 = arith.constant 0 : index
      %48 = vector.load %arg9[%c0_38, %c0_39] : memref<16x16xbf16, #tpu.memory_space<vmem>>, vector<16x16xbf16>
      %49 = arith.truncf %47 : vector<16x256xf32> to vector<16x256xbf16>
      %cst_40 = arith.constant dense<0.000000e+00> : vector<16x256xf32>
      %50 = tpu.matmul %48, %49, %cst_40 {dimension_numbers = #tpu.dot_dimension_numbers<[1], [0], [0], [1], [0, 0, 1, 1], [], []>} : vector<16x16xbf16>, vector<16x256xbf16>, vector<16x256xf32> -> vector<16x256xf32>
      %c0_41 = arith.constant 0 : index
      %c0_42 = arith.constant 0 : index
      %c0_43 = arith.constant 0 : index
      %51 = vector.load %arg3[%c0_41, %c0_42, %c0_43] : memref<1x16x256xf32, #tpu.memory_space<vmem>>, vector<1x16x256xf32>
      %52 = vector.shape_cast %51 : vector<1x16x256xf32> to vector<16x256xf32>
      %c0_44 = arith.constant 0 : index
      %c0_45 = arith.constant 0 : index
      %c0_46 = arith.constant 0 : index
      %53 = vector.load %arg4[%c0_44, %c0_45, %c0_46] : memref<1x16x1xf32, #tpu.memory_space<vmem>>, vector<1x16x1xf32>
      %54 = vector.shape_cast %53 : vector<1x16x1xf32> to vector<16x1xf32>
      %55 = vector.broadcast %54 : vector<16x1xf32> to vector<16x256xf32>
      %56 = arith.mulf %52, %55 : vector<16x256xf32>
      %c0_47 = arith.constant 0 : index
      %c0_48 = arith.constant 0 : index
      %c0_49 = arith.constant 0 : index
      %57 = vector.load %arg5[%c0_47, %c0_48, %c0_49] : memref<1x16x1xf32, #tpu.memory_space<vmem>>, vector<1x16x1xf32>
      %58 = vector.shape_cast %57 : vector<1x16x1xf32> to vector<16x1xf32>
      %59 = vector.broadcast %58 : vector<16x1xf32> to vector<16x256xf32>
      %60 = arith.addf %56, %59 : vector<16x256xf32>
      %61 = arith.addf %60, %50 : vector<16x256xf32>
      %c0_50 = arith.constant 0 : index
      %c0_51 = arith.constant 0 : index
      %62 = vector.load %arg10[%c0_50, %c0_51] : memref<16x1xf32, #tpu.memory_space<vmem>>, vector<16x1xf32>
      %63 = vector.broadcast %62 : vector<16x1xf32> to vector<16x256xf32>
      %64 = arith.addf %61, %63 : vector<16x256xf32>
      %c0_52 = arith.constant 0 : index
      %c0_53 = arith.constant 0 : index
      %c0_54 = arith.constant 0 : index
      %65 = vector.load %arg11[%c0_52, %c0_53, %c0_54] : memref<1x16x256xf32, #tpu.memory_space<vmem>>, vector<1x16x256xf32>
      %66 = vector.shape_cast %65 : vector<1x16x256xf32> to vector<16x256xf32>
      %67 = vector.shape_cast %64 : vector<16x256xf32> to vector<1x16x256xf32>
      tpu.vector_store %arg11[%c0_52, %c0_53, %c0_54], %67 {strides = array<i32>} : memref<1x16x256xf32, #tpu.memory_space<vmem>>, vector<1x16x256xf32>,
    } else {
    }
    return
  }
  func.func @transform_0(%arg0: i32, %arg1: i32, %arg2: i32) -> (i32, i32, i32) {
    %c0_i32 = arith.constant 0 : i32
    %c0_i32_0 = arith.constant 0 : i32
    return %arg0, %c0_i32, %arg1 : i32, i32, i32
  }
  func.func @transform_1(%arg0: i32, %arg1: i32, %arg2: i32) -> (i32, i32, i32) {
    %c0_i32 = arith.constant 0 : i32
    %c0_i32_0 = arith.constant 0 : i32
    %c0_i32_1 = arith.constant 0 : i32
    return %arg0, %c0_i32, %c0_i32_0 : i32, i32, i32
  }
  func.func @transform_2(%arg0: i32, %arg1: i32, %arg2: i32) -> (i32, i32, i32) {
    %c0_i32 = arith.constant 0 : i32
    %c0_i32_0 = arith.constant 0 : i32
    %c0_i32_1 = arith.constant 0 : i32
    return %arg0, %c0_i32, %c0_i32_0 : i32, i32, i32
  }
  func.func @transform_3(%arg0: i32, %arg1: i32, %arg2: i32) -> (i32, i32, i32) {
    %c0_i32 = arith.constant 0 : i32
    %c0_i32_0 = arith.constant 0 : i32
    return %arg0, %c0_i32, %arg1 : i32, i32, i32
  }
  func.func @transform_4(%arg0: i32, %arg1: i32, %arg2: i32) -> (i32, i32, i32) {
    %c1_i32 = arith.constant 1 : i32
    %c0_i32 = arith.constant 0 : i32
    return %arg0, %c1_i32, %arg2 : i32, i32, i32
  }
  func.func @transform_5(%arg0: i32, %arg1: i32, %arg2: i32) -> (i32, i32, i32) {
    %c2_i32 = arith.constant 2 : i32
    %c0_i32 = arith.constant 0 : i32
    return %arg0, %c2_i32, %arg2 : i32, i32, i32
  }
  func.func @transform_6(%arg0: i32, %arg1: i32, %arg2: i32) -> (i32, i32) {
    %c0_i32 = arith.constant 0 : i32
    %c0_i32_0 = arith.constant 0 : i32
    %c0_i32_1 = arith.constant 0 : i32
    return %c0_i32, %c0_i32_0 : i32, i32
  }
  func.func @transform_7(%arg0: i32, %arg1: i32, %arg2: i32) -> (i32, i32) {
    %c0_i32 = arith.constant 0 : i32
    %c0_i32_0 = arith.constant 0 : i32
    %c0_i32_1 = arith.constant 0 : i32
    return %c0_i32, %c0_i32_0 : i32, i32
  }
  func.func @transform_8(%arg0: i32, %arg1: i32, %arg2: i32) -> (i32, i32, i32) {
    %c0_i32 = arith.constant 0 : i32
    %c0_i32_0 = arith.constant 0 : i32
    return %arg0, %c0_i32, %arg1 : i32, i32, i32
  }
}

module attributes {stable_mosaic.version = 11 : i64} {
  func.func @_qkv_rope_kernel(%arg0: i32, %arg1: i32, %arg2: memref<1x16x256xf32, #tpu.memory_space<vmem>>, %arg3: memref<1x16x1xf32, #tpu.memory_space<vmem>>, %arg4: memref<1x16x1xf32, #tpu.memory_space<vmem>>, %arg5: memref<48x16xbf16, #tpu.memory_space<vmem>>, %arg6: memref<16x256xf32, #tpu.memory_space<vmem>>, %arg7: memref<16x256xf32, #tpu.memory_space<vmem>>, %arg8: memref<1x48x256xf32, #tpu.memory_space<vmem>>) attributes {dimension_semantics = [#tpu.dimension_semantics<parallel>, #tpu.dimension_semantics<parallel>], iteration_bounds = array<i64: 2, 1>, scalar_prefetch = 0 : i64, scratch_operands = 0 : i64, tpu.core_type = #tpu.core_type<tc>, window_params = [{transform_indices = @transform_0, window_bounds = array<i64: 1, 16, 256>}, {transform_indices = @transform_1, window_bounds = array<i64: 1, 16, 1>}, {transform_indices = @transform_2, window_bounds = array<i64: 1, 16, 1>}, {pipeline_mode = #tpu.pipeline_mode<synchronous>, transform_indices = @transform_3, window_bounds = array<i64: 48, 16>}, {transform_indices = @transform_4, window_bounds = array<i64: 16, 256>}, {transform_indices = @transform_5, window_bounds = array<i64: 16, 256>}, {transform_indices = @transform_6, window_bounds = array<i64: 1, 48, 256>}]} {
    %c0 = arith.constant 0 : index
    %c0_0 = arith.constant 0 : index
    %c0_1 = arith.constant 0 : index
    %0 = vector.load %arg2[%c0, %c0_0, %c0_1] : memref<1x16x256xf32, #tpu.memory_space<vmem>>, vector<1x16x256xf32>
    %1 = vector.shape_cast %0 : vector<1x16x256xf32> to vector<16x256xf32>
    %c0_2 = arith.constant 0 : index
    %c0_3 = arith.constant 0 : index
    %c0_4 = arith.constant 0 : index
    %2 = vector.load %arg3[%c0_2, %c0_3, %c0_4] : memref<1x16x1xf32, #tpu.memory_space<vmem>>, vector<1x16x1xf32>
    %3 = vector.shape_cast %2 : vector<1x16x1xf32> to vector<16x1xf32>
    %4 = vector.broadcast %3 : vector<16x1xf32> to vector<16x256xf32>
    %5 = arith.mulf %1, %4 : vector<16x256xf32>
    %c0_5 = arith.constant 0 : index
    %c0_6 = arith.constant 0 : index
    %c0_7 = arith.constant 0 : index
    %6 = vector.load %arg4[%c0_5, %c0_6, %c0_7] : memref<1x16x1xf32, #tpu.memory_space<vmem>>, vector<1x16x1xf32>
    %7 = vector.shape_cast %6 : vector<1x16x1xf32> to vector<16x1xf32>
    %8 = vector.broadcast %7 : vector<16x1xf32> to vector<16x256xf32>
    %9 = arith.addf %5, %8 : vector<16x256xf32>
    %c0_8 = arith.constant 0 : index
    %c0_9 = arith.constant 0 : index
    %10 = vector.load %arg5[%c0_8, %c0_9] : memref<48x16xbf16, #tpu.memory_space<vmem>>, vector<48x16xbf16>
    %11 = arith.truncf %9 : vector<16x256xf32> to vector<16x256xbf16>
    %cst = arith.constant dense<0.000000e+00> : vector<48x256xf32>
    %12 = tpu.matmul %10, %11, %cst {dimension_numbers = #tpu.dot_dimension_numbers<[1], [0], [0], [1], [0, 0, 1, 1], [], []>} : vector<48x16xbf16>, vector<16x256xbf16>, vector<48x256xf32> -> vector<48x256xf32>
    %c0_10 = arith.constant 0 : index
    %c0_11 = arith.constant 0 : index
    %13 = vector.load %arg6[%c0_10, %c0_11] : memref<16x256xf32, #tpu.memory_space<vmem>>, vector<16x256xf32>
    %c0_12 = arith.constant 0 : index
    %c0_13 = arith.constant 0 : index
    %14 = vector.load %arg7[%c0_12, %c0_13] : memref<16x256xf32, #tpu.memory_space<vmem>>, vector<16x256xf32>
    %15 = vector.extract_strided_slice %12 {offsets = [0, 0], sizes = [16, 256], strides = [1, 1]} : vector<48x256xf32> to vector<16x256xf32>
    %16 = vector.extract_strided_slice %15 {offsets = [8, 0], sizes = [8, 256], strides = [1, 1]} : vector<16x256xf32> to vector<8x256xf32>
    %17 = vector.extract_strided_slice %15 {offsets = [0, 0], sizes = [8, 256], strides = [1, 1]} : vector<16x256xf32> to vector<8x256xf32>
    %18 = tpu.concatenate %16, %17 in 0 : vector<8x256xf32>, vector<8x256xf32> -> vector<16x256xf32>
    %19 = arith.mulf %15, %13 : vector<16x256xf32>
    %20 = arith.mulf %18, %14 : vector<16x256xf32>
    %21 = arith.addf %19, %20 : vector<16x256xf32>
    %c0_14 = arith.constant 0 : index
    %c0_15 = arith.constant 0 : index
    %c0_16 = arith.constant 0 : index
    %22 = vector.load %arg8[%c0_14, %c0_15, %c0_16] : memref<1x48x256xf32, #tpu.memory_space<vmem>>, vector<1x16x256xf32>
    %23 = vector.shape_cast %22 : vector<1x16x256xf32> to vector<16x256xf32>
    %24 = vector.shape_cast %21 : vector<16x256xf32> to vector<1x16x256xf32>
    tpu.vector_store %arg8[%c0_14, %c0_15, %c0_16], %24 {strides = array<i32>} : memref<1x48x256xf32, #tpu.memory_space<vmem>>, vector<1x16x256xf32>,
    %25 = vector.extract_strided_slice %12 {offsets = [16, 0], sizes = [16, 256], strides = [1, 1]} : vector<48x256xf32> to vector<16x256xf32>
    %26 = vector.extract_strided_slice %25 {offsets = [8, 0], sizes = [8, 256], strides = [1, 1]} : vector<16x256xf32> to vector<8x256xf32>
    %27 = vector.extract_strided_slice %25 {offsets = [0, 0], sizes = [8, 256], strides = [1, 1]} : vector<16x256xf32> to vector<8x256xf32>
    %28 = tpu.concatenate %26, %27 in 0 : vector<8x256xf32>, vector<8x256xf32> -> vector<16x256xf32>
    %29 = arith.mulf %25, %13 : vector<16x256xf32>
    %30 = arith.mulf %28, %14 : vector<16x256xf32>
    %31 = arith.addf %29, %30 : vector<16x256xf32>
    %c0_17 = arith.constant 0 : index
    %c16 = arith.constant 16 : index
    %c0_18 = arith.constant 0 : index
    %32 = vector.load %arg8[%c0_17, %c16, %c0_18] : memref<1x48x256xf32, #tpu.memory_space<vmem>>, vector<1x16x256xf32>
    %33 = vector.shape_cast %32 : vector<1x16x256xf32> to vector<16x256xf32>
    %34 = vector.shape_cast %31 : vector<16x256xf32> to vector<1x16x256xf32>
    tpu.vector_store %arg8[%c0_17, %c16, %c0_18], %34 {strides = array<i32>} : memref<1x48x256xf32, #tpu.memory_space<vmem>>, vector<1x16x256xf32>,
    %35 = vector.extract_strided_slice %12 {offsets = [32, 0], sizes = [16, 256], strides = [1, 1]} : vector<48x256xf32> to vector<16x256xf32>
    %c0_19 = arith.constant 0 : index
    %c32 = arith.constant 32 : index
    %c0_20 = arith.constant 0 : index
    %36 = vector.load %arg8[%c0_19, %c32, %c0_20] : memref<1x48x256xf32, #tpu.memory_space<vmem>>, vector<1x16x256xf32>
    %37 = vector.shape_cast %36 : vector<1x16x256xf32> to vector<16x256xf32>
    %38 = vector.shape_cast %35 : vector<16x256xf32> to vector<1x16x256xf32>
    tpu.vector_store %arg8[%c0_19, %c32, %c0_20], %38 {strides = array<i32>} : memref<1x48x256xf32, #tpu.memory_space<vmem>>, vector<1x16x256xf32>,
    return
  }
  func.func @transform_0(%arg0: i32, %arg1: i32) -> (i32, i32, i32) {
    %c0_i32 = arith.constant 0 : i32
    %c0_i32_0 = arith.constant 0 : i32
    return %arg0, %c0_i32, %arg1 : i32, i32, i32
  }
  func.func @transform_1(%arg0: i32, %arg1: i32) -> (i32, i32, i32) {
    %c0_i32 = arith.constant 0 : i32
    %c0_i32_0 = arith.constant 0 : i32
    %c0_i32_1 = arith.constant 0 : i32
    return %arg0, %c0_i32, %c0_i32_0 : i32, i32, i32
  }
  func.func @transform_2(%arg0: i32, %arg1: i32) -> (i32, i32, i32) {
    %c0_i32 = arith.constant 0 : i32
    %c0_i32_0 = arith.constant 0 : i32
    %c0_i32_1 = arith.constant 0 : i32
    return %arg0, %c0_i32, %c0_i32_0 : i32, i32, i32
  }
  func.func @transform_3(%arg0: i32, %arg1: i32) -> (i32, i32) {
    %c0_i32 = arith.constant 0 : i32
    %c0_i32_0 = arith.constant 0 : i32
    %c0_i32_1 = arith.constant 0 : i32
    return %c0_i32, %c0_i32_0 : i32, i32
  }
  func.func @transform_4(%arg0: i32, %arg1: i32) -> (i32, i32) {
    %c0_i32 = arith.constant 0 : i32
    %c0_i32_0 = arith.constant 0 : i32
    return %c0_i32, %arg1 : i32, i32
  }
  func.func @transform_5(%arg0: i32, %arg1: i32) -> (i32, i32) {
    %c0_i32 = arith.constant 0 : i32
    %c0_i32_0 = arith.constant 0 : i32
    return %c0_i32, %arg1 : i32, i32
  }
  func.func @transform_6(%arg0: i32, %arg1: i32) -> (i32, i32, i32) {
    %c0_i32 = arith.constant 0 : i32
    %c0_i32_0 = arith.constant 0 : i32
    return %arg0, %c0_i32, %arg1 : i32, i32, i32
  }
}

module attributes {stable_mosaic.version = 11 : i64} {
  func.func @_gn_stats_kernel(%arg0: i32, %arg1: i32, %arg2: memref<1x1x4x256xf32, #tpu.memory_space<vmem>>, %arg3: memref<1x4x1xf32, #tpu.memory_space<vmem>>, %arg4: memref<1x4x1xf32, #tpu.memory_space<vmem>>, %arg5: memref<1x1x4x1xf32, #tpu.memory_space<vmem>>, %arg6: memref<1x1x4x1xf32, #tpu.memory_space<vmem>>) attributes {dimension_semantics = [#tpu.dimension_semantics<parallel>, #tpu.dimension_semantics<parallel>], iteration_bounds = array<i64: 2, 4>, scalar_prefetch = 0 : i64, scratch_operands = 0 : i64, tpu.core_type = #tpu.core_type<tc>, window_params = [{transform_indices = @transform_0, window_bounds = array<i64: 1, 1, 4, 256>}, {transform_indices = @transform_1, window_bounds = array<i64: 1, 4, 1>}, {transform_indices = @transform_2, window_bounds = array<i64: 1, 4, 1>}, {transform_indices = @transform_3, window_bounds = array<i64: 1, 1, 4, 1>}, {transform_indices = @transform_4, window_bounds = array<i64: 1, 1, 4, 1>}]} {
    %c0 = arith.constant 0 : index
    %c0_0 = arith.constant 0 : index
    %c0_1 = arith.constant 0 : index
    %c0_2 = arith.constant 0 : index
    %0 = vector.load %arg2[%c0, %c0_0, %c0_1, %c0_2] : memref<1x1x4x256xf32, #tpu.memory_space<vmem>>, vector<1x1x4x256xf32>
    %1 = vector.shape_cast %0 : vector<1x1x4x256xf32> to vector<4x256xf32>
    %2 = vector.shape_cast %1 : vector<4x256xf32> to vector<1x4x256xf32>
    %cst = arith.constant dense<0.000000e+00> : vector<1xf32>
    %3 = vector.multi_reduction <add>, %2, %cst [1, 2] : vector<1x4x256xf32> to vector<1xf32>
    %4 = vector.shape_cast %3 : vector<1xf32> to vector<1x1x1xf32>
    %5 = vector.extract %4[0, 0, 0] : f32 from vector<1x1x1xf32>
    %6 = arith.mulf %1, %1 : vector<4x256xf32>
    %7 = vector.shape_cast %6 : vector<4x256xf32> to vector<1x4x256xf32>
    %cst_3 = arith.constant dense<0.000000e+00> : vector<1xf32>
    %8 = vector.multi_reduction <add>, %7, %cst_3 [1, 2] : vector<1x4x256xf32> to vector<1xf32>
    %9 = vector.shape_cast %8 : vector<1xf32> to vector<1x1x1xf32>
    %10 = vector.extract %9[0, 0, 0] : f32 from vector<1x1x1xf32>
    %cst_4 = arith.constant 1.024000e+03 : f32
    %11 = arith.divf %5, %cst_4 : f32
    %cst_5 = arith.constant 1.024000e+03 : f32
    %12 = arith.divf %10, %cst_5 : f32
    %13 = arith.mulf %11, %11 : f32
    %14 = arith.subf %12, %13 : f32
    %cst_6 = arith.constant 0.000000e+00 : f32
    %15 = arith.maximumf %14, %cst_6 : f32
    %cst_7 = arith.constant 9.99999974E-6 : f32
    %16 = arith.addf %15, %cst_7 : f32
    %17 = math.rsqrt %16 : f32
    %c0_8 = arith.constant 0 : index
    %c0_9 = arith.constant 0 : index
    %c0_10 = arith.constant 0 : index
    %18 = vector.load %arg3[%c0_8, %c0_9, %c0_10] : memref<1x4x1xf32, #tpu.memory_space<vmem>>, vector<1x4x1xf32>
    %19 = vector.shape_cast %18 : vector<1x4x1xf32> to vector<4x1xf32>
    %c0_11 = arith.constant 0 : index
    %c0_12 = arith.constant 0 : index
    %c0_13 = arith.constant 0 : index
    %20 = vector.load %arg4[%c0_11, %c0_12, %c0_13] : memref<1x4x1xf32, #tpu.memory_space<vmem>>, vector<1x4x1xf32>
    %21 = vector.shape_cast %20 : vector<1x4x1xf32> to vector<4x1xf32>
    %22 = vector.broadcast %17 : f32 to vector<4x1xf32>
    %23 = arith.mulf %19, %22 : vector<4x1xf32>
    %c0_14 = arith.constant 0 : index
    %c0_15 = arith.constant 0 : index
    %c0_16 = arith.constant 0 : index
    %c0_17 = arith.constant 0 : index
    %24 = vector.load %arg5[%c0_14, %c0_15, %c0_16, %c0_17] : memref<1x1x4x1xf32, #tpu.memory_space<vmem>>, vector<1x1x4x1xf32>
    %25 = vector.shape_cast %24 : vector<1x1x4x1xf32> to vector<4x1xf32>
    %26 = vector.shape_cast %23 : vector<4x1xf32> to vector<1x1x4x1xf32>
    tpu.vector_store %arg5[%c0_14, %c0_15, %c0_16, %c0_17], %26 {strides = array<i32>} : memref<1x1x4x1xf32, #tpu.memory_space<vmem>>, vector<1x1x4x1xf32>,
    %27 = arith.mulf %11, %17 : f32
    %28 = vector.broadcast %27 : f32 to vector<4x1xf32>
    %29 = arith.mulf %19, %28 : vector<4x1xf32>
    %30 = arith.subf %21, %29 : vector<4x1xf32>
    %c0_18 = arith.constant 0 : index
    %c0_19 = arith.constant 0 : index
    %c0_20 = arith.constant 0 : index
    %c0_21 = arith.constant 0 : index
    %31 = vector.load %arg6[%c0_18, %c0_19, %c0_20, %c0_21] : memref<1x1x4x1xf32, #tpu.memory_space<vmem>>, vector<1x1x4x1xf32>
    %32 = vector.shape_cast %31 : vector<1x1x4x1xf32> to vector<4x1xf32>
    %33 = vector.shape_cast %30 : vector<4x1xf32> to vector<1x1x4x1xf32>
    tpu.vector_store %arg6[%c0_18, %c0_19, %c0_20, %c0_21], %33 {strides = array<i32>} : memref<1x1x4x1xf32, #tpu.memory_space<vmem>>, vector<1x1x4x1xf32>,
    return
  }
  func.func @transform_0(%arg0: i32, %arg1: i32) -> (i32, i32, i32, i32) {
    %c0_i32 = arith.constant 0 : i32
    %c0_i32_0 = arith.constant 0 : i32
    %c0_i32_1 = arith.constant 0 : i32
    return %arg0, %arg1, %c0_i32, %c0_i32_0 : i32, i32, i32, i32
  }
  func.func @transform_1(%arg0: i32, %arg1: i32) -> (i32, i32, i32) {
    %c0_i32 = arith.constant 0 : i32
    %c0_i32_0 = arith.constant 0 : i32
    %c0_i32_1 = arith.constant 0 : i32
    return %arg1, %c0_i32, %c0_i32_0 : i32, i32, i32
  }
  func.func @transform_2(%arg0: i32, %arg1: i32) -> (i32, i32, i32) {
    %c0_i32 = arith.constant 0 : i32
    %c0_i32_0 = arith.constant 0 : i32
    %c0_i32_1 = arith.constant 0 : i32
    return %arg1, %c0_i32, %c0_i32_0 : i32, i32, i32
  }
  func.func @transform_3(%arg0: i32, %arg1: i32) -> (i32, i32, i32, i32) {
    %c0_i32 = arith.constant 0 : i32
    %c0_i32_0 = arith.constant 0 : i32
    %c0_i32_1 = arith.constant 0 : i32
    return %arg0, %arg1, %c0_i32, %c0_i32_0 : i32, i32, i32, i32
  }
  func.func @transform_4(%arg0: i32, %arg1: i32) -> (i32, i32, i32, i32) {
    %c0_i32 = arith.constant 0 : i32
    %c0_i32_0 = arith.constant 0 : i32
    %c0_i32_1 = arith.constant 0 : i32
    return %arg0, %arg1, %c0_i32, %c0_i32_0 : i32, i32, i32, i32
  }
}

</mosaic_0001>

<llo_original>
// kernel: mul.25
$region0: #{mul.25}
  %s0 = inlined_call_operand.vmem [shape: f32[16,16], index: 0, kind: input, shape index: {}]
  %s1 = inlined_call_operand.vmem [shape: f32[256], index: 1, kind: output, shape index: {}]
  $region1: #{mul.25} parent=0
    #allocation0 [shape = 'u8[4096]{0}', space=vmem, size = 0x1000, scoped, tag = 'scoped mem for output reshape']
    %s2 = smov 3
    %v3 = vld [vmem:[%s0] ss:$8 sm:%s2]
    %vm4 = vcmask 130048
    %5 = vst.msk [vmem:[#allocation0] sm:$0x3] %vm4, %v3
    %s6 = scalar_lea.vmem %s0, 7
    %s7 = smov 3
    %v8 = vld [vmem:[%s6] ss:$8 sm:%s7]
    %9 = vrot.lane.b32.xlu0 %v8, 112
    %v10 = vpop.permute.xlu0 %9
    %vm11 = vcmask 1048448
    %12 = vst.msk [vmem:[#allocation0] sm:$0x3] %vm11, %v10
    %s13 = scalar_lea.vmem %s0, 6
    %s14 = smov 3
    %v15 = vld [vmem:[%s13] ss:$8 sm:%s14]
    %16 = vrot.lane.b32.xlu0 %v15, 96
    %v17 = vpop.permute.xlu0 %16
    %vm18 = vcmask 917248
    %19 = vst.msk [vmem:[#allocation0] sm:$0x3] %vm18, %v17
    %s20 = scalar_lea.vmem %s0, 5
    %s21 = smov 3
    %v22 = vld [vmem:[%s20] ss:$8 sm:%s21]
    %23 = vrot.lane.b32.xlu0 %v22, 80
    %v24 = vpop.permute.xlu0 %23
    %vm25 = vcmask 786048
    %26 = vst.msk [vmem:[#allocation0] sm:$0x3] %vm25, %v24
    %s27 = scalar_lea.vmem %s0, 4
    %s28 = smov 3
    %v29 = vld [vmem:[%s27] ss:$8 sm:%s28]
    %30 = vrot.lane.b32.xlu0 %v29, 64
    %v31 = vpop.permute.xlu0 %30
    %vm32 = vcmask 654848
    %33 = vst.msk [vmem:[#allocation0] sm:$0x3] %vm32, %v31
    %s34 = scalar_lea.vmem %s0, 3
    %s35 = smov 3
    %v36 = vld [vmem:[%s34] ss:$8 sm:%s35]
    %37 = vrot.lane.b32.xlu0 %v36, 48
    %v38 = vpop.permute.xlu0 %37
    %vm39 = vcmask 523648
    %40 = vst.msk [vmem:[#allocation0] sm:$0x3] %vm39, %v38
    %s41 = scalar_lea.vmem %s0, 2
    %s42 = smov 3
    %v43 = vld [vmem:[%s41] ss:$8 sm:%s42]
    %44 = vrot.lane.b32.xlu0 %v43, 32
    %v45 = vpop.permute.xlu0 %44
    %vm46 = vcmask 392448
    %47 = vst.msk [vmem:[#allocation0] sm:$0x3] %vm46, %v45
    %s48 = scalar_lea.vmem %s0, 1
    %s49 = smov 3
    %v50 = vld [vmem:[%s48] ss:$8 sm:%s49]
    %51 = vrot.lane.b32.xlu0 %v50, 16
    %v52 = vpop.permute.xlu0 %51
    %vm53 = vcmask 261248
    %54 = vst.msk [vmem:[#allocation0] sm:$0x3] %vm53, %v52
    %s56 = sshll.u32 1, 2
    %s57 = ssub.s32 %s56, 1
    %v59 = vld [vmem:[#allocation0] sm:%s57]
    %s60 = sshll.u32 1, 2
    %s61 = ssub.s32 %s60, 1
    %62 = vst [vmem:[%s1] sm:%s61] %v59

// kernel: attention_block.3
$region0: #{attention_block.3}
  #allocation0 [shape = 'u32[]', space=smem, size = 0x4, offset = 0x4, fixed_abs, tag = 'smem constant byte address 0x4 - core index']
  #allocation1 [shape = 'u32[144,128]{1,0:T(1,128)}', space=vmem, size = 0x12000, scoped, tag = 'internal scratch']
  %s0 = inlined_call_operand.vmem [shape: f32[2,4,4,256], index: 0, kind: input, shape index: {}]
  %s1 = inlined_call_operand.vmem [shape: f32[4,4,1], index: 1, kind: input, shape index: {}]
  %s2 = inlined_call_operand.vmem [shape: f32[4,4,1], index: 2, kind: input, shape index: {}]
  %s3 = inlined_call_operand.vmem [shape: f32[2,4,4,1], index: 3, kind: output, shape index: {0}]
  %s4 = inlined_call_operand.vmem [shape: f32[2,4,4,1], index: 4, kind: output, shape index: {1}]
  %5 = xla_tuple %s3, %s4
  %s6 = sld [smem:[#allocation0]]
  $region53: #{attention_block.3} parent=0
    _
  %s8 = ssub.s32 1, %s6
  %s9 = scalar_select 0, %s8, %s6
  loop: start=0, step=1, limit=10
  $region2: #{attention_block.3} parent=0 // loop_pre_header
    _
  $region3: #{attention_block.3} parent=0 // loop_header
    %s11 = sphi 0, %s15
    %p12 = scmp.ge.s32.totalorder %s11, 10
    %s18 = sphi 0, %s30
    %s19 = sphi 0, %s26
    %s20 = sphi 0, %s18
    %s21 = sphi 0, %s19
    %s22 = sphi 0, %s20
    %s23 = sphi 0, %s21
    %s35 = sphi 0, %s37
    %s38 = sphi 0, %s35
    %s39 = sphi 0, %s38
    %s55 = sphi 0, %s39
    %s61 = sphi 0, %s63
    %s64 = sphi 0, %s61
    %s65 = sphi 0, %s64
    %s81 = sphi 0, %s65
    %s87 = sphi 0, %s89
    %s90 = sphi 0, %s87
    %s91 = sphi 0, %s90
    %s107 = sphi 0, %s91
    %s115 = sphi 0, %s117
    %s118 = sphi 0, %s115
    %s119 = sphi 0, %s118
    %s135 = sphi 0, %s119
    %s143 = sphi 0, %s145
    %s146 = sphi 0, %s143
    %s147 = sphi 0, %s146
    %s163 = sphi 0, %s147
  $region4: #{attention_block.3} parent=0 // loop_header_branch
    %14 = sbr.rel (%p12) target = $region8
  $region5: #{attention_block.3} parent=0 // loop_body
    %s16 = ssub.s32 %s11, 1
    %s17 = ssub.s32 %s11, 2
    %s24 = sadd.s32 1, %s19
    %p25 = scmp.ge.s32.totalorder %s24, 4
    %s26 = scalar_select %p25, 0, %s24
    %s27 = sadd.s32 1, %s18
    %s28 = scalar_select %p25, %s27, %s18
    %p29 = scmp.ge.s32.totalorder %s28, 2
    %s30 = scalar_select %p29, 0, %s28
    %s31 = ssub.s32 %s18, %s30
    %s32 = ssub.s32 %s19, %s26
    %s33 = sor.u32 %s31, %s32
    %p34 = scmp.eq.s32.totalorder %s33, 0
    %s36 = sadd.s32 %s35, 1
    %s37 = scalar_select %p34, %s35, %s36
    %p40 = pneg %p34
    %p41 = scmp.eq.s32.totalorder %s11, 7
    %p42 = por %p40, %p41
    %p43 = scmp.ne.s32.totalorder %s35, %s38
    %p44 = scmp.eq.s32.totalorder %s11, 0
    %p45 = por %p43, %p44
    %p46 = scmp.ne.s32.totalorder %s35, %s38
    %p47 = scmp.eq.s32.totalorder %s16, 7
    %p48 = por %p46, %p47
    %p49 = scmp.ne.s32.totalorder %s38, %s39
    %p50 = scmp.eq.s32.totalorder %s16, 0
    %p51 = por %p49, %p50
    %p52 = scmp.ne.s32.totalorder %s38, %s39
    %p53 = scmp.eq.s32.totalorder %s17, 7
    %p54 = por %p52, %p53
    %p56 = scmp.ne.s32.totalorder %s39, %s55
    %p57 = scmp.eq.s32.totalorder %s17, 0
    %p58 = por %p56, %p57
    %s59 = ssub.s32 %s19, %s26
    %p60 = scmp.eq.s32.totalorder %s59, 0
    %s62 = sadd.s32 %s61, 1
    %s63 = scalar_select %p60, %s61, %s62
    %p66 = pneg %p60
    %p67 = scmp.eq.s32.totalorder %s11, 7
    %p68 = por %p66, %p67
    %p69 = scmp.ne.s32.totalorder %s61, %s64
    %p70 = scmp.eq.s32.totalorder %s11, 0
    %p71 = por %p69, %p70
    %p72 = scmp.ne.s32.totalorder %s61, %s64
    %p73 = scmp.eq.s32.totalorder %s16, 7
    %p74 = por %p72, %p73
    %p75 = scmp.ne.s32.totalorder %s64, %s65
    %p76 = scmp.eq.s32.totalorder %s16, 0
    %p77 = por %p75, %p76
    %p78 = scmp.ne.s32.totalorder %s64, %s65
    %p79 = scmp.eq.s32.totalorder %s17, 7
    %p80 = por %p78, %p79
    %p82 = scmp.ne.s32.totalorder %s65, %s81
    %p83 = scmp.eq.s32.totalorder %s17, 0
    %p84 = por %p82, %p83
    %s85 = ssub.s32 %s19, %s26
    %p86 = scmp.eq.s32.totalorder %s85, 0
    %s88 = sadd.s32 %s87, 1
    %s89 = scalar_select %p86, %s87, %s88
    %p92 = pneg %p86
    %p93 = scmp.eq.s32.totalorder %s11, 7
    %p94 = por %p92, %p93
    %p95 = scmp.ne.s32.totalorder %s87, %s90
    %p96 = scmp.eq.s32.totalorder %s11, 0
    %p97 = por %p95, %p96
    %p98 = scmp.ne.s32.totalorder %s87, %s90
    %p99 = scmp.eq.s32.totalorder %s16, 7
    %p100 = por %p98, %p99
    %p101 = scmp.ne.s32.totalorder %s90, %s91
    %p102 = scmp.eq.s32.totalorder %s16, 0
    %p103 = por %p101, %p102
    %p104 = scmp.ne.s32.totalorder %s90, %s91
    %p105 = scmp.eq.s32.totalorder %s17, 7
    %p106 = por %p104, %p105
    %p108 = scmp.ne.s32.totalorder %s91, %s107
    %p109 = scmp.eq.s32.totalorder %s17, 0
    %p110 = por %p108, %p109
    %s111 = ssub.s32 %s18, %s30
    %s112 = ssub.s32 %s19, %s26
    %s113 = sor.u32 %s111, %s112
    %p114 = scmp.eq.s32.totalorder %s113, 0
    %s116 = sadd.s32 %s115, 1
    %s117 = scalar_select %p114, %s115, %s116
    %p120 = pneg %p114
    %p121 = scmp.eq.s32.totalorder %s11, 7
    %p122 = por %p120, %p121
    %p123 = scmp.ne.s32.totalorder %s115, %s118
    %p124 = scmp.eq.s32.totalorder %s11, 0
    %p125 = por %p123, %p124
    %p126 = scmp.ne.s32.totalorder %s115, %s118
    %p127 = scmp.eq.s32.totalorder %s16, 7
    %p128 = por %p126, %p127
    %p129 = scmp.ne.s32.totalorder %s118, %s119
    %p130 = scmp.eq.s32.totalorder %s16, 0
    %p131 = por %p129, %p130
    %p132 = scmp.ne.s32.totalorder %s118, %s119
    %p133 = scmp.eq.s32.totalorder %s17, 7
    %p134 = por %p132, %p133
    %p136 = scmp.ne.s32.totalorder %s119, %s135
    %p137 = scmp.eq.s32.totalorder %s17, 0
    %p138 = por %p136, %p137
    %s139 = ssub.s32 %s18, %s30
    %s140 = ssub.s32 %s19, %s26
    %s141 = sor.u32 %s139, %s140
    %p142 = scmp.eq.s32.totalorder %s141, 0
    %s144 = sadd.s32 %s143, 1
    %s145 = scalar_select %p142, %s143, %s144
    %p148 = pneg %p142
    %p149 = scmp.eq.s32.totalorder %s11, 7
    %p150 = por %p148, %p149
    %p151 = scmp.ne.s32.totalorder %s143, %s146
    %p152 = scmp.eq.s32.totalorder %s11, 0
    %p153 = por %p151, %p152
    %p154 = scmp.ne.s32.totalorder %s143, %s146
    %p155 = scmp.eq.s32.totalorder %s16, 7
    %p156 = por %p154, %p155
    %p157 = scmp.ne.s32.totalorder %s146, %s147
    %p158 = scmp.eq.s32.totalorder %s16, 0
    %p159 = por %p157, %p158
    %p160 = scmp.ne.s32.totalorder %s146, %s147
    %p161 = scmp.eq.s32.totalorder %s17, 7
    %p162 = por %p160, %p161
    %p164 = scmp.ne.s32.totalorder %s147, %s163
    %p165 = scmp.eq.s32.totalorder %s17, 0
    %p166 = por %p164, %p165
    %p167 = scmp.le.s32.totalorder 1, %s11
    %p168 = scmp.lt.s32.totalorder %s11, 9
    %p169 = pnand %p167, %p168
    %p170 = pneg %p169
    // Predicated region
    $region9: #{attention_block.3} parent=5 // pred_check
      _
    $region10: #{attention_block.3} parent=5 // pred_check_branch
      %172 = sbr.rel (%p169) target = $region12
    $region11: #{attention_block.3} parent=5 // pred_region
      %s173 = ssub.s32 %s11, 1
    $region12: #{attention_block.3} parent=5 // pred_fallthru
      _
    %p174 = scmp.lt.s32.totalorder %s11, 8
    // Predicated region
    $region13: #{attention_block.3} parent=5 // pred_check
      %p175 = pneg %p174
    $region14: #{attention_block.3} parent=5 // pred_check_branch
      %177 = sbr.rel (%p175) target = $region16
    $region15: #{attention_block.3} parent=5 // pred_region
      // Predicated region
      $region17: #{attention_block.3} parent=15 // pred_check
        %p178 = pneg %p45
      $region18: #{attention_block.3} parent=15 // pred_check_branch
        %180 = sbr.rel (%p178) target = $region20
      $region19: #{attention_block.3} parent=15 // pred_region
        %p181 = scmp.lt.s32.totalorder %s18, 1
        %s182 = scalar_select %p181, %s18, 1
        %p183 = scmp.lt.s32.totalorder %s19, 3
        %s184 = scalar_select %p183, %s19, 3
        %s185 = smul.addr %s184, 2
        %s186 = smul.addr %s182, 8
        %s187 = sadd.s32 %s185, %s186
        %s188 = smul.addr %s187, 4
        %s189 = scalar_lea.vmem %s0, %s188
      $region20: #{attention_block.3} parent=15 // pred_fallthru
        _
      // Predicated region
      $region21: #{attention_block.3} parent=15 // pred_check
        %p190 = pneg %p71
      $region22: #{attention_block.3} parent=15 // pred_check_branch
        %192 = sbr.rel (%p190) target = $region24
      $region23: #{attention_block.3} parent=15 // pred_region
        %p193 = scmp.lt.s32.totalorder %s19, 3
        %s194 = scalar_select %p193, %s19, 3
        %s195 = smul.addr %s194, 4
        %s196 = scalar_lea.vmem %s1, %s195
      $region24: #{attention_block.3} parent=15 // pred_fallthru
        _
      // Predicated region
      $region25: #{attention_block.3} parent=15 // pred_check
        %p197 = pneg %p97
      $region26: #{attention_block.3} parent=15 // pred_check_branch
        %199 = sbr.rel (%p197) target = $region28
      $region27: #{attention_block.3} parent=15 // pred_region
        %p200 = scmp.lt.s32.totalorder %s19, 3
        %s201 = scalar_select %p200, %s19, 3
        %s202 = smul.addr %s201, 4
        %s203 = scalar_lea.vmem %s2, %s202
      $region28: #{attention_block.3} parent=15 // pred_fallthru
        _
    $region16: #{attention_block.3} parent=5 // pred_fallthru
      _
    %p204 = scmp.le.s32.totalorder 1, %s11
    %p205 = scmp.lt.s32.totalorder %s11, 9
    %p206 = pnand %p204, %p205
    %p207 = pneg %p206
    // Predicated region
    $region29: #{attention_block.3} parent=5 // pred_check
      _
    $region30: #{attention_block.3} parent=5 // pred_check_branch
      %209 = sbr.rel (%p206) target = $region32
    $region31: #{attention_block.3} parent=5 // pred_region
      %s210 = ssub.s32 %s11, 1
      %p211 = scmp.lt.s32.totalorder %s20, 1
      %s212 = scalar_select %p211, %s20, 1
      %p213 = scmp.lt.s32.totalorder %s21, 3
      %s214 = scalar_select %p213, %s21, 3
      %s215 = smul.addr %s214, 2
      %s216 = smul.addr %s212, 8
      %s217 = sadd.s32 %s215, %s216
      %s218 = smul.addr %s217, 4
      %s219 = scalar_lea.vmem %s0, %s218
      %p220 = pneg %p51
      %p221 = pneg %p48
      %p222 = scmp.lt.s32.totalorder %s21, 3
      %s223 = scalar_select %p222, %s21, 3
      %s224 = smul.addr %s223, 4
      %s225 = scalar_lea.vmem %s1, %s224
      %p226 = pneg %p77
      %p227 = pneg %p74
      %p228 = scmp.lt.s32.totalorder %s21, 3
      %s229 = scalar_select %p228, %s21, 3
      %s230 = smul.addr %s229, 4
      %s231 = scalar_lea.vmem %s2, %s230
      %p232 = pneg %p103
      %p233 = pneg %p100
      %p234 = pneg %p131
      %p235 = pneg %p128
      %p236 = scmp.lt.s32.totalorder %s20, 1
      %s237 = scalar_select %p236, %s20, 1
      %p238 = scmp.lt.s32.totalorder %s21, 3
      %s239 = scalar_select %p238, %s21, 3
      %s240 = smul.addr %s237, 4
      %s241 = sadd.s32 %s239, %s240
      %s242 = smul.addr %s241, 4
      %s243 = scalar_lea.vmem %s3, %s242
      %p244 = pneg %p159
      %p245 = pneg %p156
      %p246 = scmp.lt.s32.totalorder %s20, 1
      %s247 = scalar_select %p246, %s20, 1
      %p248 = scmp.lt.s32.totalorder %s21, 3
      %s249 = scalar_select %p248, %s21, 3
      %s250 = smul.addr %s247, 4
      %s251 = sadd.s32 %s249, %s250
      %s252 = smul.addr %s251, 4
      %s253 = scalar_lea.vmem %s4, %s252
      %p254 = scmp.lt.s32.totalorder %s20, 1
      %s255 = scalar_select %p254, %s20, 1
      %p256 = scmp.lt.s32.totalorder %s21, 3
      %s257 = scalar_select %p256, %s21, 3
      %s258 = smul.addr %s257, 2
      %s259 = smul.addr %s255, 8
      %s260 = sadd.s32 %s258, %s259
      %s261 = smul.addr %s260, 4
      %s262 = scalar_lea.vmem %s0, %s261
      %p263 = scmp.lt.s32.totalorder %s21, 3
      %s264 = scalar_select %p263, %s21, 3
      %s265 = smul.addr %s264, 4
      %s266 = scalar_lea.vmem %s1, %s265
      %p267 = scmp.lt.s32.totalorder %s21, 3
      %s268 = scalar_select %p267, %s21, 3
      %s269 = smul.addr %s268, 4
      %s270 = scalar_lea.vmem %s2, %s269
      %p271 = scmp.lt.s32.totalorder %s20, 1
      %s272 = scalar_select %p271, %s20, 1
      %p273 = scmp.lt.s32.totalorder %s21, 3
      %s274 = scalar_select %p273, %s21, 3
      %s275 = smul.addr %s272, 4
      %s276 = sadd.s32 %s274, %s275
      %s277 = smul.addr %s276, 4
      %s278 = scalar_lea.vmem %s3, %s277
      %p279 = scmp.lt.s32.totalorder %s20, 1
      %s280 = scalar_select %p279, %s20, 1
      %p281 = scmp.lt.s32.totalorder %s21, 3
      %s282 = scalar_select %p281, %s21, 3
      %s283 = smul.addr %s280, 4
      %s284 = sadd.s32 %s282, %s283
      %s285 = smul.addr %s284, 4
      %s286 = scalar_lea.vmem %s4, %s285
      %v287 = vld [vmem:[%s262] sm:$0xff]
      %v289 = vcombine.high %v287, %v287
      %vm291 = vcmask 1043456
      %v292 = vsel %vm291, %v287, 0.0
      %v293 = vsel %vm291, %v289, 0.0
      %v294 = vadd.f32 %v292, %v293
      %295 = vadd.xlane.f32.xlu0 %v294
      %v296 = vpop.xlane.xlu0 %295
      %v297 = vrot.slane %v296, 4
      %v298 = vadd.f32 %v296, %v297
      %v299 = vrot.slane %v298, 2
      %v300 = vadd.f32 %v298, %v299
      %v301 = vrot.slane %v300, 1
      %v302 = vadd.f32 %v300, %v301
      %s303 = vtos %v302
      %v304 = vmul.f32 %v287, %v287
      %v306 = vcombine.high %v304, %v304
      %v308 = vsel %vm291, %v304, 0.0
      %v309 = vsel %vm291, %v306, 0.0
      %v310 = vadd.f32 %v308, %v309
      %311 = vadd.xlane.f32.xlu0 %v310
      %v312 = vpop.xlane.xlu0 %311
      %v313 = vrot.slane %v312, 4
      %v314 = vadd.f32 %v312, %v313
      %v315 = vrot.slane %v314, 2
      %v316 = vadd.f32 %v314, %v315
      %v317 = vrot.slane %v316, 1
      %v318 = vadd.f32 %v316, %v317
      %s319 = vtos %v318
      %v320 = vrcp.pop 1024.0
      %s321 = vtos %v320
      %s322 = smul.f32 %s303, %s321
      %v323 = vrcp.pop 1024.0
      %s324 = vtos %v323
      %s325 = smul.f32 %s319, %s324
      %s326 = smul.f32 %s322, %s322
      %s327 = ssub.f32 %s325, %s326
      %s328 = smax.f32 %s327, 0.0
      %s329 = sadd.f32 %s328, 1e-05
      %v330 = vstv %s329
      %v331 = vrsqrt.pop %v330
      %s332 = vtos %v331
      %v333 = vld [vmem:[%s266] sm:$0xf]
      %v334 = vld [vmem:[%s270] sm:$0xf]
      %v335 = vstv %s332
      %v336 = vmul.f32 %v333, %v335
      %vm337 = vcmask 3072
      %338 = vst.msk [vmem:[%s278] sm:$0xf] %vm337, %v336
      %s339 = smul.f32 %s322, %s332
      %v340 = vstv %s339
      %v341 = vmul.f32 %v333, %v340
      %v342 = vsub.f32 %v334, %v341
      %343 = vst.msk [vmem:[%s286] sm:$0xf] %vm337, %v342
      %p344 = scmp.lt.s32.totalorder %s20, 1
      %s345 = scalar_select %p344, %s20, 1
      %p346 = scmp.lt.s32.totalorder %s21, 3
      %s347 = scalar_select %p346, %s21, 3
      %s348 = smul.addr %s345, 4
      %s349 = sadd.s32 %s347, %s348
      %s350 = smul.addr %s349, 4
      %s351 = scalar_lea.vmem %s3, %s350
      %p352 = scmp.lt.s32.totalorder %s20, 1
      %s353 = scalar_select %p352, %s20, 1
      %p354 = scmp.lt.s32.totalorder %s21, 3
      %s355 = scalar_select %p354, %s21, 3
      %s356 = smul.addr %s353, 4
      %s357 = sadd.s32 %s355, %s356
      %s358 = smul.addr %s357, 4
      %s359 = scalar_lea.vmem %s4, %s358
      // Predicated region
      $region33: #{attention_block.3} parent=31 // pred_check
        %p360 = pneg %p128
      $region34: #{attention_block.3} parent=31 // pred_check_branch
        %362 = sbr.rel (%p360) target = $region36
      $region35: #{attention_block.3} parent=31 // pred_region
        _
      $region36: #{attention_block.3} parent=31 // pred_fallthru
        _
      // Predicated region
      $region37: #{attention_block.3} parent=31 // pred_check
        %p363 = pneg %p156
      $region38: #{attention_block.3} parent=31 // pred_check_branch
        %365 = sbr.rel (%p363) target = $region40
      $region39: #{attention_block.3} parent=31 // pred_region
        _
      $region40: #{attention_block.3} parent=31 // pred_fallthru
        _
    $region32: #{attention_block.3} parent=5 // pred_fallthru
      _
    %p366 = scmp.le.s32.totalorder 2, %s11
    // Predicated region
    $region41: #{attention_block.3} parent=5 // pred_check
      %p367 = pneg %p366
    $region42: #{attention_block.3} parent=5 // pred_check_branch
      %369 = sbr.rel (%p367) target = $region44
    $region43: #{attention_block.3} parent=5 // pred_region
      %s370 = ssub.s32 %s11, 2
      // Predicated region
      $region45: #{attention_block.3} parent=43 // pred_check
        %p371 = pneg %p134
      $region46: #{attention_block.3} parent=43 // pred_check_branch
        %373 = sbr.rel (%p371) target = $region48
      $region47: #{attention_block.3} parent=43 // pred_region
        %p374 = scmp.lt.s32.totalorder %s22, 1
        %s375 = scalar_select %p374, %s22, 1
        %p376 = scmp.lt.s32.totalorder %s23, 3
        %s377 = scalar_select %p376, %s23, 3
        %s378 = smul.addr %s375, 4
        %s379 = sadd.s32 %s377, %s378
        %s380 = smul.addr %s379, 4
        %s381 = scalar_lea.vmem %s3, %s380
      $region48: #{attention_block.3} parent=43 // pred_fallthru
        _
      // Predicated region
      $region49: #{attention_block.3} parent=43 // pred_check
        %p382 = pneg %p162
      $region50: #{attention_block.3} parent=43 // pred_check_branch
        %384 = sbr.rel (%p382) target = $region52
      $region51: #{attention_block.3} parent=43 // pred_region
        %p385 = scmp.lt.s32.totalorder %s22, 1
        %s386 = scalar_select %p385, %s22, 1
        %p387 = scmp.lt.s32.totalorder %s23, 3
        %s388 = scalar_select %p387, %s23, 3
        %s389 = smul.addr %s386, 4
        %s390 = sadd.s32 %s388, %s389
        %s391 = smul.addr %s390, 4
        %s392 = scalar_lea.vmem %s4, %s391
      $region52: #{attention_block.3} parent=43 // pred_fallthru
        _
    $region44: #{attention_block.3} parent=5 // pred_fallthru
      _
  $region6: #{attention_block.3} parent=0 // loop_footer
    %s15 = sadd.s32 1, %s11
  $region7: #{attention_block.3} parent=0 // loop_footer_branch
    %10 = sbr.rel target = $region3
  $region8: #{attention_block.3} parent=0 // loop_exit
    _

// kernel: attention_block.4
$region0: #{attention_block.4}
  #allocation0 [shape = 'u32[]', space=smem, size = 0x4, offset = 0x4, fixed_abs, tag = 'smem constant byte address 0x4 - core index']
  #allocation1 [shape = 'u32[144,128]{1,0:T(1,128)}', space=vmem, size = 0x12000, scoped, tag = 'internal scratch']
  %s0 = inlined_call_operand.vmem [shape: f32[2,16,256], index: 0, kind: input, shape index: {}]
  %s1 = inlined_call_operand.vmem [shape: f32[2,16,1], index: 1, kind: input, shape index: {}]
  %s2 = inlined_call_operand.vmem [shape: f32[2,16,1], index: 2, kind: input, shape index: {}]
  %s3 = inlined_call_operand.vmem [shape: bf16[48,16], index: 3, kind: input, shape index: {}]
  %s4 = inlined_call_operand.vmem [shape: f32[16,256], index: 4, kind: input, shape index: {}]
  %s5 = inlined_call_operand.vmem [shape: f32[16,256], index: 5, kind: input, shape index: {}]
  %s6 = inlined_call_operand.vmem [shape: f32[2,48,256], index: 6, kind: output, shape index: {}]
  %s7 = sld [smem:[#allocation0]]
  $region57: #{attention_block.4} parent=0
    _
  %s9 = ssub.s32 1, %s7
  %s10 = scalar_select 0, %s9, %s7
  loop: start=0, step=1, limit=4
  $region2: #{attention_block.4} parent=0 // loop_pre_header
    _
  $region3: #{attention_block.4} parent=0 // loop_header
    %s12 = sphi 0, %s16
    %p13 = scmp.ge.s32.totalorder %s12, 4
    %s19 = sphi 0, %s31
    %s20 = sphi 0, %s27
    %s21 = sphi 0, %s19
    %s22 = sphi 0, %s20
    %s23 = sphi 0, %s21
    %s24 = sphi 0, %s22
    %s36 = sphi 0, %s38
    %s39 = sphi 0, %s36
    %s40 = sphi 0, %s39
    %s56 = sphi 0, %s40
    %s62 = sphi 0, %s64
    %s65 = sphi 0, %s62
    %s66 = sphi 0, %s65
    %s82 = sphi 0, %s66
    %s88 = sphi 0, %s90
    %s91 = sphi 0, %s88
    %s92 = sphi 0, %s91
    %s108 = sphi 0, %s92
    %s112 = sphi 0, %s112
    %s114 = sphi 0, %s112
    %s115 = sphi 0, %s114
    %s129 = sphi 0, %s115
    %s135 = sphi 0, %s137
    %s138 = sphi 0, %s135
    %s139 = sphi 0, %s138
    %s155 = sphi 0, %s139
    %s161 = sphi 0, %s163
    %s164 = sphi 0, %s161
    %s165 = sphi 0, %s164
    %s181 = sphi 0, %s165
    %s189 = sphi 0, %s191
    %s192 = sphi 0, %s189
    %s193 = sphi 0, %s192
    %s209 = sphi 0, %s193
  $region4: #{attention_block.4} parent=0 // loop_header_branch
    %15 = sbr.rel (%p13) target = $region8
  $region5: #{attention_block.4} parent=0 // loop_body
    %s17 = ssub.s32 %s12, 1
    %s18 = ssub.s32 %s12, 2
    %s25 = sadd.s32 1, %s20
    %p26 = scmp.ge.s32.totalorder %s25, 1
    %s27 = scalar_select %p26, 0, %s25
    %s28 = sadd.s32 1, %s19
    %s29 = scalar_select %p26, %s28, %s19
    %p30 = scmp.ge.s32.totalorder %s29, 2
    %s31 = scalar_select %p30, 0, %s29
    %s32 = ssub.s32 %s19, %s31
    %s33 = ssub.s32 %s20, %s27
    %s34 = sor.u32 %s32, %s33
    %p35 = scmp.eq.s32.totalorder %s34, 0
    %s37 = sadd.s32 %s36, 1
    %s38 = scalar_select %p35, %s36, %s37
    %p41 = pneg %p35
    %p42 = scmp.eq.s32.totalorder %s12, 1
    %p43 = por %p41, %p42
    %p44 = scmp.ne.s32.totalorder %s36, %s39
    %p45 = scmp.eq.s32.totalorder %s12, 0
    %p46 = por %p44, %p45
    %p47 = scmp.ne.s32.totalorder %s36, %s39
    %p48 = scmp.eq.s32.totalorder %s17, 1
    %p49 = por %p47, %p48
    %p50 = scmp.ne.s32.totalorder %s39, %s40
    %p51 = scmp.eq.s32.totalorder %s17, 0
    %p52 = por %p50, %p51
    %p53 = scmp.ne.s32.totalorder %s39, %s40
    %p54 = scmp.eq.s32.totalorder %s18, 1
    %p55 = por %p53, %p54
    %p57 = scmp.ne.s32.totalorder %s40, %s56
    %p58 = scmp.eq.s32.totalorder %s18, 0
    %p59 = por %p57, %p58
    %s60 = ssub.s32 %s19, %s31
    %p61 = scmp.eq.s32.totalorder %s60, 0
    %s63 = sadd.s32 %s62, 1
    %s64 = scalar_select %p61, %s62, %s63
    %p67 = pneg %p61
    %p68 = scmp.eq.s32.totalorder %s12, 1
    %p69 = por %p67, %p68
    %p70 = scmp.ne.s32.totalorder %s62, %s65
    %p71 = scmp.eq.s32.totalorder %s12, 0
    %p72 = por %p70, %p71
    %p73 = scmp.ne.s32.totalorder %s62, %s65
    %p74 = scmp.eq.s32.totalorder %s17, 1
    %p75 = por %p73, %p74
    %p76 = scmp.ne.s32.totalorder %s65, %s66
    %p77 = scmp.eq.s32.totalorder %s17, 0
    %p78 = por %p76, %p77
    %p79 = scmp.ne.s32.totalorder %s65, %s66
    %p80 = scmp.eq.s32.totalorder %s18, 1
    %p81 = por %p79, %p80
    %p83 = scmp.ne.s32.totalorder %s66, %s82
    %p84 = scmp.eq.s32.totalorder %s18, 0
    %p85 = por %p83, %p84
    %s86 = ssub.s32 %s19, %s31
    %p87 = scmp.eq.s32.totalorder %s86, 0
    %s89 = sadd.s32 %s88, 1
    %s90 = scalar_select %p87, %s88, %s89
    %p93 = pneg %p87
    %p94 = scmp.eq.s32.totalorder %s12, 1
    %p95 = por %p93, %p94
    %p96 = scmp.ne.s32.totalorder %s88, %s91
    %p97 = scmp.eq.s32.totalorder %s12, 0
    %p98 = por %p96, %p97
    %p99 = scmp.ne.s32.totalorder %s88, %s91
    %p100 = scmp.eq.s32.totalorder %s17, 1
    %p101 = por %p99, %p100
    %p102 = scmp.ne.s32.totalorder %s91, %s92
    %p103 = scmp.eq.s32.totalorder %s17, 0
    %p104 = por %p102, %p103
    %p105 = scmp.ne.s32.totalorder %s91, %s92
    %p106 = scmp.eq.s32.totalorder %s18, 1
    %p107 = por %p105, %p106
    %p109 = scmp.ne.s32.totalorder %s92, %s108
    %p110 = scmp.eq.s32.totalorder %s18, 0
    %p111 = por %p109, %p110
    %s113 = sadd.s32 %s112, 1
    %p116 = scmp.eq.s32.totalorder %s12, 1
    %p117 = scmp.ne.s32.totalorder %s112, %s114
    %p118 = scmp.eq.s32.totalorder %s12, 0
    %p119 = por %p117, %p118
    %p120 = scmp.ne.s32.totalorder %s112, %s114
    %p121 = scmp.eq.s32.totalorder %s17, 1
    %p122 = por %p120, %p121
    %p123 = scmp.ne.s32.totalorder %s114, %s115
    %p124 = scmp.eq.s32.totalorder %s17, 0
    %p125 = por %p123, %p124
    %p126 = scmp.ne.s32.totalorder %s114, %s115
    %p127 = scmp.eq.s32.totalorder %s18, 1
    %p128 = por %p126, %p127
    %p130 = scmp.ne.s32.totalorder %s115, %s129
    %p131 = scmp.eq.s32.totalorder %s18, 0
    %p132 = por %p130, %p131
    %s133 = ssub.s32 %s20, %s27
    %p134 = scmp.eq.s32.totalorder %s133, 0
    %s136 = sadd.s32 %s135, 1
    %s137 = scalar_select %p134, %s135, %s136
    %p140 = pneg %p134
    %p141 = scmp.eq.s32.totalorder %s12, 1
    %p142 = por %p140, %p141
    %p143 = scmp.ne.s32.totalorder %s135, %s138
    %p144 = scmp.eq.s32.totalorder %s12, 0
    %p145 = por %p143, %p144
    %p146 = scmp.ne.s32.totalorder %s135, %s138
    %p147 = scmp.eq.s32.totalorder %s17, 1
    %p148 = por %p146, %p147
    %p149 = scmp.ne.s32.totalorder %s138, %s139
    %p150 = scmp.eq.s32.totalorder %s17, 0
    %p151 = por %p149, %p150
    %p152 = scmp.ne.s32.totalorder %s138, %s139
    %p153 = scmp.eq.s32.totalorder %s18, 1
    %p154 = por %p152, %p153
    %p156 = scmp.ne.s32.totalorder %s139, %s155
    %p157 = scmp.eq.s32.totalorder %s18, 0
    %p158 = por %p156, %p157
    %s159 = ssub.s32 %s20, %s27
    %p160 = scmp.eq.s32.totalorder %s159, 0
    %s162 = sadd.s32 %s161, 1
    %s163 = scalar_select %p160, %s161, %s162
    %p166 = pneg %p160
    %p167 = scmp.eq.s32.totalorder %s12, 1
    %p168 = por %p166, %p167
    %p169 = scmp.ne.s32.totalorder %s161, %s164
    %p170 = scmp.eq.s32.totalorder %s12, 0
    %p171 = por %p169, %p170
    %p172 = scmp.ne.s32.totalorder %s161, %s164
    %p173 = scmp.eq.s32.totalorder %s17, 1
    %p174 = por %p172, %p173
    %p175 = scmp.ne.s32.totalorder %s164, %s165
    %p176 = scmp.eq.s32.totalorder %s17, 0
    %p177 = por %p175, %p176
    %p178 = scmp.ne.s32.totalorder %s164, %s165
    %p179 = scmp.eq.s32.totalorder %s18, 1
    %p180 = por %p178, %p179
    %p182 = scmp.ne.s32.totalorder %s165, %s181
    %p183 = scmp.eq.s32.totalorder %s18, 0
    %p184 = por %p182, %p183
    %s185 = ssub.s32 %s19, %s31
    %s186 = ssub.s32 %s20, %s27
    %s187 = sor.u32 %s185, %s186
    %p188 = scmp.eq.s32.totalorder %s187, 0
    %s190 = sadd.s32 %s189, 1
    %s191 = scalar_select %p188, %s189, %s190
    %p194 = pneg %p188
    %p195 = scmp.eq.s32.totalorder %s12, 1
    %p196 = por %p194, %p195
    %p197 = scmp.ne.s32.totalorder %s189, %s192
    %p198 = scmp.eq.s32.totalorder %s12, 0
    %p199 = por %p197, %p198
    %p200 = scmp.ne.s32.totalorder %s189, %s192
    %p201 = scmp.eq.s32.totalorder %s17, 1
    %p202 = por %p200, %p201
    %p203 = scmp.ne.s32.totalorder %s192, %s193
    %p204 = scmp.eq.s32.totalorder %s17, 0
    %p205 = por %p203, %p204
    %p206 = scmp.ne.s32.totalorder %s192, %s193
    %p207 = scmp.eq.s32.totalorder %s18, 1
    %p208 = por %p206, %p207
    %p210 = scmp.ne.s32.totalorder %s193, %s209
    %p211 = scmp.eq.s32.totalorder %s18, 0
    %p212 = por %p210, %p211
    %p213 = scmp.le.s32.totalorder 1, %s12
    %p214 = scmp.lt.s32.totalorder %s12, 3
    %p215 = pnand %p213, %p214
    %p216 = pneg %p215
    // Predicated region
    $region9: #{attention_block.4} parent=5 // pred_check
      _
    $region10: #{attention_block.4} parent=5 // pred_check_branch
      %218 = sbr.rel (%p215) target = $region12
    $region11: #{attention_block.4} parent=5 // pred_region
      %s219 = ssub.s32 %s12, 1
      // Predicated region
      $region13: #{attention_block.4} parent=11 // pred_check
        %p220 = pneg %p125
      $region14: #{attention_block.4} parent=11 // pred_check_branch
        %222 = sbr.rel (%p220) target = $region16
      $region15: #{attention_block.4} parent=11 // pred_region
        _
      $region16: #{attention_block.4} parent=11 // pred_fallthru
        _
      // Predicated region
      $region17: #{attention_block.4} parent=11 // pred_check
        %p223 = pneg %p151
      $region18: #{attention_block.4} parent=11 // pred_check_branch
        %225 = sbr.rel (%p223) target = $region20
      $region19: #{attention_block.4} parent=11 // pred_region
        %s226 = smul.u32 2, %s22
        %p227 = scmp.lt.s32.totalorder %s226, 1
        %s228 = scalar_select %p227, %s226, 1
        %s229 = smul.addr %s228, 8
        %s230 = scalar_lea.vmem %s4, %s229
        %s231 = smul.u32 2, %s22
      $region20: #{attention_block.4} parent=11 // pred_fallthru
        _
      // Predicated region
      $region21: #{attention_block.4} parent=11 // pred_check
        %p232 = pneg %p177
      $region22: #{attention_block.4} parent=11 // pred_check_branch
        %234 = sbr.rel (%p232) target = $region24
      $region23: #{attention_block.4} parent=11 // pred_region
        %s235 = smul.u32 2, %s22
        %p236 = scmp.lt.s32.totalorder %s235, 1
        %s237 = scalar_select %p236, %s235, 1
        %s238 = smul.addr %s237, 8
        %s239 = scalar_lea.vmem %s5, %s238
        %s240 = smul.u32 2, %s22
      $region24: #{attention_block.4} parent=11 // pred_fallthru
        _
    $region12: #{attention_block.4} parent=5 // pred_fallthru
      _
    %p241 = scmp.lt.s32.totalorder %s12, 2
    // Predicated region
    $region25: #{attention_block.4} parent=5 // pred_check
      %p242 = pneg %p241
    $region26: #{attention_block.4} parent=5 // pred_check_branch
      %244 = sbr.rel (%p242) target = $region28
    $region27: #{attention_block.4} parent=5 // pred_region
      // Predicated region
      $region29: #{attention_block.4} parent=27 // pred_check
        %p245 = pneg %p46
      $region30: #{attention_block.4} parent=27 // pred_check_branch
        %247 = sbr.rel (%p245) target = $region32
      $region31: #{attention_block.4} parent=27 // pred_region
        %s248 = smul.u32 2, %s20
        %p249 = scmp.lt.s32.totalorder %s19, 1
        %s250 = scalar_select %p249, %s19, 1
        %p251 = scmp.lt.s32.totalorder %s248, 1
        %s252 = scalar_select %p251, %s248, 1
        %s253 = smul.addr %s250, 4
        %s254 = sadd.s32 %s252, %s253
        %s255 = smul.addr %s254, 8
        %s256 = scalar_lea.vmem %s0, %s255
        %s257 = smul.u32 2, %s20
      $region32: #{attention_block.4} parent=27 // pred_fallthru
        _
      // Predicated region
      $region33: #{attention_block.4} parent=27 // pred_check
        %p258 = pneg %p72
      $region34: #{attention_block.4} parent=27 // pred_check_branch
        %260 = sbr.rel (%p258) target = $region36
      $region35: #{attention_block.4} parent=27 // pred_region
        %p261 = scmp.lt.s32.totalorder %s19, 1
        %s262 = scalar_select %p261, %s19, 1
        %s263 = smul.addr %s262, 2
        %s264 = smul.addr %s263, 8
        %s265 = scalar_lea.vmem %s1, %s264
      $region36: #{attention_block.4} parent=27 // pred_fallthru
        _
      // Predicated region
      $region37: #{attention_block.4} parent=27 // pred_check
        %p266 = pneg %p98
      $region38: #{attention_block.4} parent=27 // pred_check_branch
        %268 = sbr.rel (%p266) target = $region40
      $region39: #{attention_block.4} parent=27 // pred_region
        %p269 = scmp.lt.s32.totalorder %s19, 1
        %s270 = scalar_select %p269, %s19, 1
        %s271 = smul.addr %s270, 2
        %s272 = smul.addr %s271, 8
        %s273 = scalar_lea.vmem %s2, %s272
      $region40: #{attention_block.4} parent=27 // pred_fallthru
        _
    $region28: #{attention_block.4} parent=5 // pred_fallthru
      _
    %p274 = scmp.le.s32.totalorder 1, %s12
    %p275 = scmp.lt.s32.totalorder %s12, 3
    %p276 = pnand %p274, %p275
    %p277 = pneg %p276
    // Predicated region
    $region41: #{attention_block.4} parent=5 // pred_check
      _
    $region42: #{attention_block.4} parent=5 // pred_check_branch
      %279 = sbr.rel (%p276) target = $region44
    $region43: #{attention_block.4} parent=5 // pred_region
      %s280 = ssub.s32 %s12, 1
      %s281 = smul.u32 2, %s22
      %p282 = scmp.lt.s32.totalorder %s21, 1
      %s283 = scalar_select %p282, %s21, 1
      %p284 = scmp.lt.s32.totalorder %s281, 1
      %s285 = scalar_select %p284, %s281, 1
      %s286 = smul.addr %s283, 4
      %s287 = sadd.s32 %s285, %s286
      %s288 = smul.addr %s287, 8
      %s289 = scalar_lea.vmem %s0, %s288
      %p290 = pneg %p52
      %p291 = pneg %p49
      %p292 = scmp.lt.s32.totalorder %s21, 1
      %s293 = scalar_select %p292, %s21, 1
      %s294 = smul.addr %s293, 2
      %s295 = smul.addr %s294, 8
      %s296 = scalar_lea.vmem %s1, %s295
      %p297 = pneg %p78
      %p298 = pneg %p75
      %p299 = scmp.lt.s32.totalorder %s21, 1
      %s300 = scalar_select %p299, %s21, 1
      %s301 = smul.addr %s300, 2
      %s302 = smul.addr %s301, 8
      %s303 = scalar_lea.vmem %s2, %s302
      %p304 = pneg %p104
      %p305 = pneg %p101
      %p306 = pneg %p125
      %p307 = pneg %p122
      %s308 = smul.u32 2, %s22
      %p309 = scmp.lt.s32.totalorder %s308, 1
      %s310 = scalar_select %p309, %s308, 1
      %s311 = smul.addr %s310, 8
      %s312 = scalar_lea.vmem %s4, %s311
      %p313 = pneg %p151
      %p314 = pneg %p148
      %s315 = smul.u32 2, %s22
      %p316 = scmp.lt.s32.totalorder %s315, 1
      %s317 = scalar_select %p316, %s315, 1
      %s318 = smul.addr %s317, 8
      %s319 = scalar_lea.vmem %s5, %s318
      %p320 = pneg %p177
      %p321 = pneg %p174
      %p322 = pneg %p205
      %p323 = pneg %p202
      %s324 = smul.u32 2, %s22
      %p325 = scmp.lt.s32.totalorder %s21, 1
      %s326 = scalar_select %p325, %s21, 1
      %p327 = scmp.lt.s32.totalorder %s324, 1
      %s328 = scalar_select %p327, %s324, 1
      %s329 = smul.addr %s326, 12
      %s330 = sadd.s32 %s328, %s329
      %s331 = smul.addr %s330, 8
      %s332 = scalar_lea.vmem %s6, %s331
      %s333 = smul.u32 2, %s22
      %p334 = scmp.lt.s32.totalorder %s21, 1
      %s335 = scalar_select %p334, %s21, 1
      %p336 = scmp.lt.s32.totalorder %s333, 1
      %s337 = scalar_select %p336, %s333, 1
      %s338 = smul.addr %s335, 4
      %s339 = sadd.s32 %s337, %s338
      %s340 = smul.addr %s339, 8
      %s341 = scalar_lea.vmem %s0, %s340
      %s342 = smul.u32 2, %s22
      %p343 = scmp.lt.s32.totalorder %s21, 1
      %s344 = scalar_select %p343, %s21, 1
      %s345 = smul.addr %s344, 2
      %s346 = smul.addr %s345, 8
      %s347 = scalar_lea.vmem %s1, %s346
      %p348 = scmp.lt.s32.totalorder %s21, 1
      %s349 = scalar_select %p348, %s21, 1
      %s350 = smul.addr %s349, 2
      %s351 = smul.addr %s350, 8
      %s352 = scalar_lea.vmem %s2, %s351
      %s353 = smul.u32 2, %s22
      %p354 = scmp.lt.s32.totalorder %s353, 1
      %s355 = scalar_select %p354, %s353, 1
      %s356 = smul.addr %s355, 8
      %s357 = scalar_lea.vmem %s4, %s356
      %s358 = smul.u32 2, %s22
      %s359 = smul.u32 2, %s22
      %p360 = scmp.lt.s32.totalorder %s359, 1
      %s361 = scalar_select %p360, %s359, 1
      %s362 = smul.addr %s361, 8
      %s363 = scalar_lea.vmem %s5, %s362
      %s364 = smul.u32 2, %s22
      %s365 = smul.u32 2, %s22
      %p366 = scmp.lt.s32.totalorder %s21, 1
      %s367 = scalar_select %p366, %s21, 1
      %p368 = scmp.lt.s32.totalorder %s365, 1
      %s369 = scalar_select %p368, %s365, 1
      %s370 = smul.addr %s367, 12
      %s371 = sadd.s32 %s369, %s370
      %s372 = smul.addr %s371, 8
      %s373 = scalar_lea.vmem %s6, %s372
      %s374 = smul.u32 2, %s22
      %v376 = vld [vmem:[%s341] sm:$0xff]
      %v377 = vld [vmem:[%s341 + $0x8] sm:$0xff]
      %v378 = vld [vmem:[%s341 + $0x10] sm:$0xff]
      %v379 = vld [vmem:[%s341 + $0x18] sm:$0xff]
      %v380 = vld [vmem:[%s347] sm:$0xff]
      %v381 = vld [vmem:[%s347 + $0x8] sm:$0xff]
      %383 = vset.pattern.permute.xlu0 0
      %384 = vperm.xlu0 %383, %v380
      %v385 = vpop.permute.xlu0 %384
      %388 = vset.pattern.permute.xlu0 0
      %389 = vperm.xlu0 %388, %v381
      %v390 = vpop.permute.xlu0 %389
      %v392 = vmul.f32 %v376, %v385
      %v393 = vmul.f32 %v377, %v385
      %v394 = vmul.f32 %v378, %v390
      %v395 = vmul.f32 %v379, %v390
      %v396 = vld [vmem:[%s352] sm:$0xff]
      %v397 = vld [vmem:[%s352 + $0x8] sm:$0xff]
      %399 = vset.pattern.permute.xlu0 0
      %400 = vperm.xlu0 %399, %v396
      %v401 = vpop.permute.xlu0 %400
      %404 = vset.pattern.permute.xlu0 0
      %405 = vperm.xlu0 %404, %v397
      %v406 = vpop.permute.xlu0 %405
      %v408 = vadd.f32 %v392, %v401
      %v409 = vadd.f32 %v393, %v401
      %v410 = vadd.f32 %v394, %v406
      %v411 = vadd.f32 %v395, %v406
      %v412 = vld [vmem:[%s3] sm:$0xf]
      %v413 = vld [vmem:[%s3 + $0x4] sm:$0xf]
      %v414 = vld [vmem:[%s3 + $0x8] sm:$0xf]
      %v415 = vld [vmem:[%s3 + $0xc] sm:$0xf]
      %v416 = vld [vmem:[%s3 + $0x10] sm:$0xf]
      %v417 = vld [vmem:[%s3 + $0x14] sm:$0xf]
      %v418 = vpack.c.bf16 %v410, %v408
      %v419 = vpack.c.bf16 %v411, %v409
      %v426 = vunpack.c.l.b16 %v412
      %v427 = vunpack.c.l.b16 %v413
      %v428 = vunpack.c.l.b16 %v414
      %v429 = vunpack.c.l.b16 %v415
      %v430 = vunpack.c.l.b16 %v416
      %v431 = vunpack.c.l.b16 %v417
      %v432 = vpack.c.b16 %v427, %v426
      %v433 = vpack.c.b16 %v429, %v428
      %v434 = vpack.c.b16 %v431, %v430
      %vm435 = vcmask 130048
      %v437 = vsel %vm435, %v432, 0
      %v440 = vsel %vm435, %v433, 0
      %v443 = vsel %vm435, %v434, 0
      %445 = vmatprep.subr.bf16.mxu0 0
      %446 = vmatpush1.bf16.msra.mxu0 0
      %447 = vmatprep.subr.bf16.mxu0 0
      %448 = vmatpush1.bf16.msra.mxu0 0
      %449 = vmatprep.subr.bf16.mxu0 0
      %450 = vmatpush1.bf16.msra.mxu0 0
      %451 = vmatprep.subr.bf16.mxu0 0
      %452 = vmatpush1.bf16.msra.mxu0 0
      %453 = vmatprep.subr.bf16.mxu0 0
      %454 = vmatpush1.bf16.msra.mxu0 0
      %455 = vmatprep.subr.bf16.mxu0 0
      %456 = vmatpush1.bf16.msra.mxu0 0
      %457 = vmatprep.subr.bf16.mxu0 0
      %458 = vmatpush1.bf16.msra.mxu0 0
      %459 = vmatprep.subr.bf16.mxu0 %v419
      %460 = vmatpush1.bf16.msra.mxu0 %v418
      %461 = vmatprep.subr.bf16.mxu0 0
      %462 = vmatpush2.bf16.msra.mxu0 0
      %463 = vmatprep.subr.bf16.mxu0 0
      %464 = vmatpush2.bf16.msra.mxu0 0
      %465 = vmatprep.subr.bf16.mxu0 0
      %466 = vmatpush2.bf16.msra.mxu0 0
      %467 = vmatprep.subr.bf16.mxu0 0
      %468 = vmatpush2.bf16.msra.mxu0 0
      %469 = vmatprep.subr.bf16.mxu0 0
      %470 = vmatpush2.bf16.msra.mxu0 0
      %471 = vmatprep.subr.bf16.mxu0 0
      %472 = vmatpush2.bf16.msra.mxu0 0
      %473 = vmatprep.subr.bf16.mxu0 0
      %474 = vmatpush2.bf16.msra.mxu0 0
      %475 = vmatprep.subr.bf16.mxu0 0
      %476 = vmatpush2.bf16.msra.mxu0 0
      %477 = vmatprep.mubr.bf16.mxu0 0
      %478 = vmatmul.mubr.bf16.gmra.mxu0 %v437
      %v479 = vpop.f32.mrf.mxu0
      %v480 = vadd.f32 0.0, %v479
      %v481 = vpop.f32.mrf.mxu0
      %v482 = vadd.f32 0.0, %v481
      %v483 = vpop.f32.mrf.mxu0
      %v484 = vadd.f32 0.0, %v483
      %v485 = vpop.f32.mrf.mxu0
      %v486 = vadd.f32 0.0, %v485
      %487 = vmatprep.mubr.bf16.mxu0 0
      %488 = vmatmul.mubr.bf16.gmra.mxu0 %v440
      %v489 = vpop.f32.mrf.mxu0
      %v490 = vadd.f32 0.0, %v489
      %v491 = vpop.f32.mrf.mxu0
      %v492 = vadd.f32 0.0, %v491
      %v493 = vpop.f32.mrf.mxu0
      %v494 = vadd.f32 0.0, %v493
      %v495 = vpop.f32.mrf.mxu0
      %v496 = vadd.f32 0.0, %v495
      %497 = vmatprep.mubr.bf16.mxu0 0
      %498 = vmatmul.mubr.bf16.gmra.mxu0 %v443
      %v499 = vpop.f32.mrf.mxu0
      %v500 = vadd.f32 0.0, %v499
      %v501 = vpop.f32.mrf.mxu0
      %v502 = vadd.f32 0.0, %v501
      %v503 = vpop.f32.mrf.mxu0
      %v504 = vadd.f32 0.0, %v503
      %v505 = vpop.f32.mrf.mxu0
      %v506 = vadd.f32 0.0, %v505
      %507 = vdwg.mxu0
      %v508 = vld [vmem:[%s357] sm:$0xff]
      %v509 = vld [vmem:[%s357 + $0x8] sm:$0xff]
      %v510 = vld [vmem:[%s357 + $0x10] sm:$0xff]
      %v511 = vld [vmem:[%s357 + $0x18] sm:$0xff]
      %v512 = vld [vmem:[%s363] sm:$0xff]
      %v513 = vld [vmem:[%s363 + $0x8] sm:$0xff]
      %v514 = vld [vmem:[%s363 + $0x10] sm:$0xff]
      %v515 = vld [vmem:[%s363 + $0x18] sm:$0xff]
      %v516 = vmul.f32 %v480, %v508
      %v517 = vmul.f32 %v482, %v509
      %v518 = vmul.f32 %v484, %v510
      %v519 = vmul.f32 %v486, %v511
      %v520 = vmul.f32 %v484, %v512
      %v521 = vmul.f32 %v486, %v513
      %v522 = vmul.f32 %v480, %v514
      %v523 = vmul.f32 %v482, %v515
      %v524 = vadd.f32 %v516, %v520
      %v525 = vadd.f32 %v517, %v521
      %v526 = vadd.f32 %v518, %v522
      %v527 = vadd.f32 %v519, %v523
      %528 = vst [vmem:[%s373] sm:$0xff] %v524
      %529 = vst [vmem:[%s373 + $0x8] sm:$0xff] %v525
      %530 = vst [vmem:[%s373 + $0x10] sm:$0xff] %v526
      %531 = vst [vmem:[%s373 + $0x18] sm:$0xff] %v527
      %v532 = vmul.f32 %v490, %v508
      %v533 = vmul.f32 %v492, %v509
      %v534 = vmul.f32 %v494, %v510
      %v535 = vmul.f32 %v496, %v511
      %v536 = vmul.f32 %v494, %v512
      %v537 = vmul.f32 %v496, %v513
      %v538 = vmul.f32 %v490, %v514
      %v539 = vmul.f32 %v492, %v515
      %v540 = vadd.f32 %v532, %v536
      %v541 = vadd.f32 %v533, %v537
      %v542 = vadd.f32 %v534, %v538
      %v543 = vadd.f32 %v535, %v539
      %544 = vst [vmem:[%s373 + $0x20] sm:$0xff] %v540
      %545 = vst [vmem:[%s373 + $0x28] sm:$0xff] %v541
      %546 = vst [vmem:[%s373 + $0x30] sm:$0xff] %v542
      %547 = vst [vmem:[%s373 + $0x38] sm:$0xff] %v543
      %548 = vst [vmem:[%s373 + $0x40] sm:$0xff] %v500
      %549 = vst [vmem:[%s373 + $0x48] sm:$0xff] %v502
      %550 = vst [vmem:[%s373 + $0x50] sm:$0xff] %v504
      %551 = vst [vmem:[%s373 + $0x58] sm:$0xff] %v506
      %s552 = smul.u32 2, %s22
      %p553 = scmp.lt.s32.totalorder %s21, 1
      %s554 = scalar_select %p553, %s21, 1
      %p555 = scmp.lt.s32.totalorder %s552, 1
      %s556 = scalar_select %p555, %s552, 1
      %s557 = smul.addr %s554, 12
      %s558 = sadd.s32 %s556, %s557
      %s559 = smul.addr %s558, 8
      %s560 = scalar_lea.vmem %s6, %s559
      // Predicated region
      $region45: #{attention_block.4} parent=43 // pred_check
        %p561 = pneg %p202
      $region46: #{attention_block.4} parent=43 // pred_check_branch
        %563 = sbr.rel (%p561) target = $region48
      $region47: #{attention_block.4} parent=43 // pred_region
        %s564 = smul.u32 2, %s22
      $region48: #{attention_block.4} parent=43 // pred_fallthru
        _
    $region44: #{attention_block.4} parent=5 // pred_fallthru
      _
    %p565 = scmp.le.s32.totalorder 2, %s12
    // Predicated region
    $region49: #{attention_block.4} parent=5 // pred_check
      %p566 = pneg %p565
    $region50: #{attention_block.4} parent=5 // pred_check_branch
      %568 = sbr.rel (%p566) target = $region52
    $region51: #{attention_block.4} parent=5 // pred_region
      %s569 = ssub.s32 %s12, 2
      // Predicated region
      $region53: #{attention_block.4} parent=51 // pred_check
        %p570 = pneg %p208
      $region54: #{attention_block.4} parent=51 // pred_check_branch
        %572 = sbr.rel (%p570) target = $region56
      $region55: #{attention_block.4} parent=51 // pred_region
        %s573 = smul.u32 2, %s24
        %p574 = scmp.lt.s32.totalorder %s23, 1
        %s575 = scalar_select %p574, %s23, 1
        %p576 = scmp.lt.s32.totalorder %s573, 1
        %s577 = scalar_select %p576, %s573, 1
        %s578 = smul.addr %s575, 12
        %s579 = sadd.s32 %s577, %s578
        %s580 = smul.addr %s579, 8
        %s581 = scalar_lea.vmem %s6, %s580
      $region56: #{attention_block.4} parent=51 // pred_fallthru
        _
    $region52: #{attention_block.4} parent=5 // pred_fallthru
      _
  $region6: #{attention_block.4} parent=0 // loop_footer
    %s16 = sadd.s32 1, %s12
  $region7: #{attention_block.4} parent=0 // loop_footer_branch
    %11 = sbr.rel target = $region3
  $region8: #{attention_block.4} parent=0 // loop_exit
    _

// kernel: attention_block.5
$region0: #{attention_block.5}
  #allocation0 [shape = 'u32[]', space=smem, size = 0x4, offset = 0x4, fixed_abs, tag = 'smem constant byte address 0x4 - core index']
  #allocation1 [shape = 'u32[144,128]{1,0:T(1,128)}', space=vmem, size = 0x12000, scoped, tag = 'internal scratch']
  #allocation2 [shape = 'f32[2,1,256]{2,1,0:T(1,128)}', space=vmem, size = 0x800, scoped, tag = 'scratch operand']
  #allocation3 [shape = 'f32[2,1,256]{2,1,0:T(1,128)}', space=vmem, size = 0x800, scoped, tag = 'scratch operand']
  #allocation4 [shape = 'f32[2,8,256]{2,1,0:T(8,128)}', space=vmem, size = 0x4000, scoped, tag = 'scratch operand']
  %s0 = inlined_call_operand.vmem [shape: f32[2,16,256], index: 0, kind: input, shape index: {}]
  %s1 = inlined_call_operand.vmem [shape: f32[2,16,1], index: 1, kind: input, shape index: {}]
  %s2 = inlined_call_operand.vmem [shape: f32[2,16,1], index: 2, kind: input, shape index: {}]
  %s3 = inlined_call_operand.vmem [shape: f32[2,48,256], index: 3, kind: input, shape index: {}, may-alias: {3,4,5}]
  %s4 = inlined_call_operand.vmem [shape: f32[2,48,256], index: 4, kind: input, shape index: {}, may-alias: {3,4,5}]
  %s5 = inlined_call_operand.vmem [shape: f32[2,48,256], index: 5, kind: input, shape index: {}, may-alias: {3,4,5}]
  %s6 = inlined_call_operand.vmem [shape: bf16[16,16], index: 6, kind: input, shape index: {}]
  %s7 = inlined_call_operand.vmem [shape: f32[16,1], index: 7, kind: input, shape index: {}]
  %s8 = inlined_call_operand.vmem [shape: f32[2,16,256], index: 8, kind: output, shape index: {}]
  %s9 = sld [smem:[#allocation0]]
  $region73: #{attention_block.5} parent=0
    _
  %s11 = ssub.s32 1, %s9
  %s12 = scalar_select 0, %s11, %s9
  loop: start=0, step=1, limit=4
  $region2: #{attention_block.5} parent=0 // loop_pre_header
    _
  $region3: #{attention_block.5} parent=0 // loop_header
    %s14 = sphi 0, %s18
    %p15 = scmp.ge.s32.totalorder %s14, 4
    %s21 = sphi 0, %s40
    %s22 = sphi 0, %s36
    %s23 = sphi 0, %s32
    %s24 = sphi 0, %s21
    %s25 = sphi 0, %s22
    %s26 = sphi 0, %s23
    %s27 = sphi 0, %s24
    %s28 = sphi 0, %s25
    %s29 = sphi 0, %s26
    %s45 = sphi 0, %s47
    %s48 = sphi 0, %s45
    %s49 = sphi 0, %s48
    %s65 = sphi 0, %s49
    %s71 = sphi 0, %s73
    %s74 = sphi 0, %s71
    %s75 = sphi 0, %s74
    %s91 = sphi 0, %s75
    %s97 = sphi 0, %s99
    %s100 = sphi 0, %s97
    %s101 = sphi 0, %s100
    %s117 = sphi 0, %s101
    %s125 = sphi 0, %s127
    %s128 = sphi 0, %s125
    %s129 = sphi 0, %s128
    %s145 = sphi 0, %s129
    %s153 = sphi 0, %s155
    %s156 = sphi 0, %s153
    %s157 = sphi 0, %s156
    %s173 = sphi 0, %s157
    %s181 = sphi 0, %s183
    %s184 = sphi 0, %s181
    %s185 = sphi 0, %s184
    %s201 = sphi 0, %s185
    %s205 = sphi 0, %s205
    %s207 = sphi 0, %s205
    %s208 = sphi 0, %s207
    %s222 = sphi 0, %s208
    %s226 = sphi 0, %s226
    %s228 = sphi 0, %s226
    %s229 = sphi 0, %s228
    %s243 = sphi 0, %s229
    %s251 = sphi 0, %s253
    %s254 = sphi 0, %s251
    %s255 = sphi 0, %s254
    %s271 = sphi 0, %s255
  $region4: #{attention_block.5} parent=0 // loop_header_branch
    %17 = sbr.rel (%p15) target = $region8
  $region5: #{attention_block.5} parent=0 // loop_body
    %s19 = ssub.s32 %s14, 1
    %s20 = ssub.s32 %s14, 2
    %s30 = sadd.s32 1, %s23
    %p31 = scmp.ge.s32.totalorder %s30, 1
    %s32 = scalar_select %p31, 0, %s30
    %s33 = sadd.s32 1, %s22
    %s34 = scalar_select %p31, %s33, %s22
    %p35 = scmp.ge.s32.totalorder %s34, 1
    %s36 = scalar_select %p35, 0, %s34
    %s37 = sadd.s32 1, %s21
    %s38 = scalar_select %p35, %s37, %s21
    %p39 = scmp.ge.s32.totalorder %s38, 2
    %s40 = scalar_select %p39, 0, %s38
    %s41 = ssub.s32 %s21, %s40
    %s42 = ssub.s32 %s22, %s36
    %s43 = sor.u32 %s41, %s42
    %p44 = scmp.eq.s32.totalorder %s43, 0
    %s46 = sadd.s32 %s45, 1
    %s47 = scalar_select %p44, %s45, %s46
    %p50 = pneg %p44
    %p51 = scmp.eq.s32.totalorder %s14, 1
    %p52 = por %p50, %p51
    %p53 = scmp.ne.s32.totalorder %s45, %s48
    %p54 = scmp.eq.s32.totalorder %s14, 0
    %p55 = por %p53, %p54
    %p56 = scmp.ne.s32.totalorder %s45, %s48
    %p57 = scmp.eq.s32.totalorder %s19, 1
    %p58 = por %p56, %p57
    %p59 = scmp.ne.s32.totalorder %s48, %s49
    %p60 = scmp.eq.s32.totalorder %s19, 0
    %p61 = por %p59, %p60
    %p62 = scmp.ne.s32.totalorder %s48, %s49
    %p63 = scmp.eq.s32.totalorder %s20, 1
    %p64 = por %p62, %p63
    %p66 = scmp.ne.s32.totalorder %s49, %s65
    %p67 = scmp.eq.s32.totalorder %s20, 0
    %p68 = por %p66, %p67
    %s69 = ssub.s32 %s21, %s40
    %p70 = scmp.eq.s32.totalorder %s69, 0
    %s72 = sadd.s32 %s71, 1
    %s73 = scalar_select %p70, %s71, %s72
    %p76 = pneg %p70
    %p77 = scmp.eq.s32.totalorder %s14, 1
    %p78 = por %p76, %p77
    %p79 = scmp.ne.s32.totalorder %s71, %s74
    %p80 = scmp.eq.s32.totalorder %s14, 0
    %p81 = por %p79, %p80
    %p82 = scmp.ne.s32.totalorder %s71, %s74
    %p83 = scmp.eq.s32.totalorder %s19, 1
    %p84 = por %p82, %p83
    %p85 = scmp.ne.s32.totalorder %s74, %s75
    %p86 = scmp.eq.s32.totalorder %s19, 0
    %p87 = por %p85, %p86
    %p88 = scmp.ne.s32.totalorder %s74, %s75
    %p89 = scmp.eq.s32.totalorder %s20, 1
    %p90 = por %p88, %p89
    %p92 = scmp.ne.s32.totalorder %s75, %s91
    %p93 = scmp.eq.s32.totalorder %s20, 0
    %p94 = por %p92, %p93
    %s95 = ssub.s32 %s21, %s40
    %p96 = scmp.eq.s32.totalorder %s95, 0
    %s98 = sadd.s32 %s97, 1
    %s99 = scalar_select %p96, %s97, %s98
    %p102 = pneg %p96
    %p103 = scmp.eq.s32.totalorder %s14, 1
    %p104 = por %p102, %p103
    %p105 = scmp.ne.s32.totalorder %s97, %s100
    %p106 = scmp.eq.s32.totalorder %s14, 0
    %p107 = por %p105, %p106
    %p108 = scmp.ne.s32.totalorder %s97, %s100
    %p109 = scmp.eq.s32.totalorder %s19, 1
    %p110 = por %p108, %p109
    %p111 = scmp.ne.s32.totalorder %s100, %s101
    %p112 = scmp.eq.s32.totalorder %s19, 0
    %p113 = por %p111, %p112
    %p114 = scmp.ne.s32.totalorder %s100, %s101
    %p115 = scmp.eq.s32.totalorder %s20, 1
    %p116 = por %p114, %p115
    %p118 = scmp.ne.s32.totalorder %s101, %s117
    %p119 = scmp.eq.s32.totalorder %s20, 0
    %p120 = por %p118, %p119
    %s121 = ssub.s32 %s21, %s40
    %s122 = ssub.s32 %s22, %s36
    %s123 = sor.u32 %s121, %s122
    %p124 = scmp.eq.s32.totalorder %s123, 0
    %s126 = sadd.s32 %s125, 1
    %s127 = scalar_select %p124, %s125, %s126
    %p130 = pneg %p124
    %p131 = scmp.eq.s32.totalorder %s14, 1
    %p132 = por %p130, %p131
    %p133 = scmp.ne.s32.totalorder %s125, %s128
    %p134 = scmp.eq.s32.totalorder %s14, 0
    %p135 = por %p133, %p134
    %p136 = scmp.ne.s32.totalorder %s125, %s128
    %p137 = scmp.eq.s32.totalorder %s19, 1
    %p138 = por %p136, %p137
    %p139 = scmp.ne.s32.totalorder %s128, %s129
    %p140 = scmp.eq.s32.totalorder %s19, 0
    %p141 = por %p139, %p140
    %p142 = scmp.ne.s32.totalorder %s128, %s129
    %p143 = scmp.eq.s32.totalorder %s20, 1
    %p144 = por %p142, %p143
    %p146 = scmp.ne.s32.totalorder %s129, %s145
    %p147 = scmp.eq.s32.totalorder %s20, 0
    %p148 = por %p146, %p147
    %s149 = ssub.s32 %s21, %s40
    %s150 = ssub.s32 %s23, %s32
    %s151 = sor.u32 %s149, %s150
    %p152 = scmp.eq.s32.totalorder %s151, 0
    %s154 = sadd.s32 %s153, 1
    %s155 = scalar_select %p152, %s153, %s154
    %p158 = pneg %p152
    %p159 = scmp.eq.s32.totalorder %s14, 1
    %p160 = por %p158, %p159
    %p161 = scmp.ne.s32.totalorder %s153, %s156
    %p162 = scmp.eq.s32.totalorder %s14, 0
    %p163 = por %p161, %p162
    %p164 = scmp.ne.s32.totalorder %s153, %s156
    %p165 = scmp.eq.s32.totalorder %s19, 1
    %p166 = por %p164, %p165
    %p167 = scmp.ne.s32.totalorder %s156, %s157
    %p168 = scmp.eq.s32.totalorder %s19, 0
    %p169 = por %p167, %p168
    %p170 = scmp.ne.s32.totalorder %s156, %s157
    %p171 = scmp.eq.s32.totalorder %s20, 1
    %p172 = por %p170, %p171
    %p174 = scmp.ne.s32.totalorder %s157, %s173
    %p175 = scmp.eq.s32.totalorder %s20, 0
    %p176 = por %p174, %p175
    %s177 = ssub.s32 %s21, %s40
    %s178 = ssub.s32 %s23, %s32
    %s179 = sor.u32 %s177, %s178
    %p180 = scmp.eq.s32.totalorder %s179, 0
    %s182 = sadd.s32 %s181, 1
    %s183 = scalar_select %p180, %s181, %s182
    %p186 = pneg %p180
    %p187 = scmp.eq.s32.totalorder %s14, 1
    %p188 = por %p186, %p187
    %p189 = scmp.ne.s32.totalorder %s181, %s184
    %p190 = scmp.eq.s32.totalorder %s14, 0
    %p191 = por %p189, %p190
    %p192 = scmp.ne.s32.totalorder %s181, %s184
    %p193 = scmp.eq.s32.totalorder %s19, 1
    %p194 = por %p192, %p193
    %p195 = scmp.ne.s32.totalorder %s184, %s185
    %p196 = scmp.eq.s32.totalorder %s19, 0
    %p197 = por %p195, %p196
    %p198 = scmp.ne.s32.totalorder %s184, %s185
    %p199 = scmp.eq.s32.totalorder %s20, 1
    %p200 = por %p198, %p199
    %p202 = scmp.ne.s32.totalorder %s185, %s201
    %p203 = scmp.eq.s32.totalorder %s20, 0
    %p204 = por %p202, %p203
    %s206 = sadd.s32 %s205, 1
    %p209 = scmp.eq.s32.totalorder %s14, 1
    %p210 = scmp.ne.s32.totalorder %s205, %s207
    %p211 = scmp.eq.s32.totalorder %s14, 0
    %p212 = por %p210, %p211
    %p213 = scmp.ne.s32.totalorder %s205, %s207
    %p214 = scmp.eq.s32.totalorder %s19, 1
    %p215 = por %p213, %p214
    %p216 = scmp.ne.s32.totalorder %s207, %s208
    %p217 = scmp.eq.s32.totalorder %s19, 0
    %p218 = por %p216, %p217
    %p219 = scmp.ne.s32.totalorder %s207, %s208
    %p220 = scmp.eq.s32.totalorder %s20, 1
    %p221 = por %p219, %p220
    %p223 = scmp.ne.s32.totalorder %s208, %s222
    %p224 = scmp.eq.s32.totalorder %s20, 0
    %p225 = por %p223, %p224
    %s227 = sadd.s32 %s226, 1
    %p230 = scmp.eq.s32.totalorder %s14, 1
    %p231 = scmp.ne.s32.totalorder %s226, %s228
    %p232 = scmp.eq.s32.totalorder %s14, 0
    %p233 = por %p231, %p232
    %p234 = scmp.ne.s32.totalorder %s226, %s228
    %p235 = scmp.eq.s32.totalorder %s19, 1
    %p236 = por %p234, %p235
    %p237 = scmp.ne.s32.totalorder %s228, %s229
    %p238 = scmp.eq.s32.totalorder %s19, 0
    %p239 = por %p237, %p238
    %p240 = scmp.ne.s32.totalorder %s228, %s229
    %p241 = scmp.eq.s32.totalorder %s20, 1
    %p242 = por %p240, %p241
    %p244 = scmp.ne.s32.totalorder %s229, %s243
    %p245 = scmp.eq.s32.totalorder %s20, 0
    %p246 = por %p244, %p245
    %s247 = ssub.s32 %s21, %s40
    %s248 = ssub.s32 %s22, %s36
    %s249 = sor.u32 %s247, %s248
    %p250 = scmp.eq.s32.totalorder %s249, 0
    %s252 = sadd.s32 %s251, 1
    %s253 = scalar_select %p250, %s251, %s252
    %p256 = pneg %p250
    %p257 = scmp.eq.s32.totalorder %s14, 1
    %p258 = por %p256, %p257
    %p259 = scmp.ne.s32.totalorder %s251, %s254
    %p260 = scmp.eq.s32.totalorder %s14, 0
    %p261 = por %p259, %p260
    %p262 = scmp.ne.s32.totalorder %s251, %s254
    %p263 = scmp.eq.s32.totalorder %s19, 1
    %p264 = por %p262, %p263
    %p265 = scmp.ne.s32.totalorder %s254, %s255
    %p266 = scmp.eq.s32.totalorder %s19, 0
    %p267 = por %p265, %p266
    %p268 = scmp.ne.s32.totalorder %s254, %s255
    %p269 = scmp.eq.s32.totalorder %s20, 1
    %p270 = por %p268, %p269
    %p272 = scmp.ne.s32.totalorder %s255, %s271
    %p273 = scmp.eq.s32.totalorder %s20, 0
    %p274 = por %p272, %p273
    %p275 = scmp.le.s32.totalorder 1, %s14
    %p276 = scmp.lt.s32.totalorder %s14, 3
    %p277 = pnand %p275, %p276
    %p278 = pneg %p277
    // Predicated region
    $region9: #{attention_block.5} parent=5 // pred_check
      _
    $region10: #{attention_block.5} parent=5 // pred_check_branch
      %280 = sbr.rel (%p277) target = $region12
    $region11: #{attention_block.5} parent=5 // pred_region
      %s281 = ssub.s32 %s14, 1
      // Predicated region
      $region13: #{attention_block.5} parent=11 // pred_check
        %p282 = pneg %p218
      $region14: #{attention_block.5} parent=11 // pred_check_branch
        %284 = sbr.rel (%p282) target = $region16
      $region15: #{attention_block.5} parent=11 // pred_region
        _
      $region16: #{attention_block.5} parent=11 // pred_fallthru
        _
      // Predicated region
      $region17: #{attention_block.5} parent=11 // pred_check
        %p285 = pneg %p239
      $region18: #{attention_block.5} parent=11 // pred_check_branch
        %287 = sbr.rel (%p285) target = $region20
      $region19: #{attention_block.5} parent=11 // pred_region
        _
      $region20: #{attention_block.5} parent=11 // pred_fallthru
        _
    $region12: #{attention_block.5} parent=5 // pred_fallthru
      _
    %p288 = scmp.lt.s32.totalorder %s14, 2
    // Predicated region
    $region21: #{attention_block.5} parent=5 // pred_check
      %p289 = pneg %p288
    $region22: #{attention_block.5} parent=5 // pred_check_branch
      %291 = sbr.rel (%p289) target = $region24
    $region23: #{attention_block.5} parent=5 // pred_region
      // Predicated region
      $region25: #{attention_block.5} parent=23 // pred_check
        %p292 = pneg %p55
      $region26: #{attention_block.5} parent=23 // pred_check_branch
        %294 = sbr.rel (%p292) target = $region28
      $region27: #{attention_block.5} parent=23 // pred_region
        %s295 = smul.u32 2, %s22
        %p296 = scmp.lt.s32.totalorder %s21, 1
        %s297 = scalar_select %p296, %s21, 1
        %p298 = scmp.lt.s32.totalorder %s295, 1
        %s299 = scalar_select %p298, %s295, 1
        %s300 = smul.addr %s297, 4
        %s301 = sadd.s32 %s299, %s300
        %s302 = smul.addr %s301, 8
        %s303 = scalar_lea.vmem %s0, %s302
        %s304 = smul.u32 2, %s22
      $region28: #{attention_block.5} parent=23 // pred_fallthru
        _
      // Predicated region
      $region29: #{attention_block.5} parent=23 // pred_check
        %p305 = pneg %p81
      $region30: #{attention_block.5} parent=23 // pred_check_branch
        %307 = sbr.rel (%p305) target = $region32
      $region31: #{attention_block.5} parent=23 // pred_region
        %p308 = scmp.lt.s32.totalorder %s21, 1
        %s309 = scalar_select %p308, %s21, 1
        %s310 = smul.addr %s309, 2
        %s311 = smul.addr %s310, 8
        %s312 = scalar_lea.vmem %s1, %s311
      $region32: #{attention_block.5} parent=23 // pred_fallthru
        _
      // Predicated region
      $region33: #{attention_block.5} parent=23 // pred_check
        %p313 = pneg %p107
      $region34: #{attention_block.5} parent=23 // pred_check_branch
        %315 = sbr.rel (%p313) target = $region36
      $region35: #{attention_block.5} parent=23 // pred_region
        %p316 = scmp.lt.s32.totalorder %s21, 1
        %s317 = scalar_select %p316, %s21, 1
        %s318 = smul.addr %s317, 2
        %s319 = smul.addr %s318, 8
        %s320 = scalar_lea.vmem %s2, %s319
      $region36: #{attention_block.5} parent=23 // pred_fallthru
        _
      // Predicated region
      $region37: #{attention_block.5} parent=23 // pred_check
        %p321 = pneg %p135
      $region38: #{attention_block.5} parent=23 // pred_check_branch
        %323 = sbr.rel (%p321) target = $region40
      $region39: #{attention_block.5} parent=23 // pred_region
        %s324 = smul.u32 2, %s22
        %p325 = scmp.lt.s32.totalorder %s21, 1
        %s326 = scalar_select %p325, %s21, 1
        %p327 = scmp.lt.s32.totalorder %s324, 1
        %s328 = scalar_select %p327, %s324, 1
        %s329 = smul.addr %s326, 12
        %s330 = sadd.s32 %s328, %s329
        %s331 = smul.addr %s330, 8
        %s332 = scalar_lea.vmem %s3, %s331
        %s333 = smul.u32 2, %s22
      $region40: #{attention_block.5} parent=23 // pred_fallthru
        _
      // Predicated region
      $region41: #{attention_block.5} parent=23 // pred_check
        %p334 = pneg %p163
      $region42: #{attention_block.5} parent=23 // pred_check_branch
        %336 = sbr.rel (%p334) target = $region44
      $region43: #{attention_block.5} parent=23 // pred_region
        %s337 = smul.u32 2, %s23
        %p338 = scmp.lt.s32.totalorder %s21, 1
        %s339 = scalar_select %p338, %s21, 1
        %p340 = scmp.lt.s32.totalorder %s337, 1
        %s341 = scalar_select %p340, %s337, 1
        %s342 = sadd.s32 %s341, 4
        %s343 = smul.addr %s339, 12
        %s344 = sadd.s32 %s342, %s343
        %s345 = smul.addr %s344, 8
        %s346 = scalar_lea.vmem %s4, %s345
        %s347 = smul.u32 2, %s23
      $region44: #{attention_block.5} parent=23 // pred_fallthru
        _
      // Predicated region
      $region45: #{attention_block.5} parent=23 // pred_check
        %p348 = pneg %p191
      $region46: #{attention_block.5} parent=23 // pred_check_branch
        %350 = sbr.rel (%p348) target = $region48
      $region47: #{attention_block.5} parent=23 // pred_region
        %s351 = smul.u32 2, %s23
        %p352 = scmp.lt.s32.totalorder %s21, 1
        %s353 = scalar_select %p352, %s21, 1
        %p354 = scmp.lt.s32.totalorder %s351, 1
        %s355 = scalar_select %p354, %s351, 1
        %s356 = sadd.s32 %s355, 8
        %s357 = smul.addr %s353, 12
        %s358 = sadd.s32 %s356, %s357
        %s359 = smul.addr %s358, 8
        %s360 = scalar_lea.vmem %s5, %s359
        %s361 = smul.u32 2, %s23
      $region48: #{attention_block.5} parent=23 // pred_fallthru
        _
    $region24: #{attention_block.5} parent=5 // pred_fallthru
      _
    %p362 = scmp.le.s32.totalorder 1, %s14
    %p363 = scmp.lt.s32.totalorder %s14, 3
    %p364 = pnand %p362, %p363
    %p365 = pneg %p364
    // Predicated region
    $region49: #{attention_block.5} parent=5 // pred_check
      _
    $region50: #{attention_block.5} parent=5 // pred_check_branch
      %367 = sbr.rel (%p364) target = $region52
    $region51: #{attention_block.5} parent=5 // pred_region
      %s368 = ssub.s32 %s14, 1
      %s369 = smul.u32 2, %s25
      %p370 = scmp.lt.s32.totalorder %s24, 1
      %s371 = scalar_select %p370, %s24, 1
      %p372 = scmp.lt.s32.totalorder %s369, 1
      %s373 = scalar_select %p372, %s369, 1
      %s374 = smul.addr %s371, 4
      %s375 = sadd.s32 %s373, %s374
      %s376 = smul.addr %s375, 8
      %s377 = scalar_lea.vmem %s0, %s376
      %p378 = pneg %p61
      %p379 = pneg %p58
      %p380 = scmp.lt.s32.totalorder %s24, 1
      %s381 = scalar_select %p380, %s24, 1
      %s382 = smul.addr %s381, 2
      %s383 = smul.addr %s382, 8
      %s384 = scalar_lea.vmem %s1, %s383
      %p385 = pneg %p87
      %p386 = pneg %p84
      %p387 = scmp.lt.s32.totalorder %s24, 1
      %s388 = scalar_select %p387, %s24, 1
      %s389 = smul.addr %s388, 2
      %s390 = smul.addr %s389, 8
      %s391 = scalar_lea.vmem %s2, %s390
      %p392 = pneg %p113
      %p393 = pneg %p110
      %s394 = smul.u32 2, %s25
      %p395 = scmp.lt.s32.totalorder %s24, 1
      %s396 = scalar_select %p395, %s24, 1
      %p397 = scmp.lt.s32.totalorder %s394, 1
      %s398 = scalar_select %p397, %s394, 1
      %s399 = smul.addr %s396, 12
      %s400 = sadd.s32 %s398, %s399
      %s401 = smul.addr %s400, 8
      %s402 = scalar_lea.vmem %s3, %s401
      %p403 = pneg %p141
      %p404 = pneg %p138
      %s405 = smul.u32 2, %s26
      %p406 = scmp.lt.s32.totalorder %s24, 1
      %s407 = scalar_select %p406, %s24, 1
      %p408 = scmp.lt.s32.totalorder %s405, 1
      %s409 = scalar_select %p408, %s405, 1
      %s410 = sadd.s32 %s409, 4
      %s411 = smul.addr %s407, 12
      %s412 = sadd.s32 %s410, %s411
      %s413 = smul.addr %s412, 8
      %s414 = scalar_lea.vmem %s4, %s413
      %p415 = pneg %p169
      %p416 = pneg %p166
      %s417 = smul.u32 2, %s26
      %p418 = scmp.lt.s32.totalorder %s24, 1
      %s419 = scalar_select %p418, %s24, 1
      %p420 = scmp.lt.s32.totalorder %s417, 1
      %s421 = scalar_select %p420, %s417, 1
      %s422 = sadd.s32 %s421, 8
      %s423 = smul.addr %s419, 12
      %s424 = sadd.s32 %s422, %s423
      %s425 = smul.addr %s424, 8
      %s426 = scalar_lea.vmem %s5, %s425
      %p427 = pneg %p197
      %p428 = pneg %p194
      %p429 = pneg %p218
      %p430 = pneg %p215
      %p431 = pneg %p239
      %p432 = pneg %p236
      %p433 = pneg %p267
      %p434 = pneg %p264
      %s435 = smul.u32 2, %s25
      %p436 = scmp.lt.s32.totalorder %s24, 1
      %s437 = scalar_select %p436, %s24, 1
      %p438 = scmp.lt.s32.totalorder %s435, 1
      %s439 = scalar_select %p438, %s435, 1
      %s440 = smul.addr %s437, 4
      %s441 = sadd.s32 %s439, %s440
      %s442 = smul.addr %s441, 8
      %s443 = scalar_lea.vmem %s8, %s442
      %s444 = smul.u32 2, %s25
      %p445 = scmp.lt.s32.totalorder %s24, 1
      %s446 = scalar_select %p445, %s24, 1
      %p447 = scmp.lt.s32.totalorder %s444, 1
      %s448 = scalar_select %p447, %s444, 1
      %s449 = smul.addr %s446, 4
      %s450 = sadd.s32 %s448, %s449
      %s451 = smul.addr %s450, 8
      %s452 = scalar_lea.vmem %s0, %s451
      %s453 = smul.u32 2, %s25
      %p454 = scmp.lt.s32.totalorder %s24, 1
      %s455 = scalar_select %p454, %s24, 1
      %s456 = smul.addr %s455, 2
      %s457 = smul.addr %s456, 8
      %s458 = scalar_lea.vmem %s1, %s457
      %p459 = scmp.lt.s32.totalorder %s24, 1
      %s460 = scalar_select %p459, %s24, 1
      %s461 = smul.addr %s460, 2
      %s462 = smul.addr %s461, 8
      %s463 = scalar_lea.vmem %s2, %s462
      %s464 = smul.u32 2, %s25
      %p465 = scmp.lt.s32.totalorder %s24, 1
      %s466 = scalar_select %p465, %s24, 1
      %p467 = scmp.lt.s32.totalorder %s464, 1
      %s468 = scalar_select %p467, %s464, 1
      %s469 = smul.addr %s466, 12
      %s470 = sadd.s32 %s468, %s469
      %s471 = smul.addr %s470, 8
      %s472 = scalar_lea.vmem %s3, %s471
      %s473 = smul.u32 2, %s25
      %s474 = smul.u32 2, %s26
      %p475 = scmp.lt.s32.totalorder %s24, 1
      %s476 = scalar_select %p475, %s24, 1
      %p477 = scmp.lt.s32.totalorder %s474, 1
      %s478 = scalar_select %p477, %s474, 1
      %s479 = sadd.s32 %s478, 4
      %s480 = smul.addr %s476, 12
      %s481 = sadd.s32 %s479, %s480
      %s482 = smul.addr %s481, 8
      %s483 = scalar_lea.vmem %s4, %s482
      %s484 = smul.u32 2, %s26
      %s485 = smul.u32 2, %s26
      %p486 = scmp.lt.s32.totalorder %s24, 1
      %s487 = scalar_select %p486, %s24, 1
      %p488 = scmp.lt.s32.totalorder %s485, 1
      %s489 = scalar_select %p488, %s485, 1
      %s490 = sadd.s32 %s489, 8
      %s491 = smul.addr %s487, 12
      %s492 = sadd.s32 %s490, %s491
      %s493 = smul.addr %s492, 8
      %s494 = scalar_lea.vmem %s5, %s493
      %s495 = smul.u32 2, %s26
      %s496 = smul.u32 2, %s25
      %p497 = scmp.lt.s32.totalorder %s24, 1
      %s498 = scalar_select %p497, %s24, 1
      %p499 = scmp.lt.s32.totalorder %s496, 1
      %s500 = scalar_select %p499, %s496, 1
      %s501 = smul.addr %s498, 4
      %s502 = sadd.s32 %s500, %s501
      %s503 = smul.addr %s502, 8
      %s504 = scalar_lea.vmem %s8, %s503
      %s505 = smul.u32 2, %s25
      %p507 = scmp.eq.s32.totalorder %s26, 0
      // Predicated region
      $region53: #{attention_block.5} parent=51 // pred_check
        %p508 = pneg %p507
      $region54: #{attention_block.5} parent=51 // pred_check_branch
        %510 = sbr.rel (%p508) target = $region56
      $region55: #{attention_block.5} parent=51 // pred_region
        %v511 = vlaneseq
        %vm512 = vcmp.ge.s32.totalorder %v511, 0
        %vm513 = vcmp.lt.s32.totalorder %v511, 256
        %vm514 = vmand %vm512, %vm513
        %515 = vst.msk [vmem:[#allocation2] sm:$0x3] %vm514, -inf
        %516 = vst.msk [vmem:[#allocation2 + $0x2] sm:$0x3] %vm514, -inf
        %517 = vst.msk [vmem:[#allocation3] sm:$0x3] %vm514, 0.0
        %518 = vst.msk [vmem:[#allocation3 + $0x2] sm:$0x3] %vm514, 0.0
        %519 = vst [vmem:[#allocation4] sm:$0xff] 0.0
        %520 = vst [vmem:[#allocation4 + $0x8] sm:$0xff] 0.0
        %521 = vst [vmem:[#allocation4 + $0x10] sm:$0xff] 0.0
        %522 = vst [vmem:[#allocation4 + $0x18] sm:$0xff] 0.0
      $region56: #{attention_block.5} parent=51 // pred_fallthru
        _
      %v523 = vld [vmem:[%s472] sm:$0xff]
      %v524 = vld [vmem:[%s472 + $0x8] sm:$0xff]
      %v525 = vld [vmem:[%s472 + $0x10] sm:$0xff]
      %v526 = vld [vmem:[%s472 + $0x18] sm:$0xff]
      %v527 = vpack.c.bf16 %v523, %v523
      %v528 = vpack.c.bf16 %v524, %v524
      %v529 = vpack.c.bf16 %v525, %v525
      %v530 = vpack.c.bf16 %v526, %v526
      %v531 = vld [vmem:[%s483] sm:$0xff]
      %v532 = vld [vmem:[%s483 + $0x8] sm:$0xff]
      %v533 = vld [vmem:[%s483 + $0x10] sm:$0xff]
      %v534 = vld [vmem:[%s483 + $0x18] sm:$0xff]
      %v535 = vpack.c.bf16 %v531, %v531
      %v536 = vpack.c.bf16 %v532, %v532
      %v537 = vpack.c.bf16 %v533, %v533
      %v538 = vpack.c.bf16 %v534, %v534
      %v539 = vld [vmem:[%s494] sm:$0xff]
      %v540 = vld [vmem:[%s494 + $0x8] sm:$0xff]
      %v541 = vld [vmem:[%s494 + $0x10] sm:$0xff]
      %v542 = vld [vmem:[%s494 + $0x18] sm:$0xff]
      %v543 = vpack.c.bf16 %v539, %v539
      %v544 = vpack.c.bf16 %v540, %v540
      %v545 = vpack.c.bf16 %v541, %v541
      %v546 = vpack.c.bf16 %v542, %v542
      %547 = vxpose.xlu0.c.b16.start [1/8] %v535, 128
      %548 = vxpose.xlu0.c.b16.cont [2/8] 0, 128
      %549 = vxpose.xlu0.c.b16.cont [3/8] 0, 128
      %550 = vxpose.xlu0.c.b16.cont [4/8] 0, 128
      %551 = vxpose.xlu0.c.b16.cont [5/8] 0, 128
      %552 = vxpose.xlu0.c.b16.cont [6/8] 0, 128
      %553 = vxpose.xlu0.c.b16.cont [7/8] 0, 128
      %554 = vxpose.xlu0.c.b16.end [8/8] 0, 128
      %v555 = vpop.trf.xlu0
      %v556 = vpop.trf.xlu0
      %v557 = vpop.trf.xlu0
      %v558 = vpop.trf.xlu0
      %v559 = vpop.trf.xlu0
      %v560 = vpop.trf.xlu0
      %v561 = vpop.trf.xlu0
      %v562 = vpop.trf.xlu0
      %563 = vxpose.xlu0.c.b16.start [1/8] %v536, 128
      %564 = vxpose.xlu0.c.b16.cont [2/8] 0, 128
      %565 = vxpose.xlu0.c.b16.cont [3/8] 0, 128
      %566 = vxpose.xlu0.c.b16.cont [4/8] 0, 128
      %567 = vxpose.xlu0.c.b16.cont [5/8] 0, 128
      %568 = vxpose.xlu0.c.b16.cont [6/8] 0, 128
      %569 = vxpose.xlu0.c.b16.cont [7/8] 0, 128
      %570 = vxpose.xlu0.c.b16.end [8/8] 0, 128
      %v571 = vpop.trf.xlu0
      %v572 = vpop.trf.xlu0
      %v573 = vpop.trf.xlu0
      %v574 = vpop.trf.xlu0
      %v575 = vpop.trf.xlu0
      %v576 = vpop.trf.xlu0
      %v577 = vpop.trf.xlu0
      %v578 = vpop.trf.xlu0
      %vm579 = vcmask 64512
      %v581 = vsel %vm579, %v555, 0
      %v584 = vsel %vm579, %v556, 0
      %v587 = vsel %vm579, %v557, 0
      %v590 = vsel %vm579, %v558, 0
      %v593 = vsel %vm579, %v559, 0
      %v596 = vsel %vm579, %v560, 0
      %v599 = vsel %vm579, %v561, 0
      %v602 = vsel %vm579, %v562, 0
      %v605 = vsel %vm579, %v571, 0
      %v608 = vsel %vm579, %v572, 0
      %v611 = vsel %vm579, %v573, 0
      %v614 = vsel %vm579, %v574, 0
      %v617 = vsel %vm579, %v575, 0
      %v620 = vsel %vm579, %v576, 0
      %v623 = vsel %vm579, %v577, 0
      %v626 = vsel %vm579, %v578, 0
      %vm628 = vcmask 1043456
      %v630 = vsel %vm628, %v527, 0
      %v633 = vsel %vm628, %v528, 0
      %635 = vmatprep.subr.bf16.mxu0 0
      %636 = vmatpush1.bf16.msra.mxu0 0
      %637 = vmatprep.subr.bf16.mxu0 0
      %638 = vmatpush1.bf16.msra.mxu0 0
      %639 = vmatprep.subr.bf16.mxu0 0
      %640 = vmatpush1.bf16.msra.mxu0 0
      %641 = vmatprep.subr.bf16.mxu0 0
      %642 = vmatpush1.bf16.msra.mxu0 0
      %643 = vmatprep.subr.bf16.mxu0 0
      %644 = vmatpush1.bf16.msra.mxu0 0
      %645 = vmatprep.subr.bf16.mxu0 0
      %646 = vmatpush1.bf16.msra.mxu0 0
      %647 = vmatprep.subr.bf16.mxu0 0
      %648 = vmatpush1.bf16.msra.mxu0 0
      %649 = vmatprep.subr.bf16.mxu0 %v633
      %650 = vmatpush1.bf16.msra.mxu0 %v630
      %651 = vmatprep.subr.bf16.mxu0 0
      %652 = vmatpush2.bf16.msra.mxu0 0
      %653 = vmatprep.subr.bf16.mxu0 0
      %654 = vmatpush2.bf16.msra.mxu0 0
      %655 = vmatprep.subr.bf16.mxu0 0
      %656 = vmatpush2.bf16.msra.mxu0 0
      %657 = vmatprep.subr.bf16.mxu0 0
      %658 = vmatpush2.bf16.msra.mxu0 0
      %659 = vmatprep.subr.bf16.mxu0 0
      %660 = vmatpush2.bf16.msra.mxu0 0
      %661 = vmatprep.subr.bf16.mxu0 0
      %662 = vmatpush2.bf16.msra.mxu0 0
      %663 = vmatprep.subr.bf16.mxu0 0
      %664 = vmatpush2.bf16.msra.mxu0 0
      %665 = vmatprep.subr.bf16.mxu0 0
      %666 = vmatpush2.bf16.msra.mxu0 0
      %667 = vmatprep.mubr.bf16.mxu0 0
      %668 = vmatmul.mubr.bf16.gmra.mxu0 %v581
      %v669 = vpop.f32.mrf.mxu0
      %v670 = vadd.f32 0.0, %v669
      %v671 = vpop.f32.mrf.mxu0
      %v672 = vadd.f32 0.0, %v671
      %v673 = vpop.f32.mrf.mxu0
      %v674 = vadd.f32 0.0, %v673
      %v675 = vpop.f32.mrf.mxu0
      %v676 = vadd.f32 0.0, %v675
      %677 = vmatprep.mubr.bf16.mxu0 0
      %678 = vmatmul.mubr.bf16.gmra.mxu0 %v584
      %v679 = vpop.f32.mrf.mxu0
      %v680 = vadd.f32 0.0, %v679
      %v681 = vpop.f32.mrf.mxu0
      %v682 = vadd.f32 0.0, %v681
      %v683 = vpop.f32.mrf.mxu0
      %v684 = vadd.f32 0.0, %v683
      %v685 = vpop.f32.mrf.mxu0
      %v686 = vadd.f32 0.0, %v685
      %687 = vmatprep.mubr.bf16.mxu0 0
      %688 = vmatmul.mubr.bf16.gmra.mxu0 %v587
      %v689 = vpop.f32.mrf.mxu0
      %v690 = vadd.f32 0.0, %v689
      %v691 = vpop.f32.mrf.mxu0
      %v692 = vadd.f32 0.0, %v691
      %v693 = vpop.f32.mrf.mxu0
      %v694 = vadd.f32 0.0, %v693
      %v695 = vpop.f32.mrf.mxu0
      %v696 = vadd.f32 0.0, %v695
      %697 = vmatprep.mubr.bf16.mxu0 0
      %698 = vmatmul.mubr.bf16.gmra.mxu0 %v590
      %v699 = vpop.f32.mrf.mxu0
      %v700 = vadd.f32 0.0, %v699
      %v701 = vpop.f32.mrf.mxu0
      %v702 = vadd.f32 0.0, %v701
      %v703 = vpop.f32.mrf.mxu0
      %v704 = vadd.f32 0.0, %v703
      %v705 = vpop.f32.mrf.mxu0
      %v706 = vadd.f32 0.0, %v705
      %707 = vmatprep.mubr.bf16.mxu0 0
      %708 = vmatmul.mubr.bf16.gmra.mxu0 %v593
      %v709 = vpop.f32.mrf.mxu0
      %v710 = vadd.f32 0.0, %v709
      %v711 = vpop.f32.mrf.mxu0
      %v712 = vadd.f32 0.0, %v711
      %v713 = vpop.f32.mrf.mxu0
      %v714 = vadd.f32 0.0, %v713
      %v715 = vpop.f32.mrf.mxu0
      %v716 = vadd.f32 0.0, %v715
      %717 = vmatprep.mubr.bf16.mxu0 0
      %718 = vmatmul.mubr.bf16.gmra.mxu0 %v596
      %v719 = vpop.f32.mrf.mxu0
      %v720 = vadd.f32 0.0, %v719
      %v721 = vpop.f32.mrf.mxu0
      %v722 = vadd.f32 0.0, %v721
      %v723 = vpop.f32.mrf.mxu0
      %v724 = vadd.f32 0.0, %v723
      %v725 = vpop.f32.mrf.mxu0
      %v726 = vadd.f32 0.0, %v725
      %727 = vmatprep.mubr.bf16.mxu0 0
      %728 = vmatmul.mubr.bf16.gmra.mxu0 %v599
      %v729 = vpop.f32.mrf.mxu0
      %v730 = vadd.f32 0.0, %v729
      %v731 = vpop.f32.mrf.mxu0
      %v732 = vadd.f32 0.0, %v731
      %v733 = vpop.f32.mrf.mxu0
      %v734 = vadd.f32 0.0, %v733
      %v735 = vpop.f32.mrf.mxu0
      %v736 = vadd.f32 0.0, %v735
      %737 = vmatprep.mubr.bf16.mxu0 0
      %738 = vmatmul.mubr.bf16.gmra.mxu0 %v602
      %v739 = vpop.f32.mrf.mxu0
      %v740 = vadd.f32 0.0, %v739
      %v741 = vpop.f32.mrf.mxu0
      %v742 = vadd.f32 0.0, %v741
      %v743 = vpop.f32.mrf.mxu0
      %v744 = vadd.f32 0.0, %v743
      %v745 = vpop.f32.mrf.mxu0
      %v746 = vadd.f32 0.0, %v745
      %747 = vmatprep.mubr.bf16.mxu0 0
      %748 = vmatmul.mubr.bf16.gmra.mxu0 %v605
      %v749 = vpop.f32.mrf.mxu0
      %v750 = vadd.f32 0.0, %v749
      %v751 = vpop.f32.mrf.mxu0
      %v752 = vadd.f32 0.0, %v751
      %v753 = vpop.f32.mrf.mxu0
      %v754 = vadd.f32 0.0, %v753
      %v755 = vpop.f32.mrf.mxu0
      %v756 = vadd.f32 0.0, %v755
      %757 = vmatprep.mubr.bf16.mxu0 0
      %758 = vmatmul.mubr.bf16.gmra.mxu0 %v608
      %v759 = vpop.f32.mrf.mxu0
      %v760 = vadd.f32 0.0, %v759
      %v761 = vpop.f32.mrf.mxu0
      %v762 = vadd.f32 0.0, %v761
      %v763 = vpop.f32.mrf.mxu0
      %v764 = vadd.f32 0.0, %v763
      %v765 = vpop.f32.mrf.mxu0
      %v766 = vadd.f32 0.0, %v765
      %767 = vmatprep.mubr.bf16.mxu0 0
      %768 = vmatmul.mubr.bf16.gmra.mxu0 %v611
      %v769 = vpop.f32.mrf.mxu0
      %v770 = vadd.f32 0.0, %v769
      %v771 = vpop.f32.mrf.mxu0
      %v772 = vadd.f32 0.0, %v771
      %v773 = vpop.f32.mrf.mxu0
      %v774 = vadd.f32 0.0, %v773
      %v775 = vpop.f32.mrf.mxu0
      %v776 = vadd.f32 0.0, %v775
      %777 = vmatprep.mubr.bf16.mxu0 0
      %778 = vmatmul.mubr.bf16.gmra.mxu0 %v614
      %v779 = vpop.f32.mrf.mxu0
      %v780 = vadd.f32 0.0, %v779
      %v781 = vpop.f32.mrf.mxu0
      %v782 = vadd.f32 0.0, %v781
      %v783 = vpop.f32.mrf.mxu0
      %v784 = vadd.f32 0.0, %v783
      %v785 = vpop.f32.mrf.mxu0
      %v786 = vadd.f32 0.0, %v785
      %787 = vmatprep.mubr.bf16.mxu0 0
      %788 = vmatmul.mubr.bf16.gmra.mxu0 %v617
      %v789 = vpop.f32.mrf.mxu0
      %v790 = vadd.f32 0.0, %v789
      %v791 = vpop.f32.mrf.mxu0
      %v792 = vadd.f32 0.0, %v791
      %v793 = vpop.f32.mrf.mxu0
      %v794 = vadd.f32 0.0, %v793
      %v795 = vpop.f32.mrf.mxu0
      %v796 = vadd.f32 0.0, %v795
      %797 = vmatprep.mubr.bf16.mxu0 0
      %798 = vmatmul.mubr.bf16.gmra.mxu0 %v620
      %v799 = vpop.f32.mrf.mxu0
      %v800 = vadd.f32 0.0, %v799
      %v801 = vpop.f32.mrf.mxu0
      %v802 = vadd.f32 0.0, %v801
      %v803 = vpop.f32.mrf.mxu0
      %v804 = vadd.f32 0.0, %v803
      %v805 = vpop.f32.mrf.mxu0
      %v806 = vadd.f32 0.0, %v805
      %807 = vmatprep.mubr.bf16.mxu0 0
      %808 = vmatmul.mubr.bf16.gmra.mxu0 %v623
      %v809 = vpop.f32.mrf.mxu0
      %v810 = vadd.f32 0.0, %v809
      %v811 = vpop.f32.mrf.mxu0
      %v812 = vadd.f32 0.0, %v811
      %v813 = vpop.f32.mrf.mxu0
      %v814 = vadd.f32 0.0, %v813
      %v815 = vpop.f32.mrf.mxu0
      %v816 = vadd.f32 0.0, %v815
      %817 = vmatprep.mubr.bf16.mxu0 0
      %818 = vmatmul.mubr.bf16.gmra.mxu0 %v626
      %v819 = vpop.f32.mrf.mxu0
      %v820 = vadd.f32 0.0, %v819
      %v821 = vpop.f32.mrf.mxu0
      %v822 = vadd.f32 0.0, %v821
      %v823 = vpop.f32.mrf.mxu0
      %v824 = vadd.f32 0.0, %v823
      %v825 = vpop.f32.mrf.mxu0
      %v826 = vadd.f32 0.0, %v825
      %827 = vdwg.mxu0
      %828 = vxpose.xlu0.c.b16.start [1/8] %v537, 128
      %829 = vxpose.xlu0.c.b16.cont [2/8] 0, 128
      %830 = vxpose.xlu0.c.b16.cont [3/8] 0, 128
      %831 = vxpose.xlu0.c.b16.cont [4/8] 0, 128
      %832 = vxpose.xlu0.c.b16.cont [5/8] 0, 128
      %833 = vxpose.xlu0.c.b16.cont [6/8] 0, 128
      %834 = vxpose.xlu0.c.b16.cont [7/8] 0, 128
      %835 = vxpose.xlu0.c.b16.end [8/8] 0, 128
      %v836 = vpop.trf.xlu0
      %v837 = vpop.trf.xlu0
      %v838 = vpop.trf.xlu0
      %v839 = vpop.trf.xlu0
      %v840 = vpop.trf.xlu0
      %v841 = vpop.trf.xlu0
      %v842 = vpop.trf.xlu0
      %v843 = vpop.trf.xlu0
      %844 = vxpose.xlu0.c.b16.start [1/8] %v538, 128
      %845 = vxpose.xlu0.c.b16.cont [2/8] 0, 128
      %846 = vxpose.xlu0.c.b16.cont [3/8] 0, 128
      %847 = vxpose.xlu0.c.b16.cont [4/8] 0, 128
      %848 = vxpose.xlu0.c.b16.cont [5/8] 0, 128
      %849 = vxpose.xlu0.c.b16.cont [6/8] 0, 128
      %850 = vxpose.xlu0.c.b16.cont [7/8] 0, 128
      %851 = vxpose.xlu0.c.b16.end [8/8] 0, 128
      %v852 = vpop.trf.xlu0
      %v853 = vpop.trf.xlu0
      %v854 = vpop.trf.xlu0
      %v855 = vpop.trf.xlu0
      %v856 = vpop.trf.xlu0
      %v857 = vpop.trf.xlu0
      %v858 = vpop.trf.xlu0
      %v859 = vpop.trf.xlu0
      %v861 = vsel %vm579, %v836, 0
      %v864 = vsel %vm579, %v837, 0
      %v867 = vsel %vm579, %v838, 0
      %v870 = vsel %vm579, %v839, 0
      %v873 = vsel %vm579, %v840, 0
      %v876 = vsel %vm579, %v841, 0
      %v879 = vsel %vm579, %v842, 0
      %v882 = vsel %vm579, %v843, 0
      %v885 = vsel %vm579, %v852, 0
      %v888 = vsel %vm579, %v853, 0
      %v891 = vsel %vm579, %v854, 0
      %v894 = vsel %vm579, %v855, 0
      %v897 = vsel %vm579, %v856, 0
      %v900 = vsel %vm579, %v857, 0
      %v903 = vsel %vm579, %v858, 0
      %v906 = vsel %vm579, %v859, 0
      %v909 = vsel %vm628, %v529, 0
      %v912 = vsel %vm628, %v530, 0
      %914 = vmatprep.subr.bf16.mxu0 0
      %915 = vmatpush1.bf16.msra.mxu0 0
      %916 = vmatprep.subr.bf16.mxu0 0
      %917 = vmatpush1.bf16.msra.mxu0 0
      %918 = vmatprep.subr.bf16.mxu0 0
      %919 = vmatpush1.bf16.msra.mxu0 0
      %920 = vmatprep.subr.bf16.mxu0 0
      %921 = vmatpush1.bf16.msra.mxu0 0
      %922 = vmatprep.subr.bf16.mxu0 0
      %923 = vmatpush1.bf16.msra.mxu0 0
      %924 = vmatprep.subr.bf16.mxu0 0
      %925 = vmatpush1.bf16.msra.mxu0 0
      %926 = vmatprep.subr.bf16.mxu0 0
      %927 = vmatpush1.bf16.msra.mxu0 0
      %928 = vmatprep.subr.bf16.mxu0 %v912
      %929 = vmatpush1.bf16.msra.mxu0 %v909
      %930 = vmatprep.subr.bf16.mxu0 0
      %931 = vmatpush2.bf16.msra.mxu0 0
      %932 = vmatprep.subr.bf16.mxu0 0
      %933 = vmatpush2.bf16.msra.mxu0 0
      %934 = vmatprep.subr.bf16.mxu0 0
      %935 = vmatpush2.bf16.msra.mxu0 0
      %936 = vmatprep.subr.bf16.mxu0 0
      %937 = vmatpush2.bf16.msra.mxu0 0
      %938 = vmatprep.subr.bf16.mxu0 0
      %939 = vmatpush2.bf16.msra.mxu0 0
      %940 = vmatprep.subr.bf16.mxu0 0
      %941 = vmatpush2.bf16.msra.mxu0 0
      %942 = vmatprep.subr.bf16.mxu0 0
      %943 = vmatpush2.bf16.msra.mxu0 0
      %944 = vmatprep.subr.bf16.mxu0 0
      %945 = vmatpush2.bf16.msra.mxu0 0
      %946 = vmatprep.mubr.bf16.mxu0 0
      %947 = vmatmul.mubr.bf16.gmra.mxu0 %v861
      %v948 = vpop.f32.mrf.mxu0
      %v949 = vadd.f32 0.0, %v948
      %v950 = vpop.f32.mrf.mxu0
      %v951 = vadd.f32 0.0, %v950
      %v952 = vpop.f32.mrf.mxu0
      %v953 = vadd.f32 0.0, %v952
      %v954 = vpop.f32.mrf.mxu0
      %v955 = vadd.f32 0.0, %v954
      %956 = vmatprep.mubr.bf16.mxu0 0
      %957 = vmatmul.mubr.bf16.gmra.mxu0 %v864
      %v958 = vpop.f32.mrf.mxu0
      %v959 = vadd.f32 0.0, %v958
      %v960 = vpop.f32.mrf.mxu0
      %v961 = vadd.f32 0.0, %v960
      %v962 = vpop.f32.mrf.mxu0
      %v963 = vadd.f32 0.0, %v962
      %v964 = vpop.f32.mrf.mxu0
      %v965 = vadd.f32 0.0, %v964
      %966 = vmatprep.mubr.bf16.mxu0 0
      %967 = vmatmul.mubr.bf16.gmra.mxu0 %v867
      %v968 = vpop.f32.mrf.mxu0
      %v969 = vadd.f32 0.0, %v968
      %v970 = vpop.f32.mrf.mxu0
      %v971 = vadd.f32 0.0, %v970
      %v972 = vpop.f32.mrf.mxu0
      %v973 = vadd.f32 0.0, %v972
      %v974 = vpop.f32.mrf.mxu0
      %v975 = vadd.f32 0.0, %v974
      %976 = vmatprep.mubr.bf16.mxu0 0
      %977 = vmatmul.mubr.bf16.gmra.mxu0 %v870
      %v978 = vpop.f32.mrf.mxu0
      %v979 = vadd.f32 0.0, %v978
      %v980 = vpop.f32.mrf.mxu0
      %v981 = vadd.f32 0.0, %v980
      %v982 = vpop.f32.mrf.mxu0
      %v983 = vadd.f32 0.0, %v982
      %v984 = vpop.f32.mrf.mxu0
      %v985 = vadd.f32 0.0, %v984
      %986 = vmatprep.mubr.bf16.mxu0 0
      %987 = vmatmul.mubr.bf16.gmra.mxu0 %v873
      %v988 = vpop.f32.mrf.mxu0
      %v989 = vadd.f32 0.0, %v988
      %v990 = vpop.f32.mrf.mxu0
      %v991 = vadd.f32 0.0, %v990
      %v992 = vpop.f32.mrf.mxu0
      %v993 = vadd.f32 0.0, %v992
      %v994 = vpop.f32.mrf.mxu0
      %v995 = vadd.f32 0.0, %v994
      %996 = vmatprep.mubr.bf16.mxu0 0
      %997 = vmatmul.mubr.bf16.gmra.mxu0 %v876
      %v998 = vpop.f32.mrf.mxu0
      %v999 = vadd.f32 0.0, %v998
      %v1000 = vpop.f32.mrf.mxu0
      %v1001 = vadd.f32 0.0, %v1000
      %v1002 = vpop.f32.mrf.mxu0
      %v1003 = vadd.f32 0.0, %v1002
      %v1004 = vpop.f32.mrf.mxu0
      %v1005 = vadd.f32 0.0, %v1004
      %1006 = vmatprep.mubr.bf16.mxu0 0
      %1007 = vmatmul.mubr.bf16.gmra.mxu0 %v879
      %v1008 = vpop.f32.mrf.mxu0
      %v1009 = vadd.f32 0.0, %v1008
      %v1010 = vpop.f32.mrf.mxu0
      %v1011 = vadd.f32 0.0, %v1010
      %v1012 = vpop.f32.mrf.mxu0
      %v1013 = vadd.f32 0.0, %v1012
      %v1014 = vpop.f32.mrf.mxu0
      %v1015 = vadd.f32 0.0, %v1014
      %1016 = vmatprep.mubr.bf16.mxu0 0
      %1017 = vmatmul.mubr.bf16.gmra.mxu0 %v882
      %v1018 = vpop.f32.mrf.mxu0
      %v1019 = vadd.f32 0.0, %v1018
      %v1020 = vpop.f32.mrf.mxu0
      %v1021 = vadd.f32 0.0, %v1020
      %v1022 = vpop.f32.mrf.mxu0
      %v1023 = vadd.f32 0.0, %v1022
      %v1024 = vpop.f32.mrf.mxu0
      %v1025 = vadd.f32 0.0, %v1024
      %1026 = vmatprep.mubr.bf16.mxu0 0
      %1027 = vmatmul.mubr.bf16.gmra.mxu0 %v885
      %v1028 = vpop.f32.mrf.mxu0
      %v1029 = vadd.f32 0.0, %v1028
      %v1030 = vpop.f32.mrf.mxu0
      %v1031 = vadd.f32 0.0, %v1030
      %v1032 = vpop.f32.mrf.mxu0
      %v1033 = vadd.f32 0.0, %v1032
      %v1034 = vpop.f32.mrf.mxu0
      %v1035 = vadd.f32 0.0, %v1034
      %1036 = vmatprep.mubr.bf16.mxu0 0
      %1037 = vmatmul.mubr.bf16.gmra.mxu0 %v888
      %v1038 = vpop.f32.mrf.mxu0
      %v1039 = vadd.f32 0.0, %v1038
      %v1040 = vpop.f32.mrf.mxu0
      %v1041 = vadd.f32 0.0, %v1040
      %v1042 = vpop.f32.mrf.mxu0
      %v1043 = vadd.f32 0.0, %v1042
      %v1044 = vpop.f32.mrf.mxu0
      %v1045 = vadd.f32 0.0, %v1044
      %1046 = vmatprep.mubr.bf16.mxu0 0
      %1047 = vmatmul.mubr.bf16.gmra.mxu0 %v891
      %v1048 = vpop.f32.mrf.mxu0
      %v1049 = vadd.f32 0.0, %v1048
      %v1050 = vpop.f32.mrf.mxu0
      %v1051 = vadd.f32 0.0, %v1050
      %v1052 = vpop.f32.mrf.mxu0
      %v1053 = vadd.f32 0.0, %v1052
      %v1054 = vpop.f32.mrf.mxu0
      %v1055 = vadd.f32 0.0, %v1054
      %1056 = vmatprep.mubr.bf16.mxu0 0
      %1057 = vmatmul.mubr.bf16.gmra.mxu0 %v894
      %v1058 = vpop.f32.mrf.mxu0
      %v1059 = vadd.f32 0.0, %v1058
      %v1060 = vpop.f32.mrf.mxu0
      %v1061 = vadd.f32 0.0, %v1060
      %v1062 = vpop.f32.mrf.mxu0
      %v1063 = vadd.f32 0.0, %v1062
      %v1064 = vpop.f32.mrf.mxu0
      %v1065 = vadd.f32 0.0, %v1064
      %1066 = vmatprep.mubr.bf16.mxu0 0
      %1067 = vmatmul.mubr.bf16.gmra.mxu0 %v897
      %v1068 = vpop.f32.mrf.mxu0
      %v1069 = vadd.f32 0.0, %v1068
      %v1070 = vpop.f32.mrf.mxu0
      %v1071 = vadd.f32 0.0, %v1070
      %v1072 = vpop.f32.mrf.mxu0
      %v1073 = vadd.f32 0.0, %v1072
      %v1074 = vpop.f32.mrf.mxu0
      %v1075 = vadd.f32 0.0, %v1074
      %1076 = vmatprep.mubr.bf16.mxu0 0
      %1077 = vmatmul.mubr.bf16.gmra.mxu0 %v900
      %v1078 = vpop.f32.mrf.mxu0
      %v1079 = vadd.f32 0.0, %v1078
      %v1080 = vpop.f32.mrf.mxu0
      %v1081 = vadd.f32 0.0, %v1080
      %v1082 = vpop.f32.mrf.mxu0
      %v1083 = vadd.f32 0.0, %v1082
      %v1084 = vpop.f32.mrf.mxu0
      %v1085 = vadd.f32 0.0, %v1084
      %1086 = vmatprep.mubr.bf16.mxu0 0
      %1087 = vmatmul.mubr.bf16.gmra.mxu0 %v903
      %v1088 = vpop.f32.mrf.mxu0
      %v1089 = vadd.f32 0.0, %v1088
      %v1090 = vpop.f32.mrf.mxu0
      %v1091 = vadd.f32 0.0, %v1090
      %v1092 = vpop.f32.mrf.mxu0
      %v1093 = vadd.f32 0.0, %v1092
      %v1094 = vpop.f32.mrf.mxu0
      %v1095 = vadd.f32 0.0, %v1094
      %1096 = vmatprep.mubr.bf16.mxu0 0
      %1097 = vmatmul.mubr.bf16.gmra.mxu0 %v906
      %v1098 = vpop.f32.mrf.mxu0
      %v1099 = vadd.f32 0.0, %v1098
      %v1100 = vpop.f32.mrf.mxu0
      %v1101 = vadd.f32 0.0, %v1100
      %v1102 = vpop.f32.mrf.mxu0
      %v1103 = vadd.f32 0.0, %v1102
      %v1104 = vpop.f32.mrf.mxu0
      %v1105 = vadd.f32 0.0, %v1104
      %1106 = vdwg.mxu0
      %v1107 = vld [vmem:[#allocation2] sm:$0x3]
      %v1108 = vld [vmem:[#allocation2 + $0x2] sm:$0x3]
      %v1109 = vmax.f32 %v670, %v674
      %v1110 = vmax.f32 %v1109, %v680
      %v1111 = vmax.f32 %v1110, %v684
      %v1112 = vmax.f32 %v1111, %v690
      %v1113 = vmax.f32 %v1112, %v694
      %v1114 = vmax.f32 %v1113, %v700
      %v1115 = vmax.f32 %v1114, %v704
      %v1116 = vmax.f32 %v1115, %v710
      %v1117 = vmax.f32 %v1116, %v714
      %v1118 = vmax.f32 %v1117, %v720
      %v1119 = vmax.f32 %v1118, %v724
      %v1120 = vmax.f32 %v1119, %v730
      %v1121 = vmax.f32 %v1120, %v734
      %v1122 = vmax.f32 %v1121, %v740
      %v1123 = vmax.f32 %v1122, %v744
      %v1124 = vmax.f32 %v1123, %v750
      %v1125 = vmax.f32 %v1124, %v754
      %v1126 = vmax.f32 %v1125, %v760
      %v1127 = vmax.f32 %v1126, %v764
      %v1128 = vmax.f32 %v1127, %v770
      %v1129 = vmax.f32 %v1128, %v774
      %v1130 = vmax.f32 %v1129, %v780
      %v1131 = vmax.f32 %v1130, %v784
      %v1132 = vmax.f32 %v1131, %v790
      %v1133 = vmax.f32 %v1132, %v794
      %v1134 = vmax.f32 %v1133, %v800
      %v1135 = vmax.f32 %v1134, %v804
      %v1136 = vmax.f32 %v1135, %v810
      %v1137 = vmax.f32 %v1136, %v814
      %v1138 = vmax.f32 %v1137, %v820
      %v1139 = vmax.f32 %v1138, %v824
      %v1140 = vrot.slane %v1139, 4
      %v1141 = vmax.f32 %v1139, %v1140
      %v1142 = vrot.slane %v1141, 2
      %v1143 = vmax.f32 %v1141, %v1142
      %v1144 = vrot.slane %v1143, 1
      %v1145 = vmax.f32 %v1143, %v1144
      %v1146 = vmax.f32 %v672, %v676
      %v1147 = vmax.f32 %v1146, %v682
      %v1148 = vmax.f32 %v1147, %v686
      %v1149 = vmax.f32 %v1148, %v692
      %v1150 = vmax.f32 %v1149, %v696
      %v1151 = vmax.f32 %v1150, %v702
      %v1152 = vmax.f32 %v1151, %v706
      %v1153 = vmax.f32 %v1152, %v712
      %v1154 = vmax.f32 %v1153, %v716
      %v1155 = vmax.f32 %v1154, %v722
      %v1156 = vmax.f32 %v1155, %v726
      %v1157 = vmax.f32 %v1156, %v732
      %v1158 = vmax.f32 %v1157, %v736
      %v1159 = vmax.f32 %v1158, %v742
      %v1160 = vmax.f32 %v1159, %v746
      %v1161 = vmax.f32 %v1160, %v752
      %v1162 = vmax.f32 %v1161, %v756
      %v1163 = vmax.f32 %v1162, %v762
      %v1164 = vmax.f32 %v1163, %v766
      %v1165 = vmax.f32 %v1164, %v772
      %v1166 = vmax.f32 %v1165, %v776
      %v1167 = vmax.f32 %v1166, %v782
      %v1168 = vmax.f32 %v1167, %v786
      %v1169 = vmax.f32 %v1168, %v792
      %v1170 = vmax.f32 %v1169, %v796
      %v1171 = vmax.f32 %v1170, %v802
      %v1172 = vmax.f32 %v1171, %v806
      %v1173 = vmax.f32 %v1172, %v812
      %v1174 = vmax.f32 %v1173, %v816
      %v1175 = vmax.f32 %v1174, %v822
      %v1176 = vmax.f32 %v1175, %v826
      %v1177 = vrot.slane %v1176, 4
      %v1178 = vmax.f32 %v1176, %v1177
      %v1179 = vrot.slane %v1178, 2
      %v1180 = vmax.f32 %v1178, %v1179
      %v1181 = vrot.slane %v1180, 1
      %v1182 = vmax.f32 %v1180, %v1181
      %v1183 = vmax.f32 %v949, %v953
      %v1184 = vmax.f32 %v1183, %v959
      %v1185 = vmax.f32 %v1184, %v963
      %v1186 = vmax.f32 %v1185, %v969
      %v1187 = vmax.f32 %v1186, %v973
      %v1188 = vmax.f32 %v1187, %v979
      %v1189 = vmax.f32 %v1188, %v983
      %v1190 = vmax.f32 %v1189, %v989
      %v1191 = vmax.f32 %v1190, %v993
      %v1192 = vmax.f32 %v1191, %v999
      %v1193 = vmax.f32 %v1192, %v1003
      %v1194 = vmax.f32 %v1193, %v1009
      %v1195 = vmax.f32 %v1194, %v1013
      %v1196 = vmax.f32 %v1195, %v1019
      %v1197 = vmax.f32 %v1196, %v1023
      %v1198 = vmax.f32 %v1197, %v1029
      %v1199 = vmax.f32 %v1198, %v1033
      %v1200 = vmax.f32 %v1199, %v1039
      %v1201 = vmax.f32 %v1200, %v1043
      %v1202 = vmax.f32 %v1201, %v1049
      %v1203 = vmax.f32 %v1202, %v1053
      %v1204 = vmax.f32 %v1203, %v1059
      %v1205 = vmax.f32 %v1204, %v1063
      %v1206 = vmax.f32 %v1205, %v1069
      %v1207 = vmax.f32 %v1206, %v1073
      %v1208 = vmax.f32 %v1207, %v1079
      %v1209 = vmax.f32 %v1208, %v1083
      %v1210 = vmax.f32 %v1209, %v1089
      %v1211 = vmax.f32 %v1210, %v1093
      %v1212 = vmax.f32 %v1211, %v1099
      %v1213 = vmax.f32 %v1212, %v1103
      %v1214 = vrot.slane %v1213, 4
      %v1215 = vmax.f32 %v1213, %v1214
      %v1216 = vrot.slane %v1215, 2
      %v1217 = vmax.f32 %v1215, %v1216
      %v1218 = vrot.slane %v1217, 1
      %v1219 = vmax.f32 %v1217, %v1218
      %v1220 = vmax.f32 %v951, %v955
      %v1221 = vmax.f32 %v1220, %v961
      %v1222 = vmax.f32 %v1221, %v965
      %v1223 = vmax.f32 %v1222, %v971
      %v1224 = vmax.f32 %v1223, %v975
      %v1225 = vmax.f32 %v1224, %v981
      %v1226 = vmax.f32 %v1225, %v985
      %v1227 = vmax.f32 %v1226, %v991
      %v1228 = vmax.f32 %v1227, %v995
      %v1229 = vmax.f32 %v1228, %v1001
      %v1230 = vmax.f32 %v1229, %v1005
      %v1231 = vmax.f32 %v1230, %v1011
      %v1232 = vmax.f32 %v1231, %v1015
      %v1233 = vmax.f32 %v1232, %v1021
      %v1234 = vmax.f32 %v1233, %v1025
      %v1235 = vmax.f32 %v1234, %v1031
      %v1236 = vmax.f32 %v1235, %v1035
      %v1237 = vmax.f32 %v1236, %v1041
      %v1238 = vmax.f32 %v1237, %v1045
      %v1239 = vmax.f32 %v1238, %v1051
      %v1240 = vmax.f32 %v1239, %v1055
      %v1241 = vmax.f32 %v1240, %v1061
      %v1242 = vmax.f32 %v1241, %v1065
      %v1243 = vmax.f32 %v1242, %v1071
      %v1244 = vmax.f32 %v1243, %v1075
      %v1245 = vmax.f32 %v1244, %v1081
      %v1246 = vmax.f32 %v1245, %v1085
      %v1247 = vmax.f32 %v1246, %v1091
      %v1248 = vmax.f32 %v1247, %v1095
      %v1249 = vmax.f32 %v1248, %v1101
      %v1250 = vmax.f32 %v1249, %v1105
      %v1251 = vrot.slane %v1250, 4
      %v1252 = vmax.f32 %v1250, %v1251
      %v1253 = vrot.slane %v1252, 2
      %v1254 = vmax.f32 %v1252, %v1253
      %v1255 = vrot.slane %v1254, 1
      %v1256 = vmax.f32 %v1254, %v1255
      %v1261 = vcombine.low %v1145, %v1182
      %v1263 = vunpack.c.l.s4 1966171168
      %v1264 = vunpack.c.0.s8 %v1263
      %v1265 = vlaneseq
      %v1266 = vshrl.u32 %v1265, 7
      %v1267 = vsub.s32 %v1264, %v1266
      %v1268 = vrot.slane %v1261, %v1267
      %v1270 = vunpack.c.l.s4 1966171168
      %v1271 = vunpack.c.0.s8 %v1270
      %v1272 = vlaneseq
      %v1273 = vshrl.u32 %v1272, 7
      %v1274 = vsub.s32 %v1271, %v1273
      %v1275 = vrot.slane %v1268, %v1274
      %v1276 = vcombine.low %v1219, %v1256
      %v1278 = vunpack.c.l.s4 1966171168
      %v1279 = vunpack.c.0.s8 %v1278
      %v1280 = vlaneseq
      %v1281 = vshrl.u32 %v1280, 7
      %v1282 = vsub.s32 %v1279, %v1281
      %v1283 = vrot.slane %v1276, %v1282
      %v1285 = vunpack.c.l.s4 1966171168
      %v1286 = vunpack.c.0.s8 %v1285
      %v1287 = vlaneseq
      %v1288 = vshrl.u32 %v1287, 7
      %v1289 = vsub.s32 %v1286, %v1288
      %v1290 = vrot.slane %v1283, %v1289
      %v1293 = vmax.f32 %v1107, %v1275
      %v1294 = vmax.f32 %v1108, %v1290
      %v1295 = vsub.f32 %v1107, %v1293
      %v1296 = vsub.f32 %v1108, %v1294
      %v1297 = vmul.f32 %v1295, 1.442695
      %v1298 = vpow.pop %v1297
      %v1299 = vmul.f32 %v1296, 1.442695
      %v1300 = vpow.pop %v1299
      %v1303 = vlaneseq
      %v1304 = vshrl.u32 %v1303, 7
      %v1305 = vsub.s32 0, %v1304
      %v1306 = vrot.slane %v1293, %v1305
      %v1307 = vlaneseq
      %v1308 = vshrl.u32 %v1307, 7
      %v1309 = vsub.s32 1, %v1308
      %v1310 = vrot.slane %v1293, %v1309
      %v1311 = vlaneseq
      %v1312 = vshrl.u32 %v1311, 7
      %v1313 = vsub.s32 0, %v1312
      %v1314 = vrot.slane %v1294, %v1313
      %v1315 = vlaneseq
      %v1316 = vshrl.u32 %v1315, 7
      %v1317 = vsub.s32 1, %v1316
      %v1318 = vrot.slane %v1294, %v1317
      %v1323 = vsub.f32 %v670, %v1306
      %v1324 = vsub.f32 %v672, %v1310
      %v1325 = vsub.f32 %v674, %v1306
      %v1326 = vsub.f32 %v676, %v1310
      %v1327 = vsub.f32 %v680, %v1306
      %v1328 = vsub.f32 %v682, %v1310
      %v1329 = vsub.f32 %v684, %v1306
      %v1330 = vsub.f32 %v686, %v1310
      %v1331 = vsub.f32 %v690, %v1306
      %v1332 = vsub.f32 %v692, %v1310
      %v1333 = vsub.f32 %v694, %v1306
      %v1334 = vsub.f32 %v696, %v1310
      %v1335 = vsub.f32 %v700, %v1306
      %v1336 = vsub.f32 %v702, %v1310
      %v1337 = vsub.f32 %v704, %v1306
      %v1338 = vsub.f32 %v706, %v1310
      %v1339 = vsub.f32 %v710, %v1306
      %v1340 = vsub.f32 %v712, %v1310
      %v1341 = vsub.f32 %v714, %v1306
      %v1342 = vsub.f32 %v716, %v1310
      %v1343 = vsub.f32 %v720, %v1306
      %v1344 = vsub.f32 %v722, %v1310
      %v1345 = vsub.f32 %v724, %v1306
      %v1346 = vsub.f32 %v726, %v1310
      %v1347 = vsub.f32 %v730, %v1306
      %v1348 = vsub.f32 %v732, %v1310
      %v1349 = vsub.f32 %v734, %v1306
      %v1350 = vsub.f32 %v736, %v1310
      %v1351 = vsub.f32 %v740, %v1306
      %v1352 = vsub.f32 %v742, %v1310
      %v1353 = vsub.f32 %v744, %v1306
      %v1354 = vsub.f32 %v746, %v1310
      %v1355 = vsub.f32 %v750, %v1306
      %v1356 = vsub.f32 %v752, %v1310
      %v1357 = vsub.f32 %v754, %v1306
      %v1358 = vsub.f32 %v756, %v1310
      %v1359 = vsub.f32 %v760, %v1306
      %v1360 = vsub.f32 %v762, %v1310
      %v1361 = vsub.f32 %v764, %v1306
      %v1362 = vsub.f32 %v766, %v1310
      %v1363 = vsub.f32 %v770, %v1306
      %v1364 = vsub.f32 %v772, %v1310
      %v1365 = vsub.f32 %v774, %v1306
      %v1366 = vsub.f32 %v776, %v1310
      %v1367 = vsub.f32 %v780, %v1306
      %v1368 = vsub.f32 %v782, %v1310
      %v1369 = vsub.f32 %v784, %v1306
      %v1370 = vsub.f32 %v786, %v1310
      %v1371 = vsub.f32 %v790, %v1306
      %v1372 = vsub.f32 %v792, %v1310
      %v1373 = vsub.f32 %v794, %v1306
      %v1374 = vsub.f32 %v796, %v1310
      %v1375 = vsub.f32 %v800, %v1306
      %v1376 = vsub.f32 %v802, %v1310
      %v1377 = vsub.f32 %v804, %v1306
      %v1378 = vsub.f32 %v806, %v1310
      %v1379 = vsub.f32 %v810, %v1306
      %v1380 = vsub.f32 %v812, %v1310
      %v1381 = vsub.f32 %v814, %v1306
      %v1382 = vsub.f32 %v816, %v1310
      %v1383 = vsub.f32 %v820, %v1306
      %v1384 = vsub.f32 %v822, %v1310
      %v1385 = vsub.f32 %v824, %v1306
      %v1386 = vsub.f32 %v826, %v1310
      %v1387 = vsub.f32 %v949, %v1314
      %v1388 = vsub.f32 %v951, %v1318
      %v1389 = vsub.f32 %v953, %v1314
      %v1390 = vsub.f32 %v955, %v1318
      %v1391 = vsub.f32 %v959, %v1314
      %v1392 = vsub.f32 %v961, %v1318
      %v1393 = vsub.f32 %v963, %v1314
      %v1394 = vsub.f32 %v965, %v1318
      %v1395 = vsub.f32 %v969, %v1314
      %v1396 = vsub.f32 %v971, %v1318
      %v1397 = vsub.f32 %v973, %v1314
      %v1398 = vsub.f32 %v975, %v1318
      %v1399 = vsub.f32 %v979, %v1314
      %v1400 = vsub.f32 %v981, %v1318
      %v1401 = vsub.f32 %v983, %v1314
      %v1402 = vsub.f32 %v985, %v1318
      %v1403 = vsub.f32 %v989, %v1314
      %v1404 = vsub.f32 %v991, %v1318
      %v1405 = vsub.f32 %v993, %v1314
      %v1406 = vsub.f32 %v995, %v1318
      %v1407 = vsub.f32 %v999, %v1314
      %v1408 = vsub.f32 %v1001, %v1318
      %v1409 = vsub.f32 %v1003, %v1314
      %v1410 = vsub.f32 %v1005, %v1318
      %v1411 = vsub.f32 %v1009, %v1314
      %v1412 = vsub.f32 %v1011, %v1318
      %v1413 = vsub.f32 %v1013, %v1314
      %v1414 = vsub.f32 %v1015, %v1318
      %v1415 = vsub.f32 %v1019, %v1314
      %v1416 = vsub.f32 %v1021, %v1318
      %v1417 = vsub.f32 %v1023, %v1314
      %v1418 = vsub.f32 %v1025, %v1318
      %v1419 = vsub.f32 %v1029, %v1314
      %v1420 = vsub.f32 %v1031, %v1318
      %v1421 = vsub.f32 %v1033, %v1314
      %v1422 = vsub.f32 %v1035, %v1318
      %v1423 = vsub.f32 %v1039, %v1314
      %v1424 = vsub.f32 %v1041, %v1318
      %v1425 = vsub.f32 %v1043, %v1314
      %v1426 = vsub.f32 %v1045, %v1318
      %v1427 = vsub.f32 %v1049, %v1314
      %v1428 = vsub.f32 %v1051, %v1318
      %v1429 = vsub.f32 %v1053, %v1314
      %v1430 = vsub.f32 %v1055, %v1318
      %v1431 = vsub.f32 %v1059, %v1314
      %v1432 = vsub.f32 %v1061, %v1318
      %v1433 = vsub.f32 %v1063, %v1314
      %v1434 = vsub.f32 %v1065, %v1318
      %v1435 = vsub.f32 %v1069, %v1314
      %v1436 = vsub.f32 %v1071, %v1318
      %v1437 = vsub.f32 %v1073, %v1314
      %v1438 = vsub.f32 %v1075, %v1318
      %v1439 = vsub.f32 %v1079, %v1314
      %v1440 = vsub.f32 %v1081, %v1318
      %v1441 = vsub.f32 %v1083, %v1314
      %v1442 = vsub.f32 %v1085, %v1318
      %v1443 = vsub.f32 %v1089, %v1314
      %v1444 = vsub.f32 %v1091, %v1318
      %v1445 = vsub.f32 %v1093, %v1314
      %v1446 = vsub.f32 %v1095, %v1318
      %v1447 = vsub.f32 %v1099, %v1314
      %v1448 = vsub.f32 %v1101, %v1318
      %v1449 = vsub.f32 %v1103, %v1314
      %v1450 = vsub.f32 %v1105, %v1318
      %v1451 = vmul.f32 %v1323, 1.442695
      %v1452 = vpow.pop %v1451
      %v1453 = vmul.f32 %v1324, 1.442695
      %v1454 = vpow.pop %v1453
      %v1455 = vmul.f32 %v1325, 1.442695
      %v1456 = vpow.pop %v1455
      %v1457 = vmul.f32 %v1326, 1.442695
      %v1458 = vpow.pop %v1457
      %v1459 = vmul.f32 %v1327, 1.442695
      %v1460 = vpow.pop %v1459
      %v1461 = vmul.f32 %v1328, 1.442695
      %v1462 = vpow.pop %v1461
      %v1463 = vmul.f32 %v1329, 1.442695
      %v1464 = vpow.pop %v1463
      %v1465 = vmul.f32 %v1330, 1.442695
      %v1466 = vpow.pop %v1465
      %v1467 = vmul.f32 %v1331, 1.442695
      %v1468 = vpow.pop %v1467
      %v1469 = vmul.f32 %v1332, 1.442695
      %v1470 = vpow.pop %v1469
      %v1471 = vmul.f32 %v1333, 1.442695
      %v1472 = vpow.pop %v1471
      %v1473 = vmul.f32 %v1334, 1.442695
      %v1474 = vpow.pop %v1473
      %v1475 = vmul.f32 %v1335, 1.442695
      %v1476 = vpow.pop %v1475
      %v1477 = vmul.f32 %v1336, 1.442695
      %v1478 = vpow.pop %v1477
      %v1479 = vmul.f32 %v1337, 1.442695
      %v1480 = vpow.pop %v1479
      %v1481 = vmul.f32 %v1338, 1.442695
      %v1482 = vpow.pop %v1481
      %v1483 = vmul.f32 %v1339, 1.442695
      %v1484 = vpow.pop %v1483
      %v1485 = vmul.f32 %v1340, 1.442695
      %v1486 = vpow.pop %v1485
      %v1487 = vmul.f32 %v1341, 1.442695
      %v1488 = vpow.pop %v1487
      %v1489 = vmul.f32 %v1342, 1.442695
      %v1490 = vpow.pop %v1489
      %v1491 = vmul.f32 %v1343, 1.442695
      %v1492 = vpow.pop %v1491
      %v1493 = vmul.f32 %v1344, 1.442695
      %v1494 = vpow.pop %v1493
      %v1495 = vmul.f32 %v1345, 1.442695
      %v1496 = vpow.pop %v1495
      %v1497 = vmul.f32 %v1346, 1.442695
      %v1498 = vpow.pop %v1497
      %v1499 = vmul.f32 %v1347, 1.442695
      %v1500 = vpow.pop %v1499
      %v1501 = vmul.f32 %v1348, 1.442695
      %v1502 = vpow.pop %v1501
      %v1503 = vmul.f32 %v1349, 1.442695
      %v1504 = vpow.pop %v1503
      %v1505 = vmul.f32 %v1350, 1.442695
      %v1506 = vpow.pop %v1505
      %v1507 = vmul.f32 %v1351, 1.442695
      %v1508 = vpow.pop %v1507
      %v1509 = vmul.f32 %v1352, 1.442695
      %v1510 = vpow.pop %v1509
      %v1511 = vmul.f32 %v1353, 1.442695
      %v1512 = vpow.pop %v1511
      %v1513 = vmul.f32 %v1354, 1.442695
      %v1514 = vpow.pop %v1513
      %v1515 = vmul.f32 %v1355, 1.442695
      %v1516 = vpow.pop %v1515
      %v1517 = vmul.f32 %v1356, 1.442695
      %v1518 = vpow.pop %v1517
      %v1519 = vmul.f32 %v1357, 1.442695
      %v1520 = vpow.pop %v1519
      %v1521 = vmul.f32 %v1358, 1.442695
      %v1522 = vpow.pop %v1521
      %v1523 = vmul.f32 %v1359, 1.442695
      %v1524 = vpow.pop %v1523
      %v1525 = vmul.f32 %v1360, 1.442695
      %v1526 = vpow.pop %v1525
      %v1527 = vmul.f32 %v1361, 1.442695
      %v1528 = vpow.pop %v1527
      %v1529 = vmul.f32 %v1362, 1.442695
      %v1530 = vpow.pop %v1529
      %v1531 = vmul.f32 %v1363, 1.442695
      %v1532 = vpow.pop %v1531
      %v1533 = vmul.f32 %v1364, 1.442695
      %v1534 = vpow.pop %v1533
      %v1535 = vmul.f32 %v1365, 1.442695
      %v1536 = vpow.pop %v1535
      %v1537 = vmul.f32 %v1366, 1.442695
      %v1538 = vpow.pop %v1537
      %v1539 = vmul.f32 %v1367, 1.442695
      %v1540 = vpow.pop %v1539
      %v1541 = vmul.f32 %v1368, 1.442695
      %v1542 = vpow.pop %v1541
      %v1543 = vmul.f32 %v1369, 1.442695
      %v1544 = vpow.pop %v1543
      %v1545 = vmul.f32 %v1370, 1.442695
      %v1546 = vpow.pop %v1545
      %v1547 = vmul.f32 %v1371, 1.442695
      %v1548 = vpow.pop %v1547
      %v1549 = vmul.f32 %v1372, 1.442695
      %v1550 = vpow.pop %v1549
      %v1551 = vmul.f32 %v1373, 1.442695
      %v1552 = vpow.pop %v1551
      %v1553 = vmul.f32 %v1374, 1.442695
      %v1554 = vpow.pop %v1553
      %v1555 = vmul.f32 %v1375, 1.442695
      %v1556 = vpow.pop %v1555
      %v1557 = vmul.f32 %v1376, 1.442695
      %v1558 = vpow.pop %v1557
      %v1559 = vmul.f32 %v1377, 1.442695
      %v1560 = vpow.pop %v1559
      %v1561 = vmul.f32 %v1378, 1.442695
      %v1562 = vpow.pop %v1561
      %v1563 = vmul.f32 %v1379, 1.442695
      %v1564 = vpow.pop %v1563
      %v1565 = vmul.f32 %v1380, 1.442695
      %v1566 = vpow.pop %v1565
      %v1567 = vmul.f32 %v1381, 1.442695
      %v1568 = vpow.pop %v1567
      %v1569 = vmul.f32 %v1382, 1.442695
      %v1570 = vpow.pop %v1569
      %v1571 = vmul.f32 %v1383, 1.442695
      %v1572 = vpow.pop %v1571
      %v1573 = vmul.f32 %v1384, 1.442695
      %v1574 = vpow.pop %v1573
      %v1575 = vmul.f32 %v1385, 1.442695
      %v1576 = vpow.pop %v1575
      %v1577 = vmul.f32 %v1386, 1.442695
      %v1578 = vpow.pop %v1577
      %v1579 = vmul.f32 %v1387, 1.442695
      %v1580 = vpow.pop %v1579
      %v1581 = vmul.f32 %v1388, 1.442695
      %v1582 = vpow.pop %v1581
      %v1583 = vmul.f32 %v1389, 1.442695
      %v1584 = vpow.pop %v1583
      %v1585 = vmul.f32 %v1390, 1.442695
      %v1586 = vpow.pop %v1585
      %v1587 = vmul.f32 %v1391, 1.442695
      %v1588 = vpow.pop %v1587
      %v1589 = vmul.f32 %v1392, 1.442695
      %v1590 = vpow.pop %v1589
      %v1591 = vmul.f32 %v1393, 1.442695
      %v1592 = vpow.pop %v1591
      %v1593 = vmul.f32 %v1394, 1.442695
      %v1594 = vpow.pop %v1593
      %v1595 = vmul.f32 %v1395, 1.442695
      %v1596 = vpow.pop %v1595
      %v1597 = vmul.f32 %v1396, 1.442695
      %v1598 = vpow.pop %v1597
      %v1599 = vmul.f32 %v1397, 1.442695
      %v1600 = vpow.pop %v1599
      %v1601 = vmul.f32 %v1398, 1.442695
      %v1602 = vpow.pop %v1601
      %v1603 = vmul.f32 %v1399, 1.442695
      %v1604 = vpow.pop %v1603
      %v1605 = vmul.f32 %v1400, 1.442695
      %v1606 = vpow.pop %v1605
      %v1607 = vmul.f32 %v1401, 1.442695
      %v1608 = vpow.pop %v1607
      %v1609 = vmul.f32 %v1402, 1.442695
      %v1610 = vpow.pop %v1609
      %v1611 = vmul.f32 %v1403, 1.442695
      %v1612 = vpow.pop %v1611
      %v1613 = vmul.f32 %v1404, 1.442695
      %v1614 = vpow.pop %v1613
      %v1615 = vmul.f32 %v1405, 1.442695
      %v1616 = vpow.pop %v1615
      %v1617 = vmul.f32 %v1406, 1.442695
      %v1618 = vpow.pop %v1617
      %v1619 = vmul.f32 %v1407, 1.442695
      %v1620 = vpow.pop %v1619
      %v1621 = vmul.f32 %v1408, 1.442695
      %v1622 = vpow.pop %v1621
      %v1623 = vmul.f32 %v1409, 1.442695
      %v1624 = vpow.pop %v1623
      %v1625 = vmul.f32 %v1410, 1.442695
      %v1626 = vpow.pop %v1625
      %v1627 = vmul.f32 %v1411, 1.442695
      %v1628 = vpow.pop %v1627
      %v1629 = vmul.f32 %v1412, 1.442695
      %v1630 = vpow.pop %v1629
      %v1631 = vmul.f32 %v1413, 1.442695
      %v1632 = vpow.pop %v1631
      %v1633 = vmul.f32 %v1414, 1.442695
      %v1634 = vpow.pop %v1633
      %v1635 = vmul.f32 %v1415, 1.442695
      %v1636 = vpow.pop %v1635
      %v1637 = vmul.f32 %v1416, 1.442695
      %v1638 = vpow.pop %v1637
      %v1639 = vmul.f32 %v1417, 1.442695
      %v1640 = vpow.pop %v1639
      %v1641 = vmul.f32 %v1418, 1.442695
      %v1642 = vpow.pop %v1641
      %v1643 = vmul.f32 %v1419, 1.442695
      %v1644 = vpow.pop %v1643
      %v1645 = vmul.f32 %v1420, 1.442695
      %v1646 = vpow.pop %v1645
      %v1647 = vmul.f32 %v1421, 1.442695
      %v1648 = vpow.pop %v1647
      %v1649 = vmul.f32 %v1422, 1.442695
      %v1650 = vpow.pop %v1649
      %v1651 = vmul.f32 %v1423, 1.442695
      %v1652 = vpow.pop %v1651
      %v1653 = vmul.f32 %v1424, 1.442695
      %v1654 = vpow.pop %v1653
      %v1655 = vmul.f32 %v1425, 1.442695
      %v1656 = vpow.pop %v1655
      %v1657 = vmul.f32 %v1426, 1.442695
      %v1658 = vpow.pop %v1657
      %v1659 = vmul.f32 %v1427, 1.442695
      %v1660 = vpow.pop %v1659
      %v1661 = vmul.f32 %v1428, 1.442695
      %v1662 = vpow.pop %v1661
      %v1663 = vmul.f32 %v1429, 1.442695
      %v1664 = vpow.pop %v1663
      %v1665 = vmul.f32 %v1430, 1.442695
      %v1666 = vpow.pop %v1665
      %v1667 = vmul.f32 %v1431, 1.442695
      %v1668 = vpow.pop %v1667
      %v1669 = vmul.f32 %v1432, 1.442695
      %v1670 = vpow.pop %v1669
      %v1671 = vmul.f32 %v1433, 1.442695
      %v1672 = vpow.pop %v1671
      %v1673 = vmul.f32 %v1434, 1.442695
      %v1674 = vpow.pop %v1673
      %v1675 = vmul.f32 %v1435, 1.442695
      %v1676 = vpow.pop %v1675
      %v1677 = vmul.f32 %v1436, 1.442695
      %v1678 = vpow.pop %v1677
      %v1679 = vmul.f32 %v1437, 1.442695
      %v1680 = vpow.pop %v1679
      %v1681 = vmul.f32 %v1438, 1.442695
      %v1682 = vpow.pop %v1681
      %v1683 = vmul.f32 %v1439, 1.442695
      %v1684 = vpow.pop %v1683
      %v1685 = vmul.f32 %v1440, 1.442695
      %v1686 = vpow.pop %v1685
      %v1687 = vmul.f32 %v1441, 1.442695
      %v1688 = vpow.pop %v1687
      %v1689 = vmul.f32 %v1442, 1.442695
      %v1690 = vpow.pop %v1689
      %v1691 = vmul.f32 %v1443, 1.442695
      %v1692 = vpow.pop %v1691
      %v1693 = vmul.f32 %v1444, 1.442695
      %v1694 = vpow.pop %v1693
      %v1695 = vmul.f32 %v1445, 1.442695
      %v1696 = vpow.pop %v1695
      %v1697 = vmul.f32 %v1446, 1.442695
      %v1698 = vpow.pop %v1697
      %v1699 = vmul.f32 %v1447, 1.442695
      %v1700 = vpow.pop %v1699
      %v1701 = vmul.f32 %v1448, 1.442695
      %v1702 = vpow.pop %v1701
      %v1703 = vmul.f32 %v1449, 1.442695
      %v1704 = vpow.pop %v1703
      %v1705 = vmul.f32 %v1450, 1.442695
      %v1706 = vpow.pop %v1705
      %v1707 = vld [vmem:[#allocation3] sm:$0x3]
      %v1708 = vld [vmem:[#allocation3 + $0x2] sm:$0x3]
      %v1709 = vmul.f32 %v1298, %v1707
      %v1710 = vmul.f32 %v1300, %v1708
      %v1711 = vadd.f32 %v1452, %v1456
      %v1712 = vadd.f32 %v1711, %v1460
      %v1713 = vadd.f32 %v1712, %v1464
      %v1714 = vadd.f32 %v1713, %v1468
      %v1715 = vadd.f32 %v1714, %v1472
      %v1716 = vadd.f32 %v1715, %v1476
      %v1717 = vadd.f32 %v1716, %v1480
      %v1718 = vadd.f32 %v1717, %v1484
      %v1719 = vadd.f32 %v1718, %v1488
      %v1720 = vadd.f32 %v1719, %v1492
      %v1721 = vadd.f32 %v1720, %v1496
      %v1722 = vadd.f32 %v1721, %v1500
      %v1723 = vadd.f32 %v1722, %v1504
      %v1724 = vadd.f32 %v1723, %v1508
      %v1725 = vadd.f32 %v1724, %v1512
      %v1726 = vadd.f32 %v1725, %v1516
      %v1727 = vadd.f32 %v1726, %v1520
      %v1728 = vadd.f32 %v1727, %v1524
      %v1729 = vadd.f32 %v1728, %v1528
      %v1730 = vadd.f32 %v1729, %v1532
      %v1731 = vadd.f32 %v1730, %v1536
      %v1732 = vadd.f32 %v1731, %v1540
      %v1733 = vadd.f32 %v1732, %v1544
      %v1734 = vadd.f32 %v1733, %v1548
      %v1735 = vadd.f32 %v1734, %v1552
      %v1736 = vadd.f32 %v1735, %v1556
      %v1737 = vadd.f32 %v1736, %v1560
      %v1738 = vadd.f32 %v1737, %v1564
      %v1739 = vadd.f32 %v1738, %v1568
      %v1740 = vadd.f32 %v1739, %v1572
      %v1741 = vadd.f32 %v1740, %v1576
      %v1742 = vrot.slane %v1741, 4
      %v1743 = vadd.f32 %v1741, %v1742
      %v1744 = vrot.slane %v1743, 2
      %v1745 = vadd.f32 %v1743, %v1744
      %v1746 = vrot.slane %v1745, 1
      %v1747 = vadd.f32 %v1745, %v1746
      %v1748 = vadd.f32 %v1454, %v1458
      %v1749 = vadd.f32 %v1748, %v1462
      %v1750 = vadd.f32 %v1749, %v1466
      %v1751 = vadd.f32 %v1750, %v1470
      %v1752 = vadd.f32 %v1751, %v1474
      %v1753 = vadd.f32 %v1752, %v1478
      %v1754 = vadd.f32 %v1753, %v1482
      %v1755 = vadd.f32 %v1754, %v1486
      %v1756 = vadd.f32 %v1755, %v1490
      %v1757 = vadd.f32 %v1756, %v1494
      %v1758 = vadd.f32 %v1757, %v1498
      %v1759 = vadd.f32 %v1758, %v1502
      %v1760 = vadd.f32 %v1759, %v1506
      %v1761 = vadd.f32 %v1760, %v1510
      %v1762 = vadd.f32 %v1761, %v1514
      %v1763 = vadd.f32 %v1762, %v1518
      %v1764 = vadd.f32 %v1763, %v1522
      %v1765 = vadd.f32 %v1764, %v1526
      %v1766 = vadd.f32 %v1765, %v1530
      %v1767 = vadd.f32 %v1766, %v1534
      %v1768 = vadd.f32 %v1767, %v1538
      %v1769 = vadd.f32 %v1768, %v1542
      %v1770 = vadd.f32 %v1769, %v1546
      %v1771 = vadd.f32 %v1770, %v1550
      %v1772 = vadd.f32 %v1771, %v1554
      %v1773 = vadd.f32 %v1772, %v1558
      %v1774 = vadd.f32 %v1773, %v1562
      %v1775 = vadd.f32 %v1774, %v1566
      %v1776 = vadd.f32 %v1775, %v1570
      %v1777 = vadd.f32 %v1776, %v1574
      %v1778 = vadd.f32 %v1777, %v1578
      %v1779 = vrot.slane %v1778, 4
      %v1780 = vadd.f32 %v1778, %v1779
      %v1781 = vrot.slane %v1780, 2
      %v1782 = vadd.f32 %v1780, %v1781
      %v1783 = vrot.slane %v1782, 1
      %v1784 = vadd.f32 %v1782, %v1783
      %v1785 = vadd.f32 %v1580, %v1584
      %v1786 = vadd.f32 %v1785, %v1588
      %v1787 = vadd.f32 %v1786, %v1592
      %v1788 = vadd.f32 %v1787, %v1596
      %v1789 = vadd.f32 %v1788, %v1600
      %v1790 = vadd.f32 %v1789, %v1604
      %v1791 = vadd.f32 %v1790, %v1608
      %v1792 = vadd.f32 %v1791, %v1612
      %v1793 = vadd.f32 %v1792, %v1616
      %v1794 = vadd.f32 %v1793, %v1620
      %v1795 = vadd.f32 %v1794, %v1624
      %v1796 = vadd.f32 %v1795, %v1628
      %v1797 = vadd.f32 %v1796, %v1632
      %v1798 = vadd.f32 %v1797, %v1636
      %v1799 = vadd.f32 %v1798, %v1640
      %v1800 = vadd.f32 %v1799, %v1644
      %v1801 = vadd.f32 %v1800, %v1648
      %v1802 = vadd.f32 %v1801, %v1652
      %v1803 = vadd.f32 %v1802, %v1656
      %v1804 = vadd.f32 %v1803, %v1660
      %v1805 = vadd.f32 %v1804, %v1664
      %v1806 = vadd.f32 %v1805, %v1668
      %v1807 = vadd.f32 %v1806, %v1672
      %v1808 = vadd.f32 %v1807, %v1676
      %v1809 = vadd.f32 %v1808, %v1680
      %v1810 = vadd.f32 %v1809, %v1684
      %v1811 = vadd.f32 %v1810, %v1688
      %v1812 = vadd.f32 %v1811, %v1692
      %v1813 = vadd.f32 %v1812, %v1696
      %v1814 = vadd.f32 %v1813, %v1700
      %v1815 = vadd.f32 %v1814, %v1704
      %v1816 = vrot.slane %v1815, 4
      %v1817 = vadd.f32 %v1815, %v1816
      %v1818 = vrot.slane %v1817, 2
      %v1819 = vadd.f32 %v1817, %v1818
      %v1820 = vrot.slane %v1819, 1
      %v1821 = vadd.f32 %v1819, %v1820
      %v1822 = vadd.f32 %v1582, %v1586
      %v1823 = vadd.f32 %v1822, %v1590
      %v1824 = vadd.f32 %v1823, %v1594
      %v1825 = vadd.f32 %v1824, %v1598
      %v1826 = vadd.f32 %v1825, %v1602
      %v1827 = vadd.f32 %v1826, %v1606
      %v1828 = vadd.f32 %v1827, %v1610
      %v1829 = vadd.f32 %v1828, %v1614
      %v1830 = vadd.f32 %v1829, %v1618
      %v1831 = vadd.f32 %v1830, %v1622
      %v1832 = vadd.f32 %v1831, %v1626
      %v1833 = vadd.f32 %v1832, %v1630
      %v1834 = vadd.f32 %v1833, %v1634
      %v1835 = vadd.f32 %v1834, %v1638
      %v1836 = vadd.f32 %v1835, %v1642
      %v1837 = vadd.f32 %v1836, %v1646
      %v1838 = vadd.f32 %v1837, %v1650
      %v1839 = vadd.f32 %v1838, %v1654
      %v1840 = vadd.f32 %v1839, %v1658
      %v1841 = vadd.f32 %v1840, %v1662
      %v1842 = vadd.f32 %v1841, %v1666
      %v1843 = vadd.f32 %v1842, %v1670
      %v1844 = vadd.f32 %v1843, %v1674
      %v1845 = vadd.f32 %v1844, %v1678
      %v1846 = vadd.f32 %v1845, %v1682
      %v1847 = vadd.f32 %v1846, %v1686
      %v1848 = vadd.f32 %v1847, %v1690
      %v1849 = vadd.f32 %v1848, %v1694
      %v1850 = vadd.f32 %v1849, %v1698
      %v1851 = vadd.f32 %v1850, %v1702
      %v1852 = vadd.f32 %v1851, %v1706
      %v1853 = vrot.slane %v1852, 4
      %v1854 = vadd.f32 %v1852, %v1853
      %v1855 = vrot.slane %v1854, 2
      %v1856 = vadd.f32 %v1854, %v1855
      %v1857 = vrot.slane %v1856, 1
      %v1858 = vadd.f32 %v1856, %v1857
      %v1863 = vcombine.low %v1747, %v1784
      %v1865 = vunpack.c.l.s4 1966171168
      %v1866 = vunpack.c.0.s8 %v1865
      %v1867 = vlaneseq
      %v1868 = vshrl.u32 %v1867, 7
      %v1869 = vsub.s32 %v1866, %v1868
      %v1870 = vrot.slane %v1863, %v1869
      %v1872 = vunpack.c.l.s4 1966171168
      %v1873 = vunpack.c.0.s8 %v1872
      %v1874 = vlaneseq
      %v1875 = vshrl.u32 %v1874, 7
      %v1876 = vsub.s32 %v1873, %v1875
      %v1877 = vrot.slane %v1870, %v1876
      %v1878 = vcombine.low %v1821, %v1858
      %v1880 = vunpack.c.l.s4 1966171168
      %v1881 = vunpack.c.0.s8 %v1880
      %v1882 = vlaneseq
      %v1883 = vshrl.u32 %v1882, 7
      %v1884 = vsub.s32 %v1881, %v1883
      %v1885 = vrot.slane %v1878, %v1884
      %v1887 = vunpack.c.l.s4 1966171168
      %v1888 = vunpack.c.0.s8 %v1887
      %v1889 = vlaneseq
      %v1890 = vshrl.u32 %v1889, 7
      %v1891 = vsub.s32 %v1888, %v1890
      %v1892 = vrot.slane %v1885, %v1891
      %v1895 = vadd.f32 %v1709, %v1877
      %v1896 = vadd.f32 %v1710, %v1892
      %v1897 = vlaneseq
      %vm1898 = vcmp.ge.s32.totalorder %v1897, 0
      %vm1899 = vcmp.lt.s32.totalorder %v1897, 256
      %vm1900 = vmand %vm1898, %vm1899
      %1901 = vst.msk [vmem:[#allocation3] sm:$0x3] %vm1900, %v1895
      %1902 = vst.msk [vmem:[#allocation3 + $0x2] sm:$0x3] %vm1900, %v1896
      %v1903 = vld [vmem:[#allocation4] sm:$0xff]
      %v1904 = vld [vmem:[#allocation4 + $0x8] sm:$0xff]
      %v1905 = vld [vmem:[#allocation4 + $0x10] sm:$0xff]
      %v1906 = vld [vmem:[#allocation4 + $0x18] sm:$0xff]
      %v1909 = vlaneseq
      %v1910 = vshrl.u32 %v1909, 7
      %v1911 = vsub.s32 0, %v1910
      %v1912 = vrot.slane %v1298, %v1911
      %v1913 = vlaneseq
      %v1914 = vshrl.u32 %v1913, 7
      %v1915 = vsub.s32 1, %v1914
      %v1916 = vrot.slane %v1298, %v1915
      %v1917 = vlaneseq
      %v1918 = vshrl.u32 %v1917, 7
      %v1919 = vsub.s32 0, %v1918
      %v1920 = vrot.slane %v1300, %v1919
      %v1921 = vlaneseq
      %v1922 = vshrl.u32 %v1921, 7
      %v1923 = vsub.s32 1, %v1922
      %v1924 = vrot.slane %v1300, %v1923
      %v1929 = vmul.f32 %v1912, %v1903
      %v1930 = vmul.f32 %v1916, %v1904
      %v1931 = vmul.f32 %v1920, %v1905
      %v1932 = vmul.f32 %v1924, %v1906
      %v1933 = vpack.c.bf16 %v1456, %v1452
      %v1934 = vpack.c.bf16 %v1458, %v1454
      %v1935 = vpack.c.bf16 %v1464, %v1460
      %v1936 = vpack.c.bf16 %v1466, %v1462
      %v1937 = vpack.c.bf16 %v1472, %v1468
      %v1938 = vpack.c.bf16 %v1474, %v1470
      %v1939 = vpack.c.bf16 %v1480, %v1476
      %v1940 = vpack.c.bf16 %v1482, %v1478
      %v1941 = vpack.c.bf16 %v1488, %v1484
      %v1942 = vpack.c.bf16 %v1490, %v1486
      %v1943 = vpack.c.bf16 %v1496, %v1492
      %v1944 = vpack.c.bf16 %v1498, %v1494
      %v1945 = vpack.c.bf16 %v1504, %v1500
      %v1946 = vpack.c.bf16 %v1506, %v1502
      %v1947 = vpack.c.bf16 %v1512, %v1508
      %v1948 = vpack.c.bf16 %v1514, %v1510
      %v1949 = vpack.c.bf16 %v1520, %v1516
      %v1950 = vpack.c.bf16 %v1522, %v1518
      %v1951 = vpack.c.bf16 %v1528, %v1524
      %v1952 = vpack.c.bf16 %v1530, %v1526
      %v1953 = vpack.c.bf16 %v1536, %v1532
      %v1954 = vpack.c.bf16 %v1538, %v1534
      %v1955 = vpack.c.bf16 %v1544, %v1540
      %v1956 = vpack.c.bf16 %v1546, %v1542
      %v1957 = vpack.c.bf16 %v1552, %v1548
      %v1958 = vpack.c.bf16 %v1554, %v1550
      %v1959 = vpack.c.bf16 %v1560, %v1556
      %v1960 = vpack.c.bf16 %v1562, %v1558
      %v1961 = vpack.c.bf16 %v1568, %v1564
      %v1962 = vpack.c.bf16 %v1570, %v1566
      %v1963 = vpack.c.bf16 %v1576, %v1572
      %v1964 = vpack.c.bf16 %v1578, %v1574
      %v1965 = vpack.c.bf16 %v1584, %v1580
      %v1966 = vpack.c.bf16 %v1586, %v1582
      %v1967 = vpack.c.bf16 %v1592, %v1588
      %v1968 = vpack.c.bf16 %v1594, %v1590
      %v1969 = vpack.c.bf16 %v1600, %v1596
      %v1970 = vpack.c.bf16 %v1602, %v1598
      %v1971 = vpack.c.bf16 %v1608, %v1604
      %v1972 = vpack.c.bf16 %v1610, %v1606
      %v1973 = vpack.c.bf16 %v1616, %v1612
      %v1974 = vpack.c.bf16 %v1618, %v1614
      %v1975 = vpack.c.bf16 %v1624, %v1620
      %v1976 = vpack.c.bf16 %v1626, %v1622
      %v1977 = vpack.c.bf16 %v1632, %v1628
      %v1978 = vpack.c.bf16 %v1634, %v1630
      %v1979 = vpack.c.bf16 %v1640, %v1636
      %v1980 = vpack.c.bf16 %v1642, %v1638
      %v1981 = vpack.c.bf16 %v1648, %v1644
      %v1982 = vpack.c.bf16 %v1650, %v1646
      %v1983 = vpack.c.bf16 %v1656, %v1652
      %v1984 = vpack.c.bf16 %v1658, %v1654
      %v1985 = vpack.c.bf16 %v1664, %v1660
      %v1986 = vpack.c.bf16 %v1666, %v1662
      %v1987 = vpack.c.bf16 %v1672, %v1668
      %v1988 = vpack.c.bf16 %v1674, %v1670
      %v1989 = vpack.c.bf16 %v1680, %v1676
      %v1990 = vpack.c.bf16 %v1682, %v1678
      %v1991 = vpack.c.bf16 %v1688, %v1684
      %v1992 = vpack.c.bf16 %v1690, %v1686
      %v1993 = vpack.c.bf16 %v1696, %v1692
      %v1994 = vpack.c.bf16 %v1698, %v1694
      %v1995 = vpack.c.bf16 %v1704, %v1700
      %v1996 = vpack.c.bf16 %v1706, %v1702
      %1997 = vmatprep.subr.bf16.mxu0 %v1948
      %1998 = vmatpush1.bf16.msra.mxu0 %v1947
      %1999 = vmatprep.subr.bf16.mxu0 %v1946
      %2000 = vmatpush1.bf16.msra.mxu0 %v1945
      %2001 = vmatprep.subr.bf16.mxu0 %v1944
      %2002 = vmatpush1.bf16.msra.mxu0 %v1943
      %2003 = vmatprep.subr.bf16.mxu0 %v1942
      %2004 = vmatpush1.bf16.msra.mxu0 %v1941
      %2005 = vmatprep.subr.bf16.mxu0 %v1940
      %2006 = vmatpush1.bf16.msra.mxu0 %v1939
      %2007 = vmatprep.subr.bf16.mxu0 %v1938
      %2008 = vmatpush1.bf16.msra.mxu0 %v1937
      %2009 = vmatprep.subr.bf16.mxu0 %v1936
      %2010 = vmatpush1.bf16.msra.mxu0 %v1935
      %2011 = vmatprep.subr.bf16.mxu0 %v1934
      %2012 = vmatpush1.bf16.msra.mxu0 %v1933
      %2013 = vmatprep.subr.bf16.mxu0 %v1964
      %2014 = vmatpush2.bf16.msra.mxu0 %v1963
      %2015 = vmatprep.subr.bf16.mxu0 %v1962
      %2016 = vmatpush2.bf16.msra.mxu0 %v1961
      %2017 = vmatprep.subr.bf16.mxu0 %v1960
      %2018 = vmatpush2.bf16.msra.mxu0 %v1959
      %2019 = vmatprep.subr.bf16.mxu0 %v1958
      %2020 = vmatpush2.bf16.msra.mxu0 %v1957
      %2021 = vmatprep.subr.bf16.mxu0 %v1956
      %2022 = vmatpush2.bf16.msra.mxu0 %v1955
      %2023 = vmatprep.subr.bf16.mxu0 %v1954
      %2024 = vmatpush2.bf16.msra.mxu0 %v1953
      %2025 = vmatprep.subr.bf16.mxu0 %v1952
      %2026 = vmatpush2.bf16.msra.mxu0 %v1951
      %2027 = vmatprep.subr.bf16.mxu0 %v1950
      %2028 = vmatpush2.bf16.msra.mxu0 %v1949
      %2029 = vmatprep.mubr.bf16.mxu0 %v544
      %2030 = vmatmul.mubr.bf16.gmra.mxu0 %v543
      %v2031 = vpop.f32.mrf.mxu0
      %v2032 = vadd.f32 0.0, %v2031
      %v2033 = vpop.f32.mrf.mxu0
      %v2034 = vadd.f32 0.0, %v2033
      %v2035 = vpop.f32.mrf.mxu0
      %v2036 = vpop.f32.mrf.mxu0
      %2037 = vdwg.mxu0
      %2038 = vmatprep.subr.bf16.mxu0 %v1980
      %2039 = vmatpush1.bf16.msra.mxu0 %v1979
      %2040 = vmatprep.subr.bf16.mxu0 %v1978
      %2041 = vmatpush1.bf16.msra.mxu0 %v1977
      %2042 = vmatprep.subr.bf16.mxu0 %v1976
      %2043 = vmatpush1.bf16.msra.mxu0 %v1975
      %2044 = vmatprep.subr.bf16.mxu0 %v1974
      %2045 = vmatpush1.bf16.msra.mxu0 %v1973
      %2046 = vmatprep.subr.bf16.mxu0 %v1972
      %2047 = vmatpush1.bf16.msra.mxu0 %v1971
      %2048 = vmatprep.subr.bf16.mxu0 %v1970
      %2049 = vmatpush1.bf16.msra.mxu0 %v1969
      %2050 = vmatprep.subr.bf16.mxu0 %v1968
      %2051 = vmatpush1.bf16.msra.mxu0 %v1967
      %2052 = vmatprep.subr.bf16.mxu0 %v1966
      %2053 = vmatpush1.bf16.msra.mxu0 %v1965
      %2054 = vmatprep.subr.bf16.mxu0 %v1996
      %2055 = vmatpush2.bf16.msra.mxu0 %v1995
      %2056 = vmatprep.subr.bf16.mxu0 %v1994
      %2057 = vmatpush2.bf16.msra.mxu0 %v1993
      %2058 = vmatprep.subr.bf16.mxu0 %v1992
      %2059 = vmatpush2.bf16.msra.mxu0 %v1991
      %2060 = vmatprep.subr.bf16.mxu0 %v1990
      %2061 = vmatpush2.bf16.msra.mxu0 %v1989
      %2062 = vmatprep.subr.bf16.mxu0 %v1988
      %2063 = vmatpush2.bf16.msra.mxu0 %v1987
      %2064 = vmatprep.subr.bf16.mxu0 %v1986
      %2065 = vmatpush2.bf16.msra.mxu0 %v1985
      %2066 = vmatprep.subr.bf16.mxu0 %v1984
      %2067 = vmatpush2.bf16.msra.mxu0 %v1983
      %2068 = vmatprep.subr.bf16.mxu0 %v1982
      %2069 = vmatpush2.bf16.msra.mxu0 %v1981
      %2070 = vmatprep.mubr.bf16.mxu0 %v546
      %2071 = vmatmul.mubr.bf16.gmra.mxu0 %v545
      %v2072 = vpop.f32.mrf.mxu0
      %v2073 = vadd.f32 0.0, %v2072
      %v2074 = vpop.f32.mrf.mxu0
      %v2075 = vadd.f32 0.0, %v2074
      %v2076 = vpop.f32.mrf.mxu0
      %v2077 = vpop.f32.mrf.mxu0
      %2078 = vdwg.mxu0
      %v2079 = vadd.f32 %v1929, %v2032
      %v2080 = vadd.f32 %v1930, %v2034
      %v2081 = vadd.f32 %v1931, %v2073
      %v2082 = vadd.f32 %v1932, %v2075
      %2083 = vst [vmem:[#allocation4] sm:$0xff] %v2079
      %2084 = vst [vmem:[#allocation4 + $0x8] sm:$0xff] %v2080
      %2085 = vst [vmem:[#allocation4 + $0x10] sm:$0xff] %v2081
      %2086 = vst [vmem:[#allocation4 + $0x18] sm:$0xff] %v2082
      %2087 = vst.msk [vmem:[#allocation2] sm:$0x3] %vm1900, %v1293
      %2088 = vst.msk [vmem:[#allocation2 + $0x2] sm:$0x3] %vm1900, %v1294
      // Predicated region
      $region57: #{attention_block.5} parent=51 // pred_check
        %p2089 = pneg %p507
      $region58: #{attention_block.5} parent=51 // pred_check_branch
        %2091 = sbr.rel (%p2089) target = $region60
      $region59: #{attention_block.5} parent=51 // pred_region
        %v2092 = vld [vmem:[#allocation4] sm:$0xff]
        %v2093 = vld [vmem:[#allocation4 + $0x8] sm:$0xff]
        %v2094 = vld [vmem:[#allocation4 + $0x10] sm:$0xff]
        %v2095 = vld [vmem:[#allocation4 + $0x18] sm:$0xff]
        %v2096 = vld [vmem:[#allocation3] sm:$0x3]
        %v2097 = vld [vmem:[#allocation3 + $0x2] sm:$0x3]
        %v2098 = vrcp.pop %v2096
        %v2099 = vrcp.pop %v2097
        %v2102 = vlaneseq
        %v2103 = vshrl.u32 %v2102, 7
        %v2104 = vsub.s32 0, %v2103
        %v2105 = vrot.slane %v2098, %v2104
        %v2106 = vlaneseq
        %v2107 = vshrl.u32 %v2106, 7
        %v2108 = vsub.s32 1, %v2107
        %v2109 = vrot.slane %v2098, %v2108
        %v2110 = vlaneseq
        %v2111 = vshrl.u32 %v2110, 7
        %v2112 = vsub.s32 0, %v2111
        %v2113 = vrot.slane %v2099, %v2112
        %v2114 = vlaneseq
        %v2115 = vshrl.u32 %v2114, 7
        %v2116 = vsub.s32 1, %v2115
        %v2117 = vrot.slane %v2099, %v2116
        %v2122 = vmul.f32 %v2092, %v2105
        %v2123 = vmul.f32 %v2093, %v2109
        %v2124 = vmul.f32 %v2094, %v2113
        %v2125 = vmul.f32 %v2095, %v2117
        %v2126 = vld [vmem:[%s6] sm:$0xf]
        %v2127 = vld [vmem:[%s6 + $0x4] sm:$0xf]
        %v2128 = vpack.c.bf16 %v2124, %v2122
        %v2129 = vpack.c.bf16 %v2125, %v2123
        %v2132 = vunpack.c.l.b16 %v2126
        %v2133 = vunpack.c.l.b16 %v2127
        %v2134 = vpack.c.b16 %v2133, %v2132
        %vm2135 = vcmask 130048
        %v2137 = vsel %vm2135, %v2134, 0
        %2139 = vmatprep.subr.bf16.mxu0 0
        %2140 = vmatpush1.bf16.msra.mxu0 0
        %2141 = vmatprep.subr.bf16.mxu0 0
        %2142 = vmatpush1.bf16.msra.mxu0 0
        %2143 = vmatprep.subr.bf16.mxu0 0
        %2144 = vmatpush1.bf16.msra.mxu0 0
        %2145 = vmatprep.subr.bf16.mxu0 0
        %2146 = vmatpush1.bf16.msra.mxu0 0
        %2147 = vmatprep.subr.bf16.mxu0 0
        %2148 = vmatpush1.bf16.msra.mxu0 0
        %2149 = vmatprep.subr.bf16.mxu0 0
        %2150 = vmatpush1.bf16.msra.mxu0 0
        %2151 = vmatprep.subr.bf16.mxu0 0
        %2152 = vmatpush1.bf16.msra.mxu0 0
        %2153 = vmatprep.subr.bf16.mxu0 %v2129
        %2154 = vmatpush1.bf16.msra.mxu0 %v2128
        %2155 = vmatprep.subr.bf16.mxu0 0
        %2156 = vmatpush2.bf16.msra.mxu0 0
        %2157 = vmatprep.subr.bf16.mxu0 0
        %2158 = vmatpush2.bf16.msra.mxu0 0
        %2159 = vmatprep.subr.bf16.mxu0 0
        %2160 = vmatpush2.bf16.msra.mxu0 0
        %2161 = vmatprep.subr.bf16.mxu0 0
        %2162 = vmatpush2.bf16.msra.mxu0 0
        %2163 = vmatprep.subr.bf16.mxu0 0
        %2164 = vmatpush2.bf16.msra.mxu0 0
        %2165 = vmatprep.subr.bf16.mxu0 0
        %2166 = vmatpush2.bf16.msra.mxu0 0
        %2167 = vmatprep.subr.bf16.mxu0 0
        %2168 = vmatpush2.bf16.msra.mxu0 0
        %2169 = vmatprep.subr.bf16.mxu0 0
        %2170 = vmatpush2.bf16.msra.mxu0 0
        %2171 = vmatprep.mubr.bf16.mxu0 0
        %2172 = vmatmul.mubr.bf16.gmra.mxu0 %v2137
        %v2173 = vpop.f32.mrf.mxu0
        %v2174 = vadd.f32 0.0, %v2173
        %v2175 = vpop.f32.mrf.mxu0
        %v2176 = vadd.f32 0.0, %v2175
        %v2177 = vpop.f32.mrf.mxu0
        %v2178 = vadd.f32 0.0, %v2177
        %v2179 = vpop.f32.mrf.mxu0
        %v2180 = vadd.f32 0.0, %v2179
        %2181 = vdwg.mxu0
        %v2182 = vld [vmem:[%s452] sm:$0xff]
        %v2183 = vld [vmem:[%s452 + $0x8] sm:$0xff]
        %v2184 = vld [vmem:[%s452 + $0x10] sm:$0xff]
        %v2185 = vld [vmem:[%s452 + $0x18] sm:$0xff]
        %v2186 = vld [vmem:[%s458] sm:$0xff]
        %v2187 = vld [vmem:[%s458 + $0x8] sm:$0xff]
        %2189 = vset.pattern.permute.xlu0 0
        %2190 = vperm.xlu0 %2189, %v2186
        %v2191 = vpop.permute.xlu0 %2190
        %2194 = vset.pattern.permute.xlu0 0
        %2195 = vperm.xlu0 %2194, %v2187
        %v2196 = vpop.permute.xlu0 %2195
        %v2198 = vmul.f32 %v2182, %v2191
        %v2199 = vmul.f32 %v2183, %v2191
        %v2200 = vmul.f32 %v2184, %v2196
        %v2201 = vmul.f32 %v2185, %v2196
        %v2202 = vld [vmem:[%s463] sm:$0xff]
        %v2203 = vld [vmem:[%s463 + $0x8] sm:$0xff]
        %2205 = vset.pattern.permute.xlu0 0
        %2206 = vperm.xlu0 %2205, %v2202
        %v2207 = vpop.permute.xlu0 %2206
        %2210 = vset.pattern.permute.xlu0 0
        %2211 = vperm.xlu0 %2210, %v2203
        %v2212 = vpop.permute.xlu0 %2211
        %v2214 = vadd.f32 %v2198, %v2207
        %v2215 = vadd.f32 %v2199, %v2207
        %v2216 = vadd.f32 %v2200, %v2212
        %v2217 = vadd.f32 %v2201, %v2212
        %v2218 = vadd.f32 %v2214, %v2174
        %v2219 = vadd.f32 %v2215, %v2176
        %v2220 = vadd.f32 %v2216, %v2178
        %v2221 = vadd.f32 %v2217, %v2180
        %v2222 = vld [vmem:[%s7] sm:$0xff]
        %v2223 = vld [vmem:[%s7 + $0x8] sm:$0xff]
        %2225 = vset.pattern.permute.xlu0 0
        %2226 = vperm.xlu0 %2225, %v2222
        %v2227 = vpop.permute.xlu0 %2226
        %2230 = vset.pattern.permute.xlu0 0
        %2231 = vperm.xlu0 %2230, %v2223
        %v2232 = vpop.permute.xlu0 %2231
        %v2234 = vadd.f32 %v2218, %v2227
        %v2235 = vadd.f32 %v2219, %v2227
        %v2236 = vadd.f32 %v2220, %v2232
        %v2237 = vadd.f32 %v2221, %v2232
        %2238 = vst [vmem:[%s504] sm:$0xff] %v2234
        %2239 = vst [vmem:[%s504 + $0x8] sm:$0xff] %v2235
        %2240 = vst [vmem:[%s504 + $0x10] sm:$0xff] %v2236
        %2241 = vst [vmem:[%s504 + $0x18] sm:$0xff] %v2237
      $region60: #{attention_block.5} parent=51 // pred_fallthru
        _
      %s2242 = smul.u32 2, %s25
      %p2243 = scmp.lt.s32.totalorder %s24, 1
      %s2244 = scalar_select %p2243, %s24, 1
      %p2245 = scmp.lt.s32.totalorder %s2242, 1
      %s2246 = scalar_select %p2245, %s2242, 1
      %s2247 = smul.addr %s2244, 4
      %s2248 = sadd.s32 %s2246, %s2247
      %s2249 = smul.addr %s2248, 8
      %s2250 = scalar_lea.vmem %s8, %s2249
      // Predicated region
      $region61: #{attention_block.5} parent=51 // pred_check
        %p2251 = pneg %p264
      $region62: #{attention_block.5} parent=51 // pred_check_branch
        %2253 = sbr.rel (%p2251) target = $region64
      $region63: #{attention_block.5} parent=51 // pred_region
        %s2254 = smul.u32 2, %s25
      $region64: #{attention_block.5} parent=51 // pred_fallthru
        _
    $region52: #{attention_block.5} parent=5 // pred_fallthru
      _
    %p2255 = scmp.le.s32.totalorder 2, %s14
    // Predicated region
    $region65: #{attention_block.5} parent=5 // pred_check
      %p2256 = pneg %p2255
    $region66: #{attention_block.5} parent=5 // pred_check_branch
      %2258 = sbr.rel (%p2256) target = $region68
    $region67: #{attention_block.5} parent=5 // pred_region
      %s2259 = ssub.s32 %s14, 2
      // Predicated region
      $region69: #{attention_block.5} parent=67 // pred_check
        %p2260 = pneg %p270
      $region70: #{attention_block.5} parent=67 // pred_check_branch
        %2262 = sbr.rel (%p2260) target = $region72
      $region71: #{attention_block.5} parent=67 // pred_region
        %s2263 = smul.u32 2, %s28
        %p2264 = scmp.lt.s32.totalorder %s27, 1
        %s2265 = scalar_select %p2264, %s27, 1
        %p2266 = scmp.lt.s32.totalorder %s2263, 1
        %s2267 = scalar_select %p2266, %s2263, 1
        %s2268 = smul.addr %s2265, 4
        %s2269 = sadd.s32 %s2267, %s2268
        %s2270 = smul.addr %s2269, 8
        %s2271 = scalar_lea.vmem %s8, %s2270
      $region72: #{attention_block.5} parent=67 // pred_fallthru
        _
    $region68: #{attention_block.5} parent=5 // pred_fallthru
      _
  $region6: #{attention_block.5} parent=0 // loop_footer
    %s18 = sadd.s32 1, %s14
  $region7: #{attention_block.5} parent=0 // loop_footer_branch
    %13 = sbr.rel target = $region3
  $region8: #{attention_block.5} parent=0 // loop_exit
    _

</llo_original>
